<compile_context>
chip_gen: v5e
topology: v5e:2x2
jax: 0.10.0
libtpu: 0.0.40
codegen_flags: <defaults>
</compile_context>

<pallas_src>
import functools
import math

import jax
import jax.numpy as jnp
from jax import lax
from jax.experimental import pallas as pl
from jax.experimental.pallas import tpu as pltpu


# ---------------------------------------------------------------------------
# Fused pyramid kernel (one batch element per grid step)
# ---------------------------------------------------------------------------
def _fused_pyramid_kernel(x_ref, *refs, layer_meta, N, S, C, compute_dtype):
    """refs = (w_0..w_{L-1}, b_0..b_{L-1}, o_ref, act_ref, slab_ref)

      w_l   : (k_l*C, C)  packed Conv1d weight
      b_l   : (1, C)      bias
      o_ref : (C, N*N)    final map, channel-major, written exactly once
      act   : (T, C)      running activation (VMEM scratch, time on sublanes)
      slab  : (S, C)      compact per-layer outputs, S = sum(t_out)

    layer_meta[l] = (k, s, t_in, t_out, off, st, base)
      off/st : composed diagonal offset / stride in the original N x N map
      base   : row offset of this layer's output inside the slab
    """
    n_layers = len(layer_meta)
    w_refs = refs[:n_layers]
    b_refs = refs[n_layers:2 * n_layers]
    o_ref = refs[2 * n_layers]
    act_ref = refs[2 * n_layers + 1]
    slab_ref = refs[2 * n_layers + 2]
    NN = N * N

    # Stage the input once; all taps are (strided) sublane loads from VMEM.
    act_ref[...] = x_ref[...].astype(compute_dtype)
    slab_ref[...] = jnp.zeros_like(slab_ref)   # tiny (~2N x C); defensive init

    # ---- conv pyramid: each layer = one MXU matmul, results kept compact ---
    for li, ((k, s, t_in, t_out, off, st, base), w_ref, b_ref) in enumerate(
            zip(layer_meta, w_refs, b_refs)):
        taps = []
        for j in range(k):
            idx = pl.ds(j, t_out) if s == 1 else pl.ds(j, t_out, s)
            taps.append(act_ref[idx, :])                       # (t_out, C)
        x_cat = taps[0] if k == 1 else jnp.concatenate(taps, axis=-1)
        y = jnp.dot(x_cat, w_ref[...],
                    preferred_element_type=jnp.float32)
        y = y + b_ref[...].astype(jnp.float32)                 # (t_out, C) f32
        slab_ref[pl.ds(base, t_out), :] = y
        if li + 1 < n_layers:                                  # next layer input
            act_ref[pl.ds(0, t_out), :] = y.astype(compute_dtype)

    # ---- scatter-free placement: ONE one-hot matmul, ONE output store ------
    # P[s, r*N + c] = 1  iff slab row s belongs to layer l and
    #                     r = (s - base_l) * st_l,  c = r + off_l.
    # Offsets are strictly increasing across layers, so P columns are one-hot.
    s_i = lax.broadcasted_iota(jnp.int32, (S, NN), 0)
    m_i = lax.broadcasted_iota(jnp.int32, (S, NN), 1)
    p = jnp.zeros((S, NN), jnp.float32)
    for (k, s, t_in, t_out, off, st, base) in layer_meta:
        tgt = (s_i - base) * (st * (N + 1)) + off
        sel = (s_i >= base) & (s_i < base + t_out) & (m_i == tgt)
        p = jnp.where(sel, jnp.float32(1.0), p)

    # (C, S) @ (S, N*N) -> (C, N*N); zeros off the diagonals come for free.
    out_t = jnp.dot(slab_ref[...].T, p, preferred_element_type=jnp.float32)
    o_ref[...] = out_t.astype(o_ref.dtype)


def _fused_pyramid_call(x_btc, weights, biases, layer_meta, N, S, compute_dtype):
    """x_btc: (B, T, C).  Returns the combined original map as (B, C, N*N)."""
    B, T, C = x_btc.shape
    NN = N * N
    kernel = functools.partial(
        _fused_pyramid_kernel, layer_meta=layer_meta, N=N, S=S, C=C,
        compute_dtype=compute_dtype)

    out_shape = jax.ShapeDtypeStruct((B, C, NN), x_btc.dtype)
    out_specs = pl.BlockSpec((None, C, NN), lambda b: (b, 0, 0))

    itemsize = jnp.dtype(x_btc.dtype).itemsize
    conv_flops = sum(2 * t_out * w.shape[0] * w.shape[1]
                     for (_, _, _, t_out, _, _, _), w in zip(layer_meta, weights))
    flops = B * (conv_flops + 2 * C * S * NN)
    bytes_accessed = int(
        (x_btc.size + B * C * NN) * itemsize
        + sum(int(w.size) * w.dtype.itemsize for w in weights)
        + sum(int(b.size) * b.dtype.itemsize for b in biases))

    # VMEM budget from the actual resident buffers; 64 MiB ceiling is legal on
    # every current chip (incl. v7x's smaller VMEM).
    cdt_size = jnp.dtype(compute_dtype).itemsize
    resident = (2 * T * C * itemsize            # input block (double-buffered)
                + 2 * C * NN * itemsize         # output block (double-buffered)
                + sum(int(w.size) * w.dtype.itemsize for w in weights)
                + sum(int(b.size) * b.dtype.itemsize for b in biases)
                + T * C * cdt_size              # act scratch
                + S * C * 4                     # slab scratch
                + S * NN * 4                    # one-hot placement matrix
                + C * NN * 4)                   # placement result before store
    vmem_limit = int(min(max(2 * resident + (4 << 20), 16 << 20), 64 << 20))

    scratch_shapes = [pltpu.VMEM((T, C), compute_dtype),
                      pltpu.VMEM((S, C), jnp.float32)]

    def make_call(single_buffer_consts):
        const_kwargs = (dict(pipeline_mode=pl.Buffered(1))
                        if single_buffer_consts else {})
        in_specs = [pl.BlockSpec((None, T, C), lambda b: (b, 0, 0))]
        for w in weights:   # constant across the batch grid
            in_specs.append(pl.BlockSpec(w.shape, lambda b: (0, 0),
                                         **const_kwargs))
        for bia in biases:
            in_specs.append(pl.BlockSpec(bia.shape, lambda b: (0, 0),
                                         **const_kwargs))
        return pl.pallas_call(
            kernel,
            out_shape=out_shape,
            grid=(B,),
            in_specs=in_specs,
            out_specs=out_specs,
            scratch_shapes=scratch_shapes,
            compiler_params=pltpu.CompilerParams(
                dimension_semantics=("parallel",),
                vmem_limit_bytes=vmem_limit),
            cost_estimate=pl.CostEstimate(flops=int(flops), transcendentals=0,
                                          bytes_accessed=bytes_accessed),
        )(x_btc, *weights, *biases)

    try:
        # Weights / biases never change across the grid: single-buffer them.
        return make_call(single_buffer_consts=True)
    except Exception:
        # Older JAX without BlockSpec.pipeline_mode -> default double buffering.
        return make_call(single_buffer_consts=False)


# ---------------------------------------------------------------------------
# Parameters (deterministic Conv1d-style init, weights pre-packed for the MXU)
# ---------------------------------------------------------------------------
def init_params(num_scale_layers, hidden_size, key):
    """Uniform +/- 1/sqrt(fan_in) init.  Weight stored as (k*C_in, C_out)."""
    cfg, params = [], []
    for scale_idx, num_layer in enumerate(num_scale_layers):
        scale_cfg, scale_params = [], []
        for i in range(num_layer):
            if i == 0:
                k, s = (1, 1) if scale_idx == 0 else (3, 2)
            else:
                k, s = 2, 1
            key, wk, bk = jax.random.split(key, 3)
            bound = 1.0 / math.sqrt(hidden_size * k)
            # PyTorch layout (C_out, C_in, k) -> packed (k*C_in, C_out)
            w = jax.random.uniform(wk, (hidden_size, hidden_size, k),
                                   jnp.float32, -bound, bound)
            b = jax.random.uniform(bk, (hidden_size,), jnp.float32, -bound, bound)
            w_cat = jnp.transpose(w, (2, 1, 0)).reshape(k * hidden_size, hidden_size)
            scale_cfg.append((k, s))
            scale_params.append((w_cat, b.reshape(1, hidden_size)))
        cfg.append(scale_cfg)
        params.append(scale_params)
    return cfg, params


# ---------------------------------------------------------------------------
# Forward pass (== SparsePropConv.forward, incl. recover_to_original_map)
# ---------------------------------------------------------------------------
def sparse_prop_conv_forward(cfg, params, x_bct, compute_dtype=jnp.float32):
    """x_bct: (B, C, T) PyTorch NCL.  Returns (ori_map_h, ori_map_mask)."""
    B, C, T = x_bct.shape
    N = T // cfg[0][0][1]                       # ori_num_clips
    x_btc = jnp.transpose(x_bct, (0, 2, 1))     # (B, T, C), time on sublanes

    # Static per-layer metadata: composed diagonal (off, stride), slab offset.
    layer_meta, weights, biases = [], [], []
    t_cur, acum, stride, base = T, 0, 1, 0
    for scale_cfg, scale_params in zip(cfg, params):
        num_scale_clips = t_cur // scale_cfg[0][1]
        for i, ((k, s), (w, b)) in enumerate(zip(scale_cfg, scale_params)):
            t_in = t_cur
            t_out = (t_in - k) // s + 1
            assert t_out == num_scale_clips - i, "inconsistent pyramid config"
            stride *= s
            off = acum + i * stride
            assert len(range(0, N - off, stride)) == t_out, "index length mismatch"
            if compute_dtype != jnp.float32:
                w = w.astype(compute_dtype)      # cast once, outside the kernel
            layer_meta.append((k, s, t_in, t_out, off, stride, base))
            weights.append(w)
            biases.append(b)
            base += t_out
            t_cur = t_out
        acum += stride * (len(scale_cfg) + 1)
    layer_meta = tuple(layer_meta)
    S = base                                     # compact-slab rows (~2N)

    # One fused Pallas kernel: pyramid + single one-hot placement; output is
    # channel-major lane-dense (B, C, N*N) -> PyTorch layout is a free reshape.
    map_cnn = _fused_pyramid_call(x_btc, weights, biases, layer_meta, N, S,
                                  compute_dtype)
    ori_map_h = map_cnn.reshape(B, C, N, N)

    # ori_map_mask is data independent: iota math, no scatter, built once.
    r = jnp.arange(N)[:, None]
    c = jnp.arange(N)[None, :]
    m = jnp.zeros((N, N), jnp.bool_)
    for (_, _, _, t_out, off, st, _) in layer_meta:
        m = m | ((c - r == off) & (r % st == 0) & (r < st * t_out))
    ori_map_mask = jnp.broadcast_to(
        m.astype(x_bct.dtype)[None, None], (B, 1, N, N))
    return ori_map_h, ori_map_mask


# ---------------------------------------------------------------------------
# Pure-JAX reference (correctness only; uses XLA scatters)
# ---------------------------------------------------------------------------
def _reference_forward(cfg, params, x_bct):
    B, C, T = x_bct.shape
    N = T // cfg[0][0][1]
    x = jnp.transpose(x_bct, (0, 2, 1))  # (B, T, C)
    h = jnp.zeros((B, C, N, N), x_bct.dtype)
    mask = jnp.zeros((B, 1, N, N), x_bct.dtype)
    acum, stride = 0, 1
    for scale_cfg, scale_params in zip(cfg, params):
        for i, ((k, s), (w, b)) in enumerate(zip(scale_cfg, scale_params)):
            t_in = x.shape[1]
            t_out = (t_in - k) // s + 1
            taps = [x[:, j:j + s * t_out:s, :] for j in range(k)]
            x_cat = jnp.concatenate(taps, axis=-1)
            y = jnp.einsum("btk,kc->btc", x_cat, w,
                           precision=lax.Precision.HIGHEST) + b
            stride *= s
            off = acum + i * stride
            rs = jnp.arange(0, N - off, stride)
            h = h.at[:, :, rs, rs + off].set(jnp.transpose(y, (0, 2, 1)))
            mask = mask.at[:, :, rs, rs + off].set(1.0)
            x = y
        acum += stride * (len(scale_cfg) + 1)
    return h, mask


if __name__ == "__main__":
    key = jax.random.PRNGKey(0)
    B, H, T = 2, 32, 16
    num_scale_layers = [4, 2]   # consistent pyramid: 16 -> 15 -> 14 -> 13 -> 6 -> 5

    key, xk, pk = jax.random.split(key, 3)
    cfg, params = init_params(num_scale_layers, H, pk)
    x = jax.random.normal(xk, (B, H, T), jnp.float32)   # PyTorch NCL layout

    ori_map_h, ori_map_mask = sparse_prop_conv_forward(cfg, params, x)
    jax.block_until_ready((ori_map_h, ori_map_mask))

    assert ori_map_h.shape == (B, H, T, T)
    assert ori_map_mask.shape == (B, 1, T, T)

    # Correctness check against a pure-JAX reference of the same module.
    ref_h, ref_mask = _reference_forward(cfg, params, x)
    assert jnp.allclose(ori_map_h, ref_h, atol=2e-3, rtol=2e-3), (
        float(jnp.max(jnp.abs(ori_map_h - ref_h))))
    assert jnp.allclose(ori_map_mask, ref_mask)

    print("KERNEL_OK")
</pallas_src>

<mosaic_0001>
module attributes {stable_mosaic.version = 11 : i64} {
  func.func @_fused_pyramid_kernel(%arg0: i32, %arg1: memref<1x16x32xf32, #tpu.memory_space<vmem>>, %arg2: memref<32x32xf32, #tpu.memory_space<vmem>>, %arg3: memref<64x32xf32, #tpu.memory_space<vmem>>, %arg4: memref<64x32xf32, #tpu.memory_space<vmem>>, %arg5: memref<64x32xf32, #tpu.memory_space<vmem>>, %arg6: memref<96x32xf32, #tpu.memory_space<vmem>>, %arg7: memref<64x32xf32, #tpu.memory_space<vmem>>, %arg8: memref<1x32xf32, #tpu.memory_space<vmem>>, %arg9: memref<1x32xf32, #tpu.memory_space<vmem>>, %arg10: memref<1x32xf32, #tpu.memory_space<vmem>>, %arg11: memref<1x32xf32, #tpu.memory_space<vmem>>, %arg12: memref<1x32xf32, #tpu.memory_space<vmem>>, %arg13: memref<1x32xf32, #tpu.memory_space<vmem>>, %arg14: memref<1x32x256xf32, #tpu.memory_space<vmem>>, %arg15: memref<16x32xf32, #tpu.memory_space<vmem>>, %arg16: memref<69x32xf32, #tpu.memory_space<vmem>>) attributes {dimension_semantics = [#tpu.dimension_semantics<parallel>], iteration_bounds = array<i64: 2>, scalar_prefetch = 0 : i64, scratch_operands = 2 : i64, tpu.core_type = #tpu.core_type<tc>, window_params = [{transform_indices = @transform_0, window_bounds = array<i64: 1, 16, 32>}, {pipeline_mode = #tpu.pipeline_mode<synchronous>, transform_indices = @transform_1, window_bounds = array<i64: 32, 32>}, {pipeline_mode = #tpu.pipeline_mode<synchronous>, transform_indices = @transform_2, window_bounds = array<i64: 64, 32>}, {pipeline_mode = #tpu.pipeline_mode<synchronous>, transform_indices = @transform_3, window_bounds = array<i64: 64, 32>}, {pipeline_mode = #tpu.pipeline_mode<synchronous>, transform_indices = @transform_4, window_bounds = array<i64: 64, 32>}, {pipeline_mode = #tpu.pipeline_mode<synchronous>, transform_indices = @transform_5, window_bounds = array<i64: 96, 32>}, {pipeline_mode = #tpu.pipeline_mode<synchronous>, transform_indices = @transform_6, window_bounds = array<i64: 64, 32>}, {pipeline_mode = #tpu.pipeline_mode<synchronous>, transform_indices = @transform_7, window_bounds = array<i64: 1, 32>}, {pipeline_mode = #tpu.pipeline_mode<synchronous>, transform_indices = @transform_8, window_bounds = array<i64: 1, 32>}, {pipeline_mode = #tpu.pipeline_mode<synchronous>, transform_indices = @transform_9, window_bounds = array<i64: 1, 32>}, {pipeline_mode = #tpu.pipeline_mode<synchronous>, transform_indices = @transform_10, window_bounds = array<i64: 1, 32>}, {pipeline_mode = #tpu.pipeline_mode<synchronous>, transform_indices = @transform_11, window_bounds = array<i64: 1, 32>}, {pipeline_mode = #tpu.pipeline_mode<synchronous>, transform_indices = @transform_12, window_bounds = array<i64: 1, 32>}, {transform_indices = @transform_13, window_bounds = array<i64: 1, 32, 256>}]} {
    %c0 = arith.constant 0 : index
    %c0_0 = arith.constant 0 : index
    %c0_1 = arith.constant 0 : index
    %0 = vector.load %arg1[%c0, %c0_0, %c0_1] : memref<1x16x32xf32, #tpu.memory_space<vmem>>, vector<1x16x32xf32>
    %1 = vector.shape_cast %0 : vector<1x16x32xf32> to vector<16x32xf32>
    %c0_2 = arith.constant 0 : index
    %c0_3 = arith.constant 0 : index
    %2 = vector.load %arg15[%c0_2, %c0_3] : memref<16x32xf32, #tpu.memory_space<vmem>>, vector<16x32xf32>
    tpu.vector_store %arg15[%c0_2, %c0_3], %1 {strides = array<i32>} : memref<16x32xf32, #tpu.memory_space<vmem>>, vector<16x32xf32>,
    %cst = arith.constant 0.000000e+00 : f32
    %3 = vector.broadcast %cst : f32 to vector<69x32xf32>
    %c0_4 = arith.constant 0 : index
    %c0_5 = arith.constant 0 : index
    %4 = vector.load %arg16[%c0_4, %c0_5] : memref<69x32xf32, #tpu.memory_space<vmem>>, vector<69x32xf32>
    tpu.vector_store %arg16[%c0_4, %c0_5], %3 {strides = array<i32>} : memref<69x32xf32, #tpu.memory_space<vmem>>, vector<69x32xf32>,
    %c0_6 = arith.constant 0 : index
    %c0_7 = arith.constant 0 : index
    %5 = vector.load %arg15[%c0_6, %c0_7] : memref<16x32xf32, #tpu.memory_space<vmem>>, vector<16x32xf32>
    %c0_8 = arith.constant 0 : index
    %c0_9 = arith.constant 0 : index
    %6 = vector.load %arg2[%c0_8, %c0_9] : memref<32x32xf32, #tpu.memory_space<vmem>>, vector<32x32xf32>
    %cst_10 = arith.constant dense<0.000000e+00> : vector<16x32xf32>
    %7 = tpu.matmul %5, %6, %cst_10 {dimension_numbers = #tpu.dot_dimension_numbers<[1], [0], [0], [1], [0, 0, 1, 1], [], []>} : vector<16x32xf32>, vector<32x32xf32>, vector<16x32xf32> -> vector<16x32xf32>
    %c0_11 = arith.constant 0 : index
    %c0_12 = arith.constant 0 : index
    %8 = vector.load %arg8[%c0_11, %c0_12] : memref<1x32xf32, #tpu.memory_space<vmem>>, vector<1x32xf32>
    %9 = vector.broadcast %8 : vector<1x32xf32> to vector<16x32xf32>
    %10 = arith.addf %7, %9 : vector<16x32xf32>
    %c0_13 = arith.constant 0 : index
    %c0_14 = arith.constant 0 : index
    %11 = vector.load %arg16[%c0_13, %c0_14] : memref<69x32xf32, #tpu.memory_space<vmem>>, vector<16x32xf32>
    tpu.vector_store %arg16[%c0_13, %c0_14], %10 {strides = array<i32>} : memref<69x32xf32, #tpu.memory_space<vmem>>, vector<16x32xf32>,
    %c0_15 = arith.constant 0 : index
    %c0_16 = arith.constant 0 : index
    %12 = vector.load %arg15[%c0_15, %c0_16] : memref<16x32xf32, #tpu.memory_space<vmem>>, vector<16x32xf32>
    tpu.vector_store %arg15[%c0_15, %c0_16], %10 {strides = array<i32>} : memref<16x32xf32, #tpu.memory_space<vmem>>, vector<16x32xf32>,
    %c0_17 = arith.constant 0 : index
    %c0_18 = arith.constant 0 : index
    %13 = vector.load %arg15[%c0_17, %c0_18] : memref<16x32xf32, #tpu.memory_space<vmem>>, vector<15x32xf32>
    %c1 = arith.constant 1 : index
    %c0_19 = arith.constant 0 : index
    %14 = vector.load %arg15[%c1, %c0_19] : memref<16x32xf32, #tpu.memory_space<vmem>>, vector<15x32xf32>
    %15 = tpu.concatenate %13, %14 in 1 : vector<15x32xf32>, vector<15x32xf32> -> vector<15x64xf32>
    %c0_20 = arith.constant 0 : index
    %c0_21 = arith.constant 0 : index
    %16 = vector.load %arg3[%c0_20, %c0_21] : memref<64x32xf32, #tpu.memory_space<vmem>>, vector<64x32xf32>
    %cst_22 = arith.constant dense<0.000000e+00> : vector<15x32xf32>
    %17 = tpu.matmul %15, %16, %cst_22 {dimension_numbers = #tpu.dot_dimension_numbers<[1], [0], [0], [1], [0, 0, 1, 1], [], []>} : vector<15x64xf32>, vector<64x32xf32>, vector<15x32xf32> -> vector<15x32xf32>
    %c0_23 = arith.constant 0 : index
    %c0_24 = arith.constant 0 : index
    %18 = vector.load %arg9[%c0_23, %c0_24] : memref<1x32xf32, #tpu.memory_space<vmem>>, vector<1x32xf32>
    %19 = vector.broadcast %18 : vector<1x32xf32> to vector<15x32xf32>
    %20 = arith.addf %17, %19 : vector<15x32xf32>
    %c16 = arith.constant 16 : index
    %c0_25 = arith.constant 0 : index
    %21 = vector.load %arg16[%c16, %c0_25] : memref<69x32xf32, #tpu.memory_space<vmem>>, vector<15x32xf32>
    tpu.vector_store %arg16[%c16, %c0_25], %20 {strides = array<i32>} : memref<69x32xf32, #tpu.memory_space<vmem>>, vector<15x32xf32>,
    %c0_26 = arith.constant 0 : index
    %c0_27 = arith.constant 0 : index
    %22 = vector.load %arg15[%c0_26, %c0_27] : memref<16x32xf32, #tpu.memory_space<vmem>>, vector<15x32xf32>
    tpu.vector_store %arg15[%c0_26, %c0_27], %20 {strides = array<i32>} : memref<16x32xf32, #tpu.memory_space<vmem>>, vector<15x32xf32>,
    %c0_28 = arith.constant 0 : index
    %c0_29 = arith.constant 0 : index
    %23 = vector.load %arg15[%c0_28, %c0_29] : memref<16x32xf32, #tpu.memory_space<vmem>>, vector<14x32xf32>
    %c1_30 = arith.constant 1 : index
    %c0_31 = arith.constant 0 : index
    %24 = vector.load %arg15[%c1_30, %c0_31] : memref<16x32xf32, #tpu.memory_space<vmem>>, vector<14x32xf32>
    %25 = tpu.concatenate %23, %24 in 1 : vector<14x32xf32>, vector<14x32xf32> -> vector<14x64xf32>
    %c0_32 = arith.constant 0 : index
    %c0_33 = arith.constant 0 : index
    %26 = vector.load %arg4[%c0_32, %c0_33] : memref<64x32xf32, #tpu.memory_space<vmem>>, vector<64x32xf32>
    %cst_34 = arith.constant dense<0.000000e+00> : vector<14x32xf32>
    %27 = tpu.matmul %25, %26, %cst_34 {dimension_numbers = #tpu.dot_dimension_numbers<[1], [0], [0], [1], [0, 0, 1, 1], [], []>} : vector<14x64xf32>, vector<64x32xf32>, vector<14x32xf32> -> vector<14x32xf32>
    %c0_35 = arith.constant 0 : index
    %c0_36 = arith.constant 0 : index
    %28 = vector.load %arg10[%c0_35, %c0_36] : memref<1x32xf32, #tpu.memory_space<vmem>>, vector<1x32xf32>
    %29 = vector.broadcast %28 : vector<1x32xf32> to vector<14x32xf32>
    %30 = arith.addf %27, %29 : vector<14x32xf32>
    %c31 = arith.constant 31 : index
    %c0_37 = arith.constant 0 : index
    %31 = vector.load %arg16[%c31, %c0_37] : memref<69x32xf32, #tpu.memory_space<vmem>>, vector<14x32xf32>
    tpu.vector_store %arg16[%c31, %c0_37], %30 {strides = array<i32>} : memref<69x32xf32, #tpu.memory_space<vmem>>, vector<14x32xf32>,
    %c0_38 = arith.constant 0 : index
    %c0_39 = arith.constant 0 : index
    %32 = vector.load %arg15[%c0_38, %c0_39] : memref<16x32xf32, #tpu.memory_space<vmem>>, vector<14x32xf32>
    tpu.vector_store %arg15[%c0_38, %c0_39], %30 {strides = array<i32>} : memref<16x32xf32, #tpu.memory_space<vmem>>, vector<14x32xf32>,
    %c0_40 = arith.constant 0 : index
    %c0_41 = arith.constant 0 : index
    %33 = vector.load %arg15[%c0_40, %c0_41] : memref<16x32xf32, #tpu.memory_space<vmem>>, vector<13x32xf32>
    %c1_42 = arith.constant 1 : index
    %c0_43 = arith.constant 0 : index
    %34 = vector.load %arg15[%c1_42, %c0_43] : memref<16x32xf32, #tpu.memory_space<vmem>>, vector<13x32xf32>
    %35 = tpu.concatenate %33, %34 in 1 : vector<13x32xf32>, vector<13x32xf32> -> vector<13x64xf32>
    %c0_44 = arith.constant 0 : index
    %c0_45 = arith.constant 0 : index
    %36 = vector.load %arg5[%c0_44, %c0_45] : memref<64x32xf32, #tpu.memory_space<vmem>>, vector<64x32xf32>
    %cst_46 = arith.constant dense<0.000000e+00> : vector<13x32xf32>
    %37 = tpu.matmul %35, %36, %cst_46 {dimension_numbers = #tpu.dot_dimension_numbers<[1], [0], [0], [1], [0, 0, 1, 1], [], []>} : vector<13x64xf32>, vector<64x32xf32>, vector<13x32xf32> -> vector<13x32xf32>
    %c0_47 = arith.constant 0 : index
    %c0_48 = arith.constant 0 : index
    %38 = vector.load %arg11[%c0_47, %c0_48] : memref<1x32xf32, #tpu.memory_space<vmem>>, vector<1x32xf32>
    %39 = vector.broadcast %38 : vector<1x32xf32> to vector<13x32xf32>
    %40 = arith.addf %37, %39 : vector<13x32xf32>
    %c45 = arith.constant 45 : index
    %c0_49 = arith.constant 0 : index
    %41 = vector.load %arg16[%c45, %c0_49] : memref<69x32xf32, #tpu.memory_space<vmem>>, vector<13x32xf32>
    tpu.vector_store %arg16[%c45, %c0_49], %40 {strides = array<i32>} : memref<69x32xf32, #tpu.memory_space<vmem>>, vector<13x32xf32>,
    %c0_50 = arith.constant 0 : index
    %c0_51 = arith.constant 0 : index
    %42 = vector.load %arg15[%c0_50, %c0_51] : memref<16x32xf32, #tpu.memory_space<vmem>>, vector<13x32xf32>
    tpu.vector_store %arg15[%c0_50, %c0_51], %40 {strides = array<i32>} : memref<16x32xf32, #tpu.memory_space<vmem>>, vector<13x32xf32>,
    %c0_52 = arith.constant 0 : index
    %c0_53 = arith.constant 0 : index
    %43 = tpu.strided_load %arg15[%c0_52, %c0_53] {strides = array<i32: 2, 1>} : memref<16x32xf32, #tpu.memory_space<vmem>>, vector<6x32xf32>
    %c1_54 = arith.constant 1 : index
    %c0_55 = arith.constant 0 : index
    %44 = tpu.strided_load %arg15[%c1_54, %c0_55] {strides = array<i32: 2, 1>} : memref<16x32xf32, #tpu.memory_space<vmem>>, vector<6x32xf32>
    %c2 = arith.constant 2 : index
    %c0_56 = arith.constant 0 : index
    %45 = tpu.strided_load %arg15[%c2, %c0_56] {strides = array<i32: 2, 1>} : memref<16x32xf32, #tpu.memory_space<vmem>>, vector<6x32xf32>
    %46 = tpu.concatenate %43, %44, %45 in 1 : vector<6x32xf32>, vector<6x32xf32>, vector<6x32xf32> -> vector<6x96xf32>
    %c0_57 = arith.constant 0 : index
    %c0_58 = arith.constant 0 : index
    %47 = vector.load %arg6[%c0_57, %c0_58] : memref<96x32xf32, #tpu.memory_space<vmem>>, vector<96x32xf32>
    %cst_59 = arith.constant dense<0.000000e+00> : vector<6x32xf32>
    %48 = tpu.matmul %46, %47, %cst_59 {dimension_numbers = #tpu.dot_dimension_numbers<[1], [0], [0], [1], [0, 0, 1, 1], [], []>} : vector<6x96xf32>, vector<96x32xf32>, vector<6x32xf32> -> vector<6x32xf32>
    %c0_60 = arith.constant 0 : index
    %c0_61 = arith.constant 0 : index
    %49 = vector.load %arg12[%c0_60, %c0_61] : memref<1x32xf32, #tpu.memory_space<vmem>>, vector<1x32xf32>
    %50 = vector.broadcast %49 : vector<1x32xf32> to vector<6x32xf32>
    %51 = arith.addf %48, %50 : vector<6x32xf32>
    %c58 = arith.constant 58 : index
    %c0_62 = arith.constant 0 : index
    %52 = vector.load %arg16[%c58, %c0_62] : memref<69x32xf32, #tpu.memory_space<vmem>>, vector<6x32xf32>
    tpu.vector_store %arg16[%c58, %c0_62], %51 {strides = array<i32>} : memref<69x32xf32, #tpu.memory_space<vmem>>, vector<6x32xf32>,
    %c0_63 = arith.constant 0 : index
    %c0_64 = arith.constant 0 : index
    %53 = vector.load %arg15[%c0_63, %c0_64] : memref<16x32xf32, #tpu.memory_space<vmem>>, vector<6x32xf32>
    tpu.vector_store %arg15[%c0_63, %c0_64], %51 {strides = array<i32>} : memref<16x32xf32, #tpu.memory_space<vmem>>, vector<6x32xf32>,
    %c0_65 = arith.constant 0 : index
    %c0_66 = arith.constant 0 : index
    %54 = vector.load %arg15[%c0_65, %c0_66] : memref<16x32xf32, #tpu.memory_space<vmem>>, vector<5x32xf32>
    %c1_67 = arith.constant 1 : index
    %c0_68 = arith.constant 0 : index
    %55 = vector.load %arg15[%c1_67, %c0_68] : memref<16x32xf32, #tpu.memory_space<vmem>>, vector<5x32xf32>
    %56 = tpu.concatenate %54, %55 in 1 : vector<5x32xf32>, vector<5x32xf32> -> vector<5x64xf32>
    %c0_69 = arith.constant 0 : index
    %c0_70 = arith.constant 0 : index
    %57 = vector.load %arg7[%c0_69, %c0_70] : memref<64x32xf32, #tpu.memory_space<vmem>>, vector<64x32xf32>
    %cst_71 = arith.constant dense<0.000000e+00> : vector<5x32xf32>
    %58 = tpu.matmul %56, %57, %cst_71 {dimension_numbers = #tpu.dot_dimension_numbers<[1], [0], [0], [1], [0, 0, 1, 1], [], []>} : vector<5x64xf32>, vector<64x32xf32>, vector<5x32xf32> -> vector<5x32xf32>
    %c0_72 = arith.constant 0 : index
    %c0_73 = arith.constant 0 : index
    %59 = vector.load %arg13[%c0_72, %c0_73] : memref<1x32xf32, #tpu.memory_space<vmem>>, vector<1x32xf32>
    %60 = vector.broadcast %59 : vector<1x32xf32> to vector<5x32xf32>
    %61 = arith.addf %58, %60 : vector<5x32xf32>
    %c64 = arith.constant 64 : index
    %c0_74 = arith.constant 0 : index
    %62 = vector.load %arg16[%c64, %c0_74] : memref<69x32xf32, #tpu.memory_space<vmem>>, vector<5x32xf32>
    tpu.vector_store %arg16[%c64, %c0_74], %61 {strides = array<i32>} : memref<69x32xf32, #tpu.memory_space<vmem>>, vector<5x32xf32>,
    %63 = tpu.iota {dimensions = array<i32: 0>} : vector<69x256xi32>
    %64 = tpu.iota {dimensions = array<i32: 1>} : vector<69x256xi32>
    %cst_75 = arith.constant 0.000000e+00 : f32
    %65 = vector.broadcast %cst_75 : f32 to vector<69x256xf32>
    %c0_i32 = arith.constant 0 : i32
    %66 = vector.broadcast %c0_i32 : i32 to vector<69x256xi32>
    %67 = arith.subi %63, %66 : vector<69x256xi32>
    %c17_i32 = arith.constant 17 : i32
    %68 = vector.broadcast %c17_i32 : i32 to vector<69x256xi32>
    %69 = arith.muli %67, %68 : vector<69x256xi32>
    %c0_i32_76 = arith.constant 0 : i32
    %70 = vector.broadcast %c0_i32_76 : i32 to vector<69x256xi32>
    %71 = arith.addi %69, %70 : vector<69x256xi32>
    %c0_i32_77 = arith.constant 0 : i32
    %72 = vector.broadcast %c0_i32_77 : i32 to vector<69x256xi32>
    %73 = arith.cmpi sge, %63, %72 : vector<69x256xi32>
    %c16_i32 = arith.constant 16 : i32
    %74 = vector.broadcast %c16_i32 : i32 to vector<69x256xi32>
    %75 = arith.cmpi slt, %63, %74 : vector<69x256xi32>
    %76 = arith.andi %73, %75 : vector<69x256xi1>
    %77 = arith.cmpi eq, %64, %71 : vector<69x256xi32>
    %78 = arith.andi %76, %77 : vector<69x256xi1>
    %cst_78 = arith.constant 1.000000e+00 : f32
    %79 = vector.broadcast %cst_78 : f32 to vector<69x256xf32>
    %80 = arith.select %78, %79, %65 : vector<69x256xi1>, vector<69x256xf32>
    %c16_i32_79 = arith.constant 16 : i32
    %81 = vector.broadcast %c16_i32_79 : i32 to vector<69x256xi32>
    %82 = arith.subi %63, %81 : vector<69x256xi32>
    %c17_i32_80 = arith.constant 17 : i32
    %83 = vector.broadcast %c17_i32_80 : i32 to vector<69x256xi32>
    %84 = arith.muli %82, %83 : vector<69x256xi32>
    %c1_i32 = arith.constant 1 : i32
    %85 = vector.broadcast %c1_i32 : i32 to vector<69x256xi32>
    %86 = arith.addi %84, %85 : vector<69x256xi32>
    %c16_i32_81 = arith.constant 16 : i32
    %87 = vector.broadcast %c16_i32_81 : i32 to vector<69x256xi32>
    %88 = arith.cmpi sge, %63, %87 : vector<69x256xi32>
    %c31_i32 = arith.constant 31 : i32
    %89 = vector.broadcast %c31_i32 : i32 to vector<69x256xi32>
    %90 = arith.cmpi slt, %63, %89 : vector<69x256xi32>
    %91 = arith.andi %88, %90 : vector<69x256xi1>
    %92 = arith.cmpi eq, %64, %86 : vector<69x256xi32>
    %93 = arith.andi %91, %92 : vector<69x256xi1>
    %cst_82 = arith.constant 1.000000e+00 : f32
    %94 = vector.broadcast %cst_82 : f32 to vector<69x256xf32>
    %95 = arith.select %93, %94, %80 : vector<69x256xi1>, vector<69x256xf32>
    %c31_i32_83 = arith.constant 31 : i32
    %96 = vector.broadcast %c31_i32_83 : i32 to vector<69x256xi32>
    %97 = arith.subi %63, %96 : vector<69x256xi32>
    %c17_i32_84 = arith.constant 17 : i32
    %98 = vector.broadcast %c17_i32_84 : i32 to vector<69x256xi32>
    %99 = arith.muli %97, %98 : vector<69x256xi32>
    %c2_i32 = arith.constant 2 : i32
    %100 = vector.broadcast %c2_i32 : i32 to vector<69x256xi32>
    %101 = arith.addi %99, %100 : vector<69x256xi32>
    %c31_i32_85 = arith.constant 31 : i32
    %102 = vector.broadcast %c31_i32_85 : i32 to vector<69x256xi32>
    %103 = arith.cmpi sge, %63, %102 : vector<69x256xi32>
    %c45_i32 = arith.constant 45 : i32
    %104 = vector.broadcast %c45_i32 : i32 to vector<69x256xi32>
    %105 = arith.cmpi slt, %63, %104 : vector<69x256xi32>
    %106 = arith.andi %103, %105 : vector<69x256xi1>
    %107 = arith.cmpi eq, %64, %101 : vector<69x256xi32>
    %108 = arith.andi %106, %107 : vector<69x256xi1>
    %cst_86 = arith.constant 1.000000e+00 : f32
    %109 = vector.broadcast %cst_86 : f32 to vector<69x256xf32>
    %110 = arith.select %108, %109, %95 : vector<69x256xi1>, vector<69x256xf32>
    %c45_i32_87 = arith.constant 45 : i32
    %111 = vector.broadcast %c45_i32_87 : i32 to vector<69x256xi32>
    %112 = arith.subi %63, %111 : vector<69x256xi32>
    %c17_i32_88 = arith.constant 17 : i32
    %113 = vector.broadcast %c17_i32_88 : i32 to vector<69x256xi32>
    %114 = arith.muli %112, %113 : vector<69x256xi32>
    %c3_i32 = arith.constant 3 : i32
    %115 = vector.broadcast %c3_i32 : i32 to vector<69x256xi32>
    %116 = arith.addi %114, %115 : vector<69x256xi32>
    %c45_i32_89 = arith.constant 45 : i32
    %117 = vector.broadcast %c45_i32_89 : i32 to vector<69x256xi32>
    %118 = arith.cmpi sge, %63, %117 : vector<69x256xi32>
    %c58_i32 = arith.constant 58 : i32
    %119 = vector.broadcast %c58_i32 : i32 to vector<69x256xi32>
    %120 = arith.cmpi slt, %63, %119 : vector<69x256xi32>
    %121 = arith.andi %118, %120 : vector<69x256xi1>
    %122 = arith.cmpi eq, %64, %116 : vector<69x256xi32>
    %123 = arith.andi %121, %122 : vector<69x256xi1>
    %cst_90 = arith.constant 1.000000e+00 : f32
    %124 = vector.broadcast %cst_90 : f32 to vector<69x256xf32>
    %125 = arith.select %123, %124, %110 : vector<69x256xi1>, vector<69x256xf32>
    %c58_i32_91 = arith.constant 58 : i32
    %126 = vector.broadcast %c58_i32_91 : i32 to vector<69x256xi32>
    %127 = arith.subi %63, %126 : vector<69x256xi32>
    %c34_i32 = arith.constant 34 : i32
    %128 = vector.broadcast %c34_i32 : i32 to vector<69x256xi32>
    %129 = arith.muli %127, %128 : vector<69x256xi32>
    %c5_i32 = arith.constant 5 : i32
    %130 = vector.broadcast %c5_i32 : i32 to vector<69x256xi32>
    %131 = arith.addi %129, %130 : vector<69x256xi32>
    %c58_i32_92 = arith.constant 58 : i32
    %132 = vector.broadcast %c58_i32_92 : i32 to vector<69x256xi32>
    %133 = arith.cmpi sge, %63, %132 : vector<69x256xi32>
    %c64_i32 = arith.constant 64 : i32
    %134 = vector.broadcast %c64_i32 : i32 to vector<69x256xi32>
    %135 = arith.cmpi slt, %63, %134 : vector<69x256xi32>
    %136 = arith.andi %133, %135 : vector<69x256xi1>
    %137 = arith.cmpi eq, %64, %131 : vector<69x256xi32>
    %138 = arith.andi %136, %137 : vector<69x256xi1>
    %cst_93 = arith.constant 1.000000e+00 : f32
    %139 = vector.broadcast %cst_93 : f32 to vector<69x256xf32>
    %140 = arith.select %138, %139, %125 : vector<69x256xi1>, vector<69x256xf32>
    %c64_i32_94 = arith.constant 64 : i32
    %141 = vector.broadcast %c64_i32_94 : i32 to vector<69x256xi32>
    %142 = arith.subi %63, %141 : vector<69x256xi32>
    %c34_i32_95 = arith.constant 34 : i32
    %143 = vector.broadcast %c34_i32_95 : i32 to vector<69x256xi32>
    %144 = arith.muli %142, %143 : vector<69x256xi32>
    %c7_i32 = arith.constant 7 : i32
    %145 = vector.broadcast %c7_i32 : i32 to vector<69x256xi32>
    %146 = arith.addi %144, %145 : vector<69x256xi32>
    %c64_i32_96 = arith.constant 64 : i32
    %147 = vector.broadcast %c64_i32_96 : i32 to vector<69x256xi32>
    %148 = arith.cmpi sge, %63, %147 : vector<69x256xi32>
    %c69_i32 = arith.constant 69 : i32
    %149 = vector.broadcast %c69_i32 : i32 to vector<69x256xi32>
    %150 = arith.cmpi slt, %63, %149 : vector<69x256xi32>
    %151 = arith.andi %148, %150 : vector<69x256xi1>
    %152 = arith.cmpi eq, %64, %146 : vector<69x256xi32>
    %153 = arith.andi %151, %152 : vector<69x256xi1>
    %cst_97 = arith.constant 1.000000e+00 : f32
    %154 = vector.broadcast %cst_97 : f32 to vector<69x256xf32>
    %155 = arith.select %153, %154, %140 : vector<69x256xi1>, vector<69x256xf32>
    %c0_98 = arith.constant 0 : index
    %c0_99 = arith.constant 0 : index
    %156 = vector.load %arg16[%c0_98, %c0_99] : memref<69x32xf32, #tpu.memory_space<vmem>>, vector<69x32xf32>
    %157 = tpu.transpose %156, [1, 0] : vector<69x32xf32> -> vector<32x69xf32>
    %cst_100 = arith.constant dense<0.000000e+00> : vector<32x256xf32>
    %158 = tpu.matmul %157, %155, %cst_100 {dimension_numbers = #tpu.dot_dimension_numbers<[1], [0], [0], [1], [0, 0, 1, 1], [], []>} : vector<32x69xf32>, vector<69x256xf32>, vector<32x256xf32> -> vector<32x256xf32>
    %c0_101 = arith.constant 0 : index
    %c0_102 = arith.constant 0 : index
    %c0_103 = arith.constant 0 : index
    %159 = vector.load %arg14[%c0_101, %c0_102, %c0_103] : memref<1x32x256xf32, #tpu.memory_space<vmem>>, vector<1x32x256xf32>
    %160 = vector.shape_cast %159 : vector<1x32x256xf32> to vector<32x256xf32>
    %161 = vector.shape_cast %158 : vector<32x256xf32> to vector<1x32x256xf32>
    tpu.vector_store %arg14[%c0_101, %c0_102, %c0_103], %161 {strides = array<i32>} : memref<1x32x256xf32, #tpu.memory_space<vmem>>, vector<1x32x256xf32>,
    return
  }
  func.func @transform_0(%arg0: i32) -> (i32, i32, i32) {
    %c0_i32 = arith.constant 0 : i32
    %c0_i32_0 = arith.constant 0 : i32
    %c0_i32_1 = arith.constant 0 : i32
    return %arg0, %c0_i32, %c0_i32_0 : i32, i32, i32
  }
  func.func @transform_1(%arg0: i32) -> (i32, i32) {
    %c0_i32 = arith.constant 0 : i32
    %c0_i32_0 = arith.constant 0 : i32
    %c0_i32_1 = arith.constant 0 : i32
    return %c0_i32, %c0_i32_0 : i32, i32
  }
  func.func @transform_2(%arg0: i32) -> (i32, i32) {
    %c0_i32 = arith.constant 0 : i32
    %c0_i32_0 = arith.constant 0 : i32
    %c0_i32_1 = arith.constant 0 : i32
    return %c0_i32, %c0_i32_0 : i32, i32
  }
  func.func @transform_3(%arg0: i32) -> (i32, i32) {
    %c0_i32 = arith.constant 0 : i32
    %c0_i32_0 = arith.constant 0 : i32
    %c0_i32_1 = arith.constant 0 : i32
    return %c0_i32, %c0_i32_0 : i32, i32
  }
  func.func @transform_4(%arg0: i32) -> (i32, i32) {
    %c0_i32 = arith.constant 0 : i32
    %c0_i32_0 = arith.constant 0 : i32
    %c0_i32_1 = arith.constant 0 : i32
    return %c0_i32, %c0_i32_0 : i32, i32
  }
  func.func @transform_5(%arg0: i32) -> (i32, i32) {
    %c0_i32 = arith.constant 0 : i32
    %c0_i32_0 = arith.constant 0 : i32
    %c0_i32_1 = arith.constant 0 : i32
    return %c0_i32, %c0_i32_0 : i32, i32
  }
  func.func @transform_6(%arg0: i32) -> (i32, i32) {
    %c0_i32 = arith.constant 0 : i32
    %c0_i32_0 = arith.constant 0 : i32
    %c0_i32_1 = arith.constant 0 : i32
    return %c0_i32, %c0_i32_0 : i32, i32
  }
  func.func @transform_7(%arg0: i32) -> (i32, i32) {
    %c0_i32 = arith.constant 0 : i32
    %c0_i32_0 = arith.constant 0 : i32
    %c0_i32_1 = arith.constant 0 : i32
    return %c0_i32, %c0_i32_0 : i32, i32
  }
  func.func @transform_8(%arg0: i32) -> (i32, i32) {
    %c0_i32 = arith.constant 0 : i32
    %c0_i32_0 = arith.constant 0 : i32
    %c0_i32_1 = arith.constant 0 : i32
    return %c0_i32, %c0_i32_0 : i32, i32
  }
  func.func @transform_9(%arg0: i32) -> (i32, i32) {
    %c0_i32 = arith.constant 0 : i32
    %c0_i32_0 = arith.constant 0 : i32
    %c0_i32_1 = arith.constant 0 : i32
    return %c0_i32, %c0_i32_0 : i32, i32
  }
  func.func @transform_10(%arg0: i32) -> (i32, i32) {
    %c0_i32 = arith.constant 0 : i32
    %c0_i32_0 = arith.constant 0 : i32
    %c0_i32_1 = arith.constant 0 : i32
    return %c0_i32, %c0_i32_0 : i32, i32
  }
  func.func @transform_11(%arg0: i32) -> (i32, i32) {
    %c0_i32 = arith.constant 0 : i32
    %c0_i32_0 = arith.constant 0 : i32
    %c0_i32_1 = arith.constant 0 : i32
    return %c0_i32, %c0_i32_0 : i32, i32
  }
  func.func @transform_12(%arg0: i32) -> (i32, i32) {
    %c0_i32 = arith.constant 0 : i32
    %c0_i32_0 = arith.constant 0 : i32
    %c0_i32_1 = arith.constant 0 : i32
    return %c0_i32, %c0_i32_0 : i32, i32
  }
  func.func @transform_13(%arg0: i32) -> (i32, i32, i32) {
    %c0_i32 = arith.constant 0 : i32
    %c0_i32_0 = arith.constant 0 : i32
    %c0_i32_1 = arith.constant 0 : i32
    return %arg0, %c0_i32, %c0_i32_0 : i32, i32, i32
  }
}

module attributes {stable_mosaic.version = 11 : i64} {
  func.func @_fused_pyramid_kernel(%arg0: i32, %arg1: memref<1x16x32xf32, #tpu.memory_space<vmem>>, %arg2: memref<32x32xf32, #tpu.memory_space<vmem>>, %arg3: memref<64x32xf32, #tpu.memory_space<vmem>>, %arg4: memref<64x32xf32, #tpu.memory_space<vmem>>, %arg5: memref<64x32xf32, #tpu.memory_space<vmem>>, %arg6: memref<96x32xf32, #tpu.memory_space<vmem>>, %arg7: memref<64x32xf32, #tpu.memory_space<vmem>>, %arg8: memref<1x32xf32, #tpu.memory_space<vmem>>, %arg9: memref<1x32xf32, #tpu.memory_space<vmem>>, %arg10: memref<1x32xf32, #tpu.memory_space<vmem>>, %arg11: memref<1x32xf32, #tpu.memory_space<vmem>>, %arg12: memref<1x32xf32, #tpu.memory_space<vmem>>, %arg13: memref<1x32xf32, #tpu.memory_space<vmem>>, %arg14: memref<1x32x256xf32, #tpu.memory_space<vmem>>, %arg15: memref<16x32xf32, #tpu.memory_space<vmem>>, %arg16: memref<69x32xf32, #tpu.memory_space<vmem>>) attributes {dimension_semantics = [#tpu.dimension_semantics<parallel>], iteration_bounds = array<i64: 2>, scalar_prefetch = 0 : i64, scratch_operands = 2 : i64, tpu.core_type = #tpu.core_type<tc>, window_params = [{transform_indices = @transform_0, window_bounds = array<i64: 1, 16, 32>}, {pipeline_mode = #tpu.pipeline_mode<synchronous>, transform_indices = @transform_1, window_bounds = array<i64: 32, 32>}, {pipeline_mode = #tpu.pipeline_mode<synchronous>, transform_indices = @transform_2, window_bounds = array<i64: 64, 32>}, {pipeline_mode = #tpu.pipeline_mode<synchronous>, transform_indices = @transform_3, window_bounds = array<i64: 64, 32>}, {pipeline_mode = #tpu.pipeline_mode<synchronous>, transform_indices = @transform_4, window_bounds = array<i64: 64, 32>}, {pipeline_mode = #tpu.pipeline_mode<synchronous>, transform_indices = @transform_5, window_bounds = array<i64: 96, 32>}, {pipeline_mode = #tpu.pipeline_mode<synchronous>, transform_indices = @transform_6, window_bounds = array<i64: 64, 32>}, {pipeline_mode = #tpu.pipeline_mode<synchronous>, transform_indices = @transform_7, window_bounds = array<i64: 1, 32>}, {pipeline_mode = #tpu.pipeline_mode<synchronous>, transform_indices = @transform_8, window_bounds = array<i64: 1, 32>}, {pipeline_mode = #tpu.pipeline_mode<synchronous>, transform_indices = @transform_9, window_bounds = array<i64: 1, 32>}, {pipeline_mode = #tpu.pipeline_mode<synchronous>, transform_indices = @transform_10, window_bounds = array<i64: 1, 32>}, {pipeline_mode = #tpu.pipeline_mode<synchronous>, transform_indices = @transform_11, window_bounds = array<i64: 1, 32>}, {pipeline_mode = #tpu.pipeline_mode<synchronous>, transform_indices = @transform_12, window_bounds = array<i64: 1, 32>}, {transform_indices = @transform_13, window_bounds = array<i64: 1, 32, 256>}]} {
    %c0 = arith.constant 0 : index
    %c0_0 = arith.constant 0 : index
    %c0_1 = arith.constant 0 : index
    %0 = vector.load %arg1[%c0, %c0_0, %c0_1] : memref<1x16x32xf32, #tpu.memory_space<vmem>>, vector<1x16x32xf32>
    %1 = vector.shape_cast %0 : vector<1x16x32xf32> to vector<16x32xf32>
    %c0_2 = arith.constant 0 : index
    %c0_3 = arith.constant 0 : index
    %2 = vector.load %arg15[%c0_2, %c0_3] : memref<16x32xf32, #tpu.memory_space<vmem>>, vector<16x32xf32>
    tpu.vector_store %arg15[%c0_2, %c0_3], %1 {strides = array<i32>} : memref<16x32xf32, #tpu.memory_space<vmem>>, vector<16x32xf32>,
    %cst = arith.constant 0.000000e+00 : f32
    %3 = vector.broadcast %cst : f32 to vector<69x32xf32>
    %c0_4 = arith.constant 0 : index
    %c0_5 = arith.constant 0 : index
    %4 = vector.load %arg16[%c0_4, %c0_5] : memref<69x32xf32, #tpu.memory_space<vmem>>, vector<69x32xf32>
    tpu.vector_store %arg16[%c0_4, %c0_5], %3 {strides = array<i32>} : memref<69x32xf32, #tpu.memory_space<vmem>>, vector<69x32xf32>,
    %c0_6 = arith.constant 0 : index
    %c0_7 = arith.constant 0 : index
    %5 = vector.load %arg15[%c0_6, %c0_7] : memref<16x32xf32, #tpu.memory_space<vmem>>, vector<16x32xf32>
    %c0_8 = arith.constant 0 : index
    %c0_9 = arith.constant 0 : index
    %6 = vector.load %arg2[%c0_8, %c0_9] : memref<32x32xf32, #tpu.memory_space<vmem>>, vector<32x32xf32>
    %cst_10 = arith.constant dense<0.000000e+00> : vector<16x32xf32>
    %7 = tpu.matmul %5, %6, %cst_10 {dimension_numbers = #tpu.dot_dimension_numbers<[1], [0], [0], [1], [0, 0, 1, 1], [], []>} : vector<16x32xf32>, vector<32x32xf32>, vector<16x32xf32> -> vector<16x32xf32>
    %c0_11 = arith.constant 0 : index
    %c0_12 = arith.constant 0 : index
    %8 = vector.load %arg8[%c0_11, %c0_12] : memref<1x32xf32, #tpu.memory_space<vmem>>, vector<1x32xf32>
    %9 = vector.broadcast %8 : vector<1x32xf32> to vector<16x32xf32>
    %10 = arith.addf %7, %9 : vector<16x32xf32>
    %c0_13 = arith.constant 0 : index
    %c0_14 = arith.constant 0 : index
    %11 = vector.load %arg16[%c0_13, %c0_14] : memref<69x32xf32, #tpu.memory_space<vmem>>, vector<16x32xf32>
    tpu.vector_store %arg16[%c0_13, %c0_14], %10 {strides = array<i32>} : memref<69x32xf32, #tpu.memory_space<vmem>>, vector<16x32xf32>,
    %c0_15 = arith.constant 0 : index
    %c0_16 = arith.constant 0 : index
    %12 = vector.load %arg15[%c0_15, %c0_16] : memref<16x32xf32, #tpu.memory_space<vmem>>, vector<16x32xf32>
    tpu.vector_store %arg15[%c0_15, %c0_16], %10 {strides = array<i32>} : memref<16x32xf32, #tpu.memory_space<vmem>>, vector<16x32xf32>,
    %c0_17 = arith.constant 0 : index
    %c0_18 = arith.constant 0 : index
    %13 = vector.load %arg15[%c0_17, %c0_18] : memref<16x32xf32, #tpu.memory_space<vmem>>, vector<15x32xf32>
    %c1 = arith.constant 1 : index
    %c0_19 = arith.constant 0 : index
    %14 = vector.load %arg15[%c1, %c0_19] : memref<16x32xf32, #tpu.memory_space<vmem>>, vector<15x32xf32>
    %15 = tpu.concatenate %13, %14 in 1 : vector<15x32xf32>, vector<15x32xf32> -> vector<15x64xf32>
    %c0_20 = arith.constant 0 : index
    %c0_21 = arith.constant 0 : index
    %16 = vector.load %arg3[%c0_20, %c0_21] : memref<64x32xf32, #tpu.memory_space<vmem>>, vector<64x32xf32>
    %cst_22 = arith.constant dense<0.000000e+00> : vector<15x32xf32>
    %17 = tpu.matmul %15, %16, %cst_22 {dimension_numbers = #tpu.dot_dimension_numbers<[1], [0], [0], [1], [0, 0, 1, 1], [], []>} : vector<15x64xf32>, vector<64x32xf32>, vector<15x32xf32> -> vector<15x32xf32>
    %c0_23 = arith.constant 0 : index
    %c0_24 = arith.constant 0 : index
    %18 = vector.load %arg9[%c0_23, %c0_24] : memref<1x32xf32, #tpu.memory_space<vmem>>, vector<1x32xf32>
    %19 = vector.broadcast %18 : vector<1x32xf32> to vector<15x32xf32>
    %20 = arith.addf %17, %19 : vector<15x32xf32>
    %c16 = arith.constant 16 : index
    %c0_25 = arith.constant 0 : index
    %21 = vector.load %arg16[%c16, %c0_25] : memref<69x32xf32, #tpu.memory_space<vmem>>, vector<15x32xf32>
    tpu.vector_store %arg16[%c16, %c0_25], %20 {strides = array<i32>} : memref<69x32xf32, #tpu.memory_space<vmem>>, vector<15x32xf32>,
    %c0_26 = arith.constant 0 : index
    %c0_27 = arith.constant 0 : index
    %22 = vector.load %arg15[%c0_26, %c0_27] : memref<16x32xf32, #tpu.memory_space<vmem>>, vector<15x32xf32>
    tpu.vector_store %arg15[%c0_26, %c0_27], %20 {strides = array<i32>} : memref<16x32xf32, #tpu.memory_space<vmem>>, vector<15x32xf32>,
    %c0_28 = arith.constant 0 : index
    %c0_29 = arith.constant 0 : index
    %23 = vector.load %arg15[%c0_28, %c0_29] : memref<16x32xf32, #tpu.memory_space<vmem>>, vector<14x32xf32>
    %c1_30 = arith.constant 1 : index
    %c0_31 = arith.constant 0 : index
    %24 = vector.load %arg15[%c1_30, %c0_31] : memref<16x32xf32, #tpu.memory_space<vmem>>, vector<14x32xf32>
    %25 = tpu.concatenate %23, %24 in 1 : vector<14x32xf32>, vector<14x32xf32> -> vector<14x64xf32>
    %c0_32 = arith.constant 0 : index
    %c0_33 = arith.constant 0 : index
    %26 = vector.load %arg4[%c0_32, %c0_33] : memref<64x32xf32, #tpu.memory_space<vmem>>, vector<64x32xf32>
    %cst_34 = arith.constant dense<0.000000e+00> : vector<14x32xf32>
    %27 = tpu.matmul %25, %26, %cst_34 {dimension_numbers = #tpu.dot_dimension_numbers<[1], [0], [0], [1], [0, 0, 1, 1], [], []>} : vector<14x64xf32>, vector<64x32xf32>, vector<14x32xf32> -> vector<14x32xf32>
    %c0_35 = arith.constant 0 : index
    %c0_36 = arith.constant 0 : index
    %28 = vector.load %arg10[%c0_35, %c0_36] : memref<1x32xf32, #tpu.memory_space<vmem>>, vector<1x32xf32>
    %29 = vector.broadcast %28 : vector<1x32xf32> to vector<14x32xf32>
    %30 = arith.addf %27, %29 : vector<14x32xf32>
    %c31 = arith.constant 31 : index
    %c0_37 = arith.constant 0 : index
    %31 = vector.load %arg16[%c31, %c0_37] : memref<69x32xf32, #tpu.memory_space<vmem>>, vector<14x32xf32>
    tpu.vector_store %arg16[%c31, %c0_37], %30 {strides = array<i32>} : memref<69x32xf32, #tpu.memory_space<vmem>>, vector<14x32xf32>,
    %c0_38 = arith.constant 0 : index
    %c0_39 = arith.constant 0 : index
    %32 = vector.load %arg15[%c0_38, %c0_39] : memref<16x32xf32, #tpu.memory_space<vmem>>, vector<14x32xf32>
    tpu.vector_store %arg15[%c0_38, %c0_39], %30 {strides = array<i32>} : memref<16x32xf32, #tpu.memory_space<vmem>>, vector<14x32xf32>,
    %c0_40 = arith.constant 0 : index
    %c0_41 = arith.constant 0 : index
    %33 = vector.load %arg15[%c0_40, %c0_41] : memref<16x32xf32, #tpu.memory_space<vmem>>, vector<13x32xf32>
    %c1_42 = arith.constant 1 : index
    %c0_43 = arith.constant 0 : index
    %34 = vector.load %arg15[%c1_42, %c0_43] : memref<16x32xf32, #tpu.memory_space<vmem>>, vector<13x32xf32>
    %35 = tpu.concatenate %33, %34 in 1 : vector<13x32xf32>, vector<13x32xf32> -> vector<13x64xf32>
    %c0_44 = arith.constant 0 : index
    %c0_45 = arith.constant 0 : index
    %36 = vector.load %arg5[%c0_44, %c0_45] : memref<64x32xf32, #tpu.memory_space<vmem>>, vector<64x32xf32>
    %cst_46 = arith.constant dense<0.000000e+00> : vector<13x32xf32>
    %37 = tpu.matmul %35, %36, %cst_46 {dimension_numbers = #tpu.dot_dimension_numbers<[1], [0], [0], [1], [0, 0, 1, 1], [], []>} : vector<13x64xf32>, vector<64x32xf32>, vector<13x32xf32> -> vector<13x32xf32>
    %c0_47 = arith.constant 0 : index
    %c0_48 = arith.constant 0 : index
    %38 = vector.load %arg11[%c0_47, %c0_48] : memref<1x32xf32, #tpu.memory_space<vmem>>, vector<1x32xf32>
    %39 = vector.broadcast %38 : vector<1x32xf32> to vector<13x32xf32>
    %40 = arith.addf %37, %39 : vector<13x32xf32>
    %c45 = arith.constant 45 : index
    %c0_49 = arith.constant 0 : index
    %41 = vector.load %arg16[%c45, %c0_49] : memref<69x32xf32, #tpu.memory_space<vmem>>, vector<13x32xf32>
    tpu.vector_store %arg16[%c45, %c0_49], %40 {strides = array<i32>} : memref<69x32xf32, #tpu.memory_space<vmem>>, vector<13x32xf32>,
    %c0_50 = arith.constant 0 : index
    %c0_51 = arith.constant 0 : index
    %42 = vector.load %arg15[%c0_50, %c0_51] : memref<16x32xf32, #tpu.memory_space<vmem>>, vector<13x32xf32>
    tpu.vector_store %arg15[%c0_50, %c0_51], %40 {strides = array<i32>} : memref<16x32xf32, #tpu.memory_space<vmem>>, vector<13x32xf32>,
    %c0_52 = arith.constant 0 : index
    %c0_53 = arith.constant 0 : index
    %43 = tpu.strided_load %arg15[%c0_52, %c0_53] {strides = array<i32: 2, 1>} : memref<16x32xf32, #tpu.memory_space<vmem>>, vector<6x32xf32>
    %c1_54 = arith.constant 1 : index
    %c0_55 = arith.constant 0 : index
    %44 = tpu.strided_load %arg15[%c1_54, %c0_55] {strides = array<i32: 2, 1>} : memref<16x32xf32, #tpu.memory_space<vmem>>, vector<6x32xf32>
    %c2 = arith.constant 2 : index
    %c0_56 = arith.constant 0 : index
    %45 = tpu.strided_load %arg15[%c2, %c0_56] {strides = array<i32: 2, 1>} : memref<16x32xf32, #tpu.memory_space<vmem>>, vector<6x32xf32>
    %46 = tpu.concatenate %43, %44, %45 in 1 : vector<6x32xf32>, vector<6x32xf32>, vector<6x32xf32> -> vector<6x96xf32>
    %c0_57 = arith.constant 0 : index
    %c0_58 = arith.constant 0 : index
    %47 = vector.load %arg6[%c0_57, %c0_58] : memref<96x32xf32, #tpu.memory_space<vmem>>, vector<96x32xf32>
    %cst_59 = arith.constant dense<0.000000e+00> : vector<6x32xf32>
    %48 = tpu.matmul %46, %47, %cst_59 {dimension_numbers = #tpu.dot_dimension_numbers<[1], [0], [0], [1], [0, 0, 1, 1], [], []>} : vector<6x96xf32>, vector<96x32xf32>, vector<6x32xf32> -> vector<6x32xf32>
    %c0_60 = arith.constant 0 : index
    %c0_61 = arith.constant 0 : index
    %49 = vector.load %arg12[%c0_60, %c0_61] : memref<1x32xf32, #tpu.memory_space<vmem>>, vector<1x32xf32>
    %50 = vector.broadcast %49 : vector<1x32xf32> to vector<6x32xf32>
    %51 = arith.addf %48, %50 : vector<6x32xf32>
    %c58 = arith.constant 58 : index
    %c0_62 = arith.constant 0 : index
    %52 = vector.load %arg16[%c58, %c0_62] : memref<69x32xf32, #tpu.memory_space<vmem>>, vector<6x32xf32>
    tpu.vector_store %arg16[%c58, %c0_62], %51 {strides = array<i32>} : memref<69x32xf32, #tpu.memory_space<vmem>>, vector<6x32xf32>,
    %c0_63 = arith.constant 0 : index
    %c0_64 = arith.constant 0 : index
    %53 = vector.load %arg15[%c0_63, %c0_64] : memref<16x32xf32, #tpu.memory_space<vmem>>, vector<6x32xf32>
    tpu.vector_store %arg15[%c0_63, %c0_64], %51 {strides = array<i32>} : memref<16x32xf32, #tpu.memory_space<vmem>>, vector<6x32xf32>,
    %c0_65 = arith.constant 0 : index
    %c0_66 = arith.constant 0 : index
    %54 = vector.load %arg15[%c0_65, %c0_66] : memref<16x32xf32, #tpu.memory_space<vmem>>, vector<5x32xf32>
    %c1_67 = arith.constant 1 : index
    %c0_68 = arith.constant 0 : index
    %55 = vector.load %arg15[%c1_67, %c0_68] : memref<16x32xf32, #tpu.memory_space<vmem>>, vector<5x32xf32>
    %56 = tpu.concatenate %54, %55 in 1 : vector<5x32xf32>, vector<5x32xf32> -> vector<5x64xf32>
    %c0_69 = arith.constant 0 : index
    %c0_70 = arith.constant 0 : index
    %57 = vector.load %arg7[%c0_69, %c0_70] : memref<64x32xf32, #tpu.memory_space<vmem>>, vector<64x32xf32>
    %cst_71 = arith.constant dense<0.000000e+00> : vector<5x32xf32>
    %58 = tpu.matmul %56, %57, %cst_71 {dimension_numbers = #tpu.dot_dimension_numbers<[1], [0], [0], [1], [0, 0, 1, 1], [], []>} : vector<5x64xf32>, vector<64x32xf32>, vector<5x32xf32> -> vector<5x32xf32>
    %c0_72 = arith.constant 0 : index
    %c0_73 = arith.constant 0 : index
    %59 = vector.load %arg13[%c0_72, %c0_73] : memref<1x32xf32, #tpu.memory_space<vmem>>, vector<1x32xf32>
    %60 = vector.broadcast %59 : vector<1x32xf32> to vector<5x32xf32>
    %61 = arith.addf %58, %60 : vector<5x32xf32>
    %c64 = arith.constant 64 : index
    %c0_74 = arith.constant 0 : index
    %62 = vector.load %arg16[%c64, %c0_74] : memref<69x32xf32, #tpu.memory_space<vmem>>, vector<5x32xf32>
    tpu.vector_store %arg16[%c64, %c0_74], %61 {strides = array<i32>} : memref<69x32xf32, #tpu.memory_space<vmem>>, vector<5x32xf32>,
    %63 = tpu.iota {dimensions = array<i32: 0>} : vector<69x256xi32>
    %64 = tpu.iota {dimensions = array<i32: 1>} : vector<69x256xi32>
    %cst_75 = arith.constant 0.000000e+00 : f32
    %65 = vector.broadcast %cst_75 : f32 to vector<69x256xf32>
    %c0_i32 = arith.constant 0 : i32
    %66 = vector.broadcast %c0_i32 : i32 to vector<69x256xi32>
    %67 = arith.subi %63, %66 : vector<69x256xi32>
    %c17_i32 = arith.constant 17 : i32
    %68 = vector.broadcast %c17_i32 : i32 to vector<69x256xi32>
    %69 = arith.muli %67, %68 : vector<69x256xi32>
    %c0_i32_76 = arith.constant 0 : i32
    %70 = vector.broadcast %c0_i32_76 : i32 to vector<69x256xi32>
    %71 = arith.addi %69, %70 : vector<69x256xi32>
    %c0_i32_77 = arith.constant 0 : i32
    %72 = vector.broadcast %c0_i32_77 : i32 to vector<69x256xi32>
    %73 = arith.cmpi sge, %63, %72 : vector<69x256xi32>
    %c16_i32 = arith.constant 16 : i32
    %74 = vector.broadcast %c16_i32 : i32 to vector<69x256xi32>
    %75 = arith.cmpi slt, %63, %74 : vector<69x256xi32>
    %76 = arith.andi %73, %75 : vector<69x256xi1>
    %77 = arith.cmpi eq, %64, %71 : vector<69x256xi32>
    %78 = arith.andi %76, %77 : vector<69x256xi1>
    %cst_78 = arith.constant 1.000000e+00 : f32
    %79 = vector.broadcast %cst_78 : f32 to vector<69x256xf32>
    %80 = arith.select %78, %79, %65 : vector<69x256xi1>, vector<69x256xf32>
    %c16_i32_79 = arith.constant 16 : i32
    %81 = vector.broadcast %c16_i32_79 : i32 to vector<69x256xi32>
    %82 = arith.subi %63, %81 : vector<69x256xi32>
    %c17_i32_80 = arith.constant 17 : i32
    %83 = vector.broadcast %c17_i32_80 : i32 to vector<69x256xi32>
    %84 = arith.muli %82, %83 : vector<69x256xi32>
    %c1_i32 = arith.constant 1 : i32
    %85 = vector.broadcast %c1_i32 : i32 to vector<69x256xi32>
    %86 = arith.addi %84, %85 : vector<69x256xi32>
    %c16_i32_81 = arith.constant 16 : i32
    %87 = vector.broadcast %c16_i32_81 : i32 to vector<69x256xi32>
    %88 = arith.cmpi sge, %63, %87 : vector<69x256xi32>
    %c31_i32 = arith.constant 31 : i32
    %89 = vector.broadcast %c31_i32 : i32 to vector<69x256xi32>
    %90 = arith.cmpi slt, %63, %89 : vector<69x256xi32>
    %91 = arith.andi %88, %90 : vector<69x256xi1>
    %92 = arith.cmpi eq, %64, %86 : vector<69x256xi32>
    %93 = arith.andi %91, %92 : vector<69x256xi1>
    %cst_82 = arith.constant 1.000000e+00 : f32
    %94 = vector.broadcast %cst_82 : f32 to vector<69x256xf32>
    %95 = arith.select %93, %94, %80 : vector<69x256xi1>, vector<69x256xf32>
    %c31_i32_83 = arith.constant 31 : i32
    %96 = vector.broadcast %c31_i32_83 : i32 to vector<69x256xi32>
    %97 = arith.subi %63, %96 : vector<69x256xi32>
    %c17_i32_84 = arith.constant 17 : i32
    %98 = vector.broadcast %c17_i32_84 : i32 to vector<69x256xi32>
    %99 = arith.muli %97, %98 : vector<69x256xi32>
    %c2_i32 = arith.constant 2 : i32
    %100 = vector.broadcast %c2_i32 : i32 to vector<69x256xi32>
    %101 = arith.addi %99, %100 : vector<69x256xi32>
    %c31_i32_85 = arith.constant 31 : i32
    %102 = vector.broadcast %c31_i32_85 : i32 to vector<69x256xi32>
    %103 = arith.cmpi sge, %63, %102 : vector<69x256xi32>
    %c45_i32 = arith.constant 45 : i32
    %104 = vector.broadcast %c45_i32 : i32 to vector<69x256xi32>
    %105 = arith.cmpi slt, %63, %104 : vector<69x256xi32>
    %106 = arith.andi %103, %105 : vector<69x256xi1>
    %107 = arith.cmpi eq, %64, %101 : vector<69x256xi32>
    %108 = arith.andi %106, %107 : vector<69x256xi1>
    %cst_86 = arith.constant 1.000000e+00 : f32
    %109 = vector.broadcast %cst_86 : f32 to vector<69x256xf32>
    %110 = arith.select %108, %109, %95 : vector<69x256xi1>, vector<69x256xf32>
    %c45_i32_87 = arith.constant 45 : i32
    %111 = vector.broadcast %c45_i32_87 : i32 to vector<69x256xi32>
    %112 = arith.subi %63, %111 : vector<69x256xi32>
    %c17_i32_88 = arith.constant 17 : i32
    %113 = vector.broadcast %c17_i32_88 : i32 to vector<69x256xi32>
    %114 = arith.muli %112, %113 : vector<69x256xi32>
    %c3_i32 = arith.constant 3 : i32
    %115 = vector.broadcast %c3_i32 : i32 to vector<69x256xi32>
    %116 = arith.addi %114, %115 : vector<69x256xi32>
    %c45_i32_89 = arith.constant 45 : i32
    %117 = vector.broadcast %c45_i32_89 : i32 to vector<69x256xi32>
    %118 = arith.cmpi sge, %63, %117 : vector<69x256xi32>
    %c58_i32 = arith.constant 58 : i32
    %119 = vector.broadcast %c58_i32 : i32 to vector<69x256xi32>
    %120 = arith.cmpi slt, %63, %119 : vector<69x256xi32>
    %121 = arith.andi %118, %120 : vector<69x256xi1>
    %122 = arith.cmpi eq, %64, %116 : vector<69x256xi32>
    %123 = arith.andi %121, %122 : vector<69x256xi1>
    %cst_90 = arith.constant 1.000000e+00 : f32
    %124 = vector.broadcast %cst_90 : f32 to vector<69x256xf32>
    %125 = arith.select %123, %124, %110 : vector<69x256xi1>, vector<69x256xf32>
    %c58_i32_91 = arith.constant 58 : i32
    %126 = vector.broadcast %c58_i32_91 : i32 to vector<69x256xi32>
    %127 = arith.subi %63, %126 : vector<69x256xi32>
    %c34_i32 = arith.constant 34 : i32
    %128 = vector.broadcast %c34_i32 : i32 to vector<69x256xi32>
    %129 = arith.muli %127, %128 : vector<69x256xi32>
    %c5_i32 = arith.constant 5 : i32
    %130 = vector.broadcast %c5_i32 : i32 to vector<69x256xi32>
    %131 = arith.addi %129, %130 : vector<69x256xi32>
    %c58_i32_92 = arith.constant 58 : i32
    %132 = vector.broadcast %c58_i32_92 : i32 to vector<69x256xi32>
    %133 = arith.cmpi sge, %63, %132 : vector<69x256xi32>
    %c64_i32 = arith.constant 64 : i32
    %134 = vector.broadcast %c64_i32 : i32 to vector<69x256xi32>
    %135 = arith.cmpi slt, %63, %134 : vector<69x256xi32>
    %136 = arith.andi %133, %135 : vector<69x256xi1>
    %137 = arith.cmpi eq, %64, %131 : vector<69x256xi32>
    %138 = arith.andi %136, %137 : vector<69x256xi1>
    %cst_93 = arith.constant 1.000000e+00 : f32
    %139 = vector.broadcast %cst_93 : f32 to vector<69x256xf32>
    %140 = arith.select %138, %139, %125 : vector<69x256xi1>, vector<69x256xf32>
    %c64_i32_94 = arith.constant 64 : i32
    %141 = vector.broadcast %c64_i32_94 : i32 to vector<69x256xi32>
    %142 = arith.subi %63, %141 : vector<69x256xi32>
    %c34_i32_95 = arith.constant 34 : i32
    %143 = vector.broadcast %c34_i32_95 : i32 to vector<69x256xi32>
    %144 = arith.muli %142, %143 : vector<69x256xi32>
    %c7_i32 = arith.constant 7 : i32
    %145 = vector.broadcast %c7_i32 : i32 to vector<69x256xi32>
    %146 = arith.addi %144, %145 : vector<69x256xi32>
    %c64_i32_96 = arith.constant 64 : i32
    %147 = vector.broadcast %c64_i32_96 : i32 to vector<69x256xi32>
    %148 = arith.cmpi sge, %63, %147 : vector<69x256xi32>
    %c69_i32 = arith.constant 69 : i32
    %149 = vector.broadcast %c69_i32 : i32 to vector<69x256xi32>
    %150 = arith.cmpi slt, %63, %149 : vector<69x256xi32>
    %151 = arith.andi %148, %150 : vector<69x256xi1>
    %152 = arith.cmpi eq, %64, %146 : vector<69x256xi32>
    %153 = arith.andi %151, %152 : vector<69x256xi1>
    %cst_97 = arith.constant 1.000000e+00 : f32
    %154 = vector.broadcast %cst_97 : f32 to vector<69x256xf32>
    %155 = arith.select %153, %154, %140 : vector<69x256xi1>, vector<69x256xf32>
    %c0_98 = arith.constant 0 : index
    %c0_99 = arith.constant 0 : index
    %156 = vector.load %arg16[%c0_98, %c0_99] : memref<69x32xf32, #tpu.memory_space<vmem>>, vector<69x32xf32>
    %157 = tpu.transpose %156, [1, 0] : vector<69x32xf32> -> vector<32x69xf32>
    %cst_100 = arith.constant dense<0.000000e+00> : vector<32x256xf32>
    %158 = tpu.matmul %157, %155, %cst_100 {dimension_numbers = #tpu.dot_dimension_numbers<[1], [0], [0], [1], [0, 0, 1, 1], [], []>} : vector<32x69xf32>, vector<69x256xf32>, vector<32x256xf32> -> vector<32x256xf32>
    %c0_101 = arith.constant 0 : index
    %c0_102 = arith.constant 0 : index
    %c0_103 = arith.constant 0 : index
    %159 = vector.load %arg14[%c0_101, %c0_102, %c0_103] : memref<1x32x256xf32, #tpu.memory_space<vmem>>, vector<1x32x256xf32>
    %160 = vector.shape_cast %159 : vector<1x32x256xf32> to vector<32x256xf32>
    %161 = vector.shape_cast %158 : vector<32x256xf32> to vector<1x32x256xf32>
    tpu.vector_store %arg14[%c0_101, %c0_102, %c0_103], %161 {strides = array<i32>} : memref<1x32x256xf32, #tpu.memory_space<vmem>>, vector<1x32x256xf32>,
    return
  }
  func.func @transform_0(%arg0: i32) -> (i32, i32, i32) {
    %c0_i32 = arith.constant 0 : i32
    %c0_i32_0 = arith.constant 0 : i32
    %c0_i32_1 = arith.constant 0 : i32
    return %arg0, %c0_i32, %c0_i32_0 : i32, i32, i32
  }
  func.func @transform_1(%arg0: i32) -> (i32, i32) {
    %c0_i32 = arith.constant 0 : i32
    %c0_i32_0 = arith.constant 0 : i32
    %c0_i32_1 = arith.constant 0 : i32
    return %c0_i32, %c0_i32_0 : i32, i32
  }
  func.func @transform_2(%arg0: i32) -> (i32, i32) {
    %c0_i32 = arith.constant 0 : i32
    %c0_i32_0 = arith.constant 0 : i32
    %c0_i32_1 = arith.constant 0 : i32
    return %c0_i32, %c0_i32_0 : i32, i32
  }
  func.func @transform_3(%arg0: i32) -> (i32, i32) {
    %c0_i32 = arith.constant 0 : i32
    %c0_i32_0 = arith.constant 0 : i32
    %c0_i32_1 = arith.constant 0 : i32
    return %c0_i32, %c0_i32_0 : i32, i32
  }
  func.func @transform_4(%arg0: i32) -> (i32, i32) {
    %c0_i32 = arith.constant 0 : i32
    %c0_i32_0 = arith.constant 0 : i32
    %c0_i32_1 = arith.constant 0 : i32
    return %c0_i32, %c0_i32_0 : i32, i32
  }
  func.func @transform_5(%arg0: i32) -> (i32, i32) {
    %c0_i32 = arith.constant 0 : i32
    %c0_i32_0 = arith.constant 0 : i32
    %c0_i32_1 = arith.constant 0 : i32
    return %c0_i32, %c0_i32_0 : i32, i32
  }
  func.func @transform_6(%arg0: i32) -> (i32, i32) {
    %c0_i32 = arith.constant 0 : i32
    %c0_i32_0 = arith.constant 0 : i32
    %c0_i32_1 = arith.constant 0 : i32
    return %c0_i32, %c0_i32_0 : i32, i32
  }
  func.func @transform_7(%arg0: i32) -> (i32, i32) {
    %c0_i32 = arith.constant 0 : i32
    %c0_i32_0 = arith.constant 0 : i32
    %c0_i32_1 = arith.constant 0 : i32
    return %c0_i32, %c0_i32_0 : i32, i32
  }
  func.func @transform_8(%arg0: i32) -> (i32, i32) {
    %c0_i32 = arith.constant 0 : i32
    %c0_i32_0 = arith.constant 0 : i32
    %c0_i32_1 = arith.constant 0 : i32
    return %c0_i32, %c0_i32_0 : i32, i32
  }
  func.func @transform_9(%arg0: i32) -> (i32, i32) {
    %c0_i32 = arith.constant 0 : i32
    %c0_i32_0 = arith.constant 0 : i32
    %c0_i32_1 = arith.constant 0 : i32
    return %c0_i32, %c0_i32_0 : i32, i32
  }
  func.func @transform_10(%arg0: i32) -> (i32, i32) {
    %c0_i32 = arith.constant 0 : i32
    %c0_i32_0 = arith.constant 0 : i32
    %c0_i32_1 = arith.constant 0 : i32
    return %c0_i32, %c0_i32_0 : i32, i32
  }
  func.func @transform_11(%arg0: i32) -> (i32, i32) {
    %c0_i32 = arith.constant 0 : i32
    %c0_i32_0 = arith.constant 0 : i32
    %c0_i32_1 = arith.constant 0 : i32
    return %c0_i32, %c0_i32_0 : i32, i32
  }
  func.func @transform_12(%arg0: i32) -> (i32, i32) {
    %c0_i32 = arith.constant 0 : i32
    %c0_i32_0 = arith.constant 0 : i32
    %c0_i32_1 = arith.constant 0 : i32
    return %c0_i32, %c0_i32_0 : i32, i32
  }
  func.func @transform_13(%arg0: i32) -> (i32, i32, i32) {
    %c0_i32 = arith.constant 0 : i32
    %c0_i32_0 = arith.constant 0 : i32
    %c0_i32_1 = arith.constant 0 : i32
    return %arg0, %c0_i32, %c0_i32_0 : i32, i32, i32
  }
}

</mosaic_0001>

<llo_original>
// kernel: tpu_custom_call.1
$region0: #{tpu_custom_call.1}
  #allocation0 [shape = 'u32[]', space=smem, size = 0x4, offset = 0x4, fixed_abs, tag = 'smem constant byte address 0x4 - core index']
  #allocation1 [shape = 'u32[72,128]{1,0:T(1,128)}', space=vmem, size = 0x9000, scoped, tag = 'internal scratch']
  #allocation2 [shape = 'f32[16,32]{1,0:T(8,128)}', space=vmem, size = 0x2000, scoped, tag = 'scratch operand']
  #allocation3 [shape = 'f32[69,32]{1,0:T(8,128)}', space=vmem, size = 0x9000, scoped, tag = 'scratch operand']
  %s0 = inlined_call_operand.vmem [shape: f32[2,16,32], index: 0, kind: input, shape index: {}]
  %s1 = inlined_call_operand.vmem [shape: f32[32,32], index: 1, kind: input, shape index: {}]
  %s2 = inlined_call_operand.vmem [shape: f32[64,32], index: 2, kind: input, shape index: {}]
  %s3 = inlined_call_operand.vmem [shape: f32[64,32], index: 3, kind: input, shape index: {}]
  %s4 = inlined_call_operand.vmem [shape: f32[64,32], index: 4, kind: input, shape index: {}]
  %s5 = inlined_call_operand.vmem [shape: f32[96,32], index: 5, kind: input, shape index: {}]
  %s6 = inlined_call_operand.vmem [shape: f32[64,32], index: 6, kind: input, shape index: {}]
  %s7 = inlined_call_operand.vmem [shape: f32[1,32], index: 7, kind: input, shape index: {}]
  %s8 = inlined_call_operand.vmem [shape: f32[1,32], index: 8, kind: input, shape index: {}]
  %s9 = inlined_call_operand.vmem [shape: f32[1,32], index: 9, kind: input, shape index: {}]
  %s10 = inlined_call_operand.vmem [shape: f32[1,32], index: 10, kind: input, shape index: {}]
  %s11 = inlined_call_operand.vmem [shape: f32[1,32], index: 11, kind: input, shape index: {}]
  %s12 = inlined_call_operand.vmem [shape: f32[1,32], index: 12, kind: input, shape index: {}]
  %s13 = inlined_call_operand.hbm [shape: f32[2,32,256], index: 13, kind: output, shape index: {}]
  %s14 = sld [smem:[#allocation0]]
  $region85: #{tpu_custom_call.1} parent=0
    _
  %s16 = ssub.s32 1, %s14
  %s17 = scalar_select 0, %s16, %s14
  $region1: #{tpu_custom_call.1} parent=0
    #allocation4 [shape = 'u8[65536]{0}', space=vmem, size = 0x10000, scoped, tag = 'output window, operand 0']
    #allocation5 [shape = 's32[2]{0}', space=sflag, size = 0x8, scoped, tag = 'scoped memory for tpu_custom_call.1']
    %18 = vsyncpa [#allocation5], 0
    %s19 = scalar_lea.sflag [#allocation5], 1
    %20 = vsyncpa %s19, 0
    loop: start=0, step=1, limit=4
    $region2: #{tpu_custom_call.1} parent=1 // loop_pre_header
      _
    $region3: #{tpu_custom_call.1} parent=1 // loop_header
      %s22 = sphi 0, %s26
      %p23 = scmp.ge.s32.totalorder %s22, 4
      %s32 = sphi 0, %s34
      %s35 = sphi 0, %s32
      %s36 = sphi 0, %s35
      %s52 = sphi 0, %s36
      %s56 = sphi 0, %s56
      %s58 = sphi 0, %s56
      %s59 = sphi 0, %s58
      %s73 = sphi 0, %s59
      %s77 = sphi 0, %s77
      %s79 = sphi 0, %s77
      %s80 = sphi 0, %s79
      %s94 = sphi 0, %s80
      %s98 = sphi 0, %s98
      %s100 = sphi 0, %s98
      %s101 = sphi 0, %s100
      %s115 = sphi 0, %s101
      %s119 = sphi 0, %s119
      %s121 = sphi 0, %s119
      %s122 = sphi 0, %s121
      %s136 = sphi 0, %s122
      %s140 = sphi 0, %s140
      %s142 = sphi 0, %s140
      %s143 = sphi 0, %s142
      %s157 = sphi 0, %s143
      %s161 = sphi 0, %s161
      %s163 = sphi 0, %s161
      %s164 = sphi 0, %s163
      %s178 = sphi 0, %s164
      %s182 = sphi 0, %s182
      %s184 = sphi 0, %s182
      %s185 = sphi 0, %s184
      %s199 = sphi 0, %s185
      %s203 = sphi 0, %s203
      %s205 = sphi 0, %s203
      %s206 = sphi 0, %s205
      %s220 = sphi 0, %s206
      %s224 = sphi 0, %s224
      %s226 = sphi 0, %s224
      %s227 = sphi 0, %s226
      %s241 = sphi 0, %s227
      %s245 = sphi 0, %s245
      %s247 = sphi 0, %s245
      %s248 = sphi 0, %s247
      %s262 = sphi 0, %s248
      %s266 = sphi 0, %s266
      %s268 = sphi 0, %s266
      %s269 = sphi 0, %s268
      %s283 = sphi 0, %s269
      %s287 = sphi 0, %s287
      %s289 = sphi 0, %s287
      %s290 = sphi 0, %s289
      %s304 = sphi 0, %s290
      %s310 = sphi 0, %s312
      %s313 = sphi 0, %s310
      %s314 = sphi 0, %s313
      %s330 = sphi 0, %s314
    $region4: #{tpu_custom_call.1} parent=1 // loop_header_branch
      %25 = sbr.rel (%p23) target = $region8
    $region5: #{tpu_custom_call.1} parent=1 // loop_body
      %s27 = ssub.s32 %s22, 1
      %s28 = ssub.s32 %s22, 2
      %s29 = sadd.s32 %s22, 1
      %s30 = ssub.s32 %s22, %s29
      %p31 = scmp.eq.s32.totalorder %s30, 0
      %s33 = sadd.s32 %s32, 1
      %s34 = scalar_select %p31, %s32, %s33
      %p37 = pneg %p31
      %p38 = scmp.eq.s32.totalorder %s22, 1
      %p39 = por %p37, %p38
      %p40 = scmp.ne.s32.totalorder %s32, %s35
      %p41 = scmp.eq.s32.totalorder %s22, 0
      %p42 = por %p40, %p41
      %p43 = scmp.ne.s32.totalorder %s32, %s35
      %p44 = scmp.eq.s32.totalorder %s27, 1
      %p45 = por %p43, %p44
      %p46 = scmp.ne.s32.totalorder %s35, %s36
      %p47 = scmp.eq.s32.totalorder %s27, 0
      %p48 = por %p46, %p47
      %p49 = scmp.ne.s32.totalorder %s35, %s36
      %p50 = scmp.eq.s32.totalorder %s28, 1
      %p51 = por %p49, %p50
      %p53 = scmp.ne.s32.totalorder %s36, %s52
      %p54 = scmp.eq.s32.totalorder %s28, 0
      %p55 = por %p53, %p54
      %s57 = sadd.s32 %s56, 1
      %p60 = scmp.eq.s32.totalorder %s22, 1
      %p61 = scmp.ne.s32.totalorder %s56, %s58
      %p62 = scmp.eq.s32.totalorder %s22, 0
      %p63 = por %p61, %p62
      %p64 = scmp.ne.s32.totalorder %s56, %s58
      %p65 = scmp.eq.s32.totalorder %s27, 1
      %p66 = por %p64, %p65
      %p67 = scmp.ne.s32.totalorder %s58, %s59
      %p68 = scmp.eq.s32.totalorder %s27, 0
      %p69 = por %p67, %p68
      %p70 = scmp.ne.s32.totalorder %s58, %s59
      %p71 = scmp.eq.s32.totalorder %s28, 1
      %p72 = por %p70, %p71
      %p74 = scmp.ne.s32.totalorder %s59, %s73
      %p75 = scmp.eq.s32.totalorder %s28, 0
      %p76 = por %p74, %p75
      %s78 = sadd.s32 %s77, 1
      %p81 = scmp.eq.s32.totalorder %s22, 1
      %p82 = scmp.ne.s32.totalorder %s77, %s79
      %p83 = scmp.eq.s32.totalorder %s22, 0
      %p84 = por %p82, %p83
      %p85 = scmp.ne.s32.totalorder %s77, %s79
      %p86 = scmp.eq.s32.totalorder %s27, 1
      %p87 = por %p85, %p86
      %p88 = scmp.ne.s32.totalorder %s79, %s80
      %p89 = scmp.eq.s32.totalorder %s27, 0
      %p90 = por %p88, %p89
      %p91 = scmp.ne.s32.totalorder %s79, %s80
      %p92 = scmp.eq.s32.totalorder %s28, 1
      %p93 = por %p91, %p92
      %p95 = scmp.ne.s32.totalorder %s80, %s94
      %p96 = scmp.eq.s32.totalorder %s28, 0
      %p97 = por %p95, %p96
      %s99 = sadd.s32 %s98, 1
      %p102 = scmp.eq.s32.totalorder %s22, 1
      %p103 = scmp.ne.s32.totalorder %s98, %s100
      %p104 = scmp.eq.s32.totalorder %s22, 0
      %p105 = por %p103, %p104
      %p106 = scmp.ne.s32.totalorder %s98, %s100
      %p107 = scmp.eq.s32.totalorder %s27, 1
      %p108 = por %p106, %p107
      %p109 = scmp.ne.s32.totalorder %s100, %s101
      %p110 = scmp.eq.s32.totalorder %s27, 0
      %p111 = por %p109, %p110
      %p112 = scmp.ne.s32.totalorder %s100, %s101
      %p113 = scmp.eq.s32.totalorder %s28, 1
      %p114 = por %p112, %p113
      %p116 = scmp.ne.s32.totalorder %s101, %s115
      %p117 = scmp.eq.s32.totalorder %s28, 0
      %p118 = por %p116, %p117
      %s120 = sadd.s32 %s119, 1
      %p123 = scmp.eq.s32.totalorder %s22, 1
      %p124 = scmp.ne.s32.totalorder %s119, %s121
      %p125 = scmp.eq.s32.totalorder %s22, 0
      %p126 = por %p124, %p125
      %p127 = scmp.ne.s32.totalorder %s119, %s121
      %p128 = scmp.eq.s32.totalorder %s27, 1
      %p129 = por %p127, %p128
      %p130 = scmp.ne.s32.totalorder %s121, %s122
      %p131 = scmp.eq.s32.totalorder %s27, 0
      %p132 = por %p130, %p131
      %p133 = scmp.ne.s32.totalorder %s121, %s122
      %p134 = scmp.eq.s32.totalorder %s28, 1
      %p135 = por %p133, %p134
      %p137 = scmp.ne.s32.totalorder %s122, %s136
      %p138 = scmp.eq.s32.totalorder %s28, 0
      %p139 = por %p137, %p138
      %s141 = sadd.s32 %s140, 1
      %p144 = scmp.eq.s32.totalorder %s22, 1
      %p145 = scmp.ne.s32.totalorder %s140, %s142
      %p146 = scmp.eq.s32.totalorder %s22, 0
      %p147 = por %p145, %p146
      %p148 = scmp.ne.s32.totalorder %s140, %s142
      %p149 = scmp.eq.s32.totalorder %s27, 1
      %p150 = por %p148, %p149
      %p151 = scmp.ne.s32.totalorder %s142, %s143
      %p152 = scmp.eq.s32.totalorder %s27, 0
      %p153 = por %p151, %p152
      %p154 = scmp.ne.s32.totalorder %s142, %s143
      %p155 = scmp.eq.s32.totalorder %s28, 1
      %p156 = por %p154, %p155
      %p158 = scmp.ne.s32.totalorder %s143, %s157
      %p159 = scmp.eq.s32.totalorder %s28, 0
      %p160 = por %p158, %p159
      %s162 = sadd.s32 %s161, 1
      %p165 = scmp.eq.s32.totalorder %s22, 1
      %p166 = scmp.ne.s32.totalorder %s161, %s163
      %p167 = scmp.eq.s32.totalorder %s22, 0
      %p168 = por %p166, %p167
      %p169 = scmp.ne.s32.totalorder %s161, %s163
      %p170 = scmp.eq.s32.totalorder %s27, 1
      %p171 = por %p169, %p170
      %p172 = scmp.ne.s32.totalorder %s163, %s164
      %p173 = scmp.eq.s32.totalorder %s27, 0
      %p174 = por %p172, %p173
      %p175 = scmp.ne.s32.totalorder %s163, %s164
      %p176 = scmp.eq.s32.totalorder %s28, 1
      %p177 = por %p175, %p176
      %p179 = scmp.ne.s32.totalorder %s164, %s178
      %p180 = scmp.eq.s32.totalorder %s28, 0
      %p181 = por %p179, %p180
      %s183 = sadd.s32 %s182, 1
      %p186 = scmp.eq.s32.totalorder %s22, 1
      %p187 = scmp.ne.s32.totalorder %s182, %s184
      %p188 = scmp.eq.s32.totalorder %s22, 0
      %p189 = por %p187, %p188
      %p190 = scmp.ne.s32.totalorder %s182, %s184
      %p191 = scmp.eq.s32.totalorder %s27, 1
      %p192 = por %p190, %p191
      %p193 = scmp.ne.s32.totalorder %s184, %s185
      %p194 = scmp.eq.s32.totalorder %s27, 0
      %p195 = por %p193, %p194
      %p196 = scmp.ne.s32.totalorder %s184, %s185
      %p197 = scmp.eq.s32.totalorder %s28, 1
      %p198 = por %p196, %p197
      %p200 = scmp.ne.s32.totalorder %s185, %s199
      %p201 = scmp.eq.s32.totalorder %s28, 0
      %p202 = por %p200, %p201
      %s204 = sadd.s32 %s203, 1
      %p207 = scmp.eq.s32.totalorder %s22, 1
      %p208 = scmp.ne.s32.totalorder %s203, %s205
      %p209 = scmp.eq.s32.totalorder %s22, 0
      %p210 = por %p208, %p209
      %p211 = scmp.ne.s32.totalorder %s203, %s205
      %p212 = scmp.eq.s32.totalorder %s27, 1
      %p213 = por %p211, %p212
      %p214 = scmp.ne.s32.totalorder %s205, %s206
      %p215 = scmp.eq.s32.totalorder %s27, 0
      %p216 = por %p214, %p215
      %p217 = scmp.ne.s32.totalorder %s205, %s206
      %p218 = scmp.eq.s32.totalorder %s28, 1
      %p219 = por %p217, %p218
      %p221 = scmp.ne.s32.totalorder %s206, %s220
      %p222 = scmp.eq.s32.totalorder %s28, 0
      %p223 = por %p221, %p222
      %s225 = sadd.s32 %s224, 1
      %p228 = scmp.eq.s32.totalorder %s22, 1
      %p229 = scmp.ne.s32.totalorder %s224, %s226
      %p230 = scmp.eq.s32.totalorder %s22, 0
      %p231 = por %p229, %p230
      %p232 = scmp.ne.s32.totalorder %s224, %s226
      %p233 = scmp.eq.s32.totalorder %s27, 1
      %p234 = por %p232, %p233
      %p235 = scmp.ne.s32.totalorder %s226, %s227
      %p236 = scmp.eq.s32.totalorder %s27, 0
      %p237 = por %p235, %p236
      %p238 = scmp.ne.s32.totalorder %s226, %s227
      %p239 = scmp.eq.s32.totalorder %s28, 1
      %p240 = por %p238, %p239
      %p242 = scmp.ne.s32.totalorder %s227, %s241
      %p243 = scmp.eq.s32.totalorder %s28, 0
      %p244 = por %p242, %p243
      %s246 = sadd.s32 %s245, 1
      %p249 = scmp.eq.s32.totalorder %s22, 1
      %p250 = scmp.ne.s32.totalorder %s245, %s247
      %p251 = scmp.eq.s32.totalorder %s22, 0
      %p252 = por %p250, %p251
      %p253 = scmp.ne.s32.totalorder %s245, %s247
      %p254 = scmp.eq.s32.totalorder %s27, 1
      %p255 = por %p253, %p254
      %p256 = scmp.ne.s32.totalorder %s247, %s248
      %p257 = scmp.eq.s32.totalorder %s27, 0
      %p258 = por %p256, %p257
      %p259 = scmp.ne.s32.totalorder %s247, %s248
      %p260 = scmp.eq.s32.totalorder %s28, 1
      %p261 = por %p259, %p260
      %p263 = scmp.ne.s32.totalorder %s248, %s262
      %p264 = scmp.eq.s32.totalorder %s28, 0
      %p265 = por %p263, %p264
      %s267 = sadd.s32 %s266, 1
      %p270 = scmp.eq.s32.totalorder %s22, 1
      %p271 = scmp.ne.s32.totalorder %s266, %s268
      %p272 = scmp.eq.s32.totalorder %s22, 0
      %p273 = por %p271, %p272
      %p274 = scmp.ne.s32.totalorder %s266, %s268
      %p275 = scmp.eq.s32.totalorder %s27, 1
      %p276 = por %p274, %p275
      %p277 = scmp.ne.s32.totalorder %s268, %s269
      %p278 = scmp.eq.s32.totalorder %s27, 0
      %p279 = por %p277, %p278
      %p280 = scmp.ne.s32.totalorder %s268, %s269
      %p281 = scmp.eq.s32.totalorder %s28, 1
      %p282 = por %p280, %p281
      %p284 = scmp.ne.s32.totalorder %s269, %s283
      %p285 = scmp.eq.s32.totalorder %s28, 0
      %p286 = por %p284, %p285
      %s288 = sadd.s32 %s287, 1
      %p291 = scmp.eq.s32.totalorder %s22, 1
      %p292 = scmp.ne.s32.totalorder %s287, %s289
      %p293 = scmp.eq.s32.totalorder %s22, 0
      %p294 = por %p292, %p293
      %p295 = scmp.ne.s32.totalorder %s287, %s289
      %p296 = scmp.eq.s32.totalorder %s27, 1
      %p297 = por %p295, %p296
      %p298 = scmp.ne.s32.totalorder %s289, %s290
      %p299 = scmp.eq.s32.totalorder %s27, 0
      %p300 = por %p298, %p299
      %p301 = scmp.ne.s32.totalorder %s289, %s290
      %p302 = scmp.eq.s32.totalorder %s28, 1
      %p303 = por %p301, %p302
      %p305 = scmp.ne.s32.totalorder %s290, %s304
      %p306 = scmp.eq.s32.totalorder %s28, 0
      %p307 = por %p305, %p306
      %s308 = ssub.s32 %s22, %s29
      %p309 = scmp.eq.s32.totalorder %s308, 0
      %s311 = sadd.s32 %s310, 1
      %s312 = scalar_select %p309, %s310, %s311
      %p315 = pneg %p309
      %p316 = scmp.eq.s32.totalorder %s22, 1
      %p317 = por %p315, %p316
      %p318 = scmp.ne.s32.totalorder %s310, %s313
      %p319 = scmp.eq.s32.totalorder %s22, 0
      %p320 = por %p318, %p319
      %p321 = scmp.ne.s32.totalorder %s310, %s313
      %p322 = scmp.eq.s32.totalorder %s27, 1
      %p323 = por %p321, %p322
      %p324 = scmp.ne.s32.totalorder %s313, %s314
      %p325 = scmp.eq.s32.totalorder %s27, 0
      %p326 = por %p324, %p325
      %p327 = scmp.ne.s32.totalorder %s313, %s314
      %p328 = scmp.eq.s32.totalorder %s28, 1
      %p329 = por %p327, %p328
      %p331 = scmp.ne.s32.totalorder %s314, %s330
      %p332 = scmp.eq.s32.totalorder %s28, 0
      %p333 = por %p331, %p332
      %p334 = scmp.le.s32.totalorder 1, %s22
      %p335 = scmp.lt.s32.totalorder %s22, 3
      %p336 = pnand %p334, %p335
      %p337 = pneg %p336
      // Predicated region
      $region9: #{tpu_custom_call.1} parent=5 // pred_check
        _
      $region10: #{tpu_custom_call.1} parent=5 // pred_check_branch
        %339 = sbr.rel (%p336) target = $region12
      $region11: #{tpu_custom_call.1} parent=5 // pred_region
        %s340 = ssub.s32 %s22, 1
        // Predicated region
        $region13: #{tpu_custom_call.1} parent=11 // pred_check
          %p341 = pneg %p69
        $region14: #{tpu_custom_call.1} parent=11 // pred_check_branch
          %343 = sbr.rel (%p341) target = $region16
        $region15: #{tpu_custom_call.1} parent=11 // pred_region
          _
        $region16: #{tpu_custom_call.1} parent=11 // pred_fallthru
          _
        // Predicated region
        $region17: #{tpu_custom_call.1} parent=11 // pred_check
          %p344 = pneg %p90
        $region18: #{tpu_custom_call.1} parent=11 // pred_check_branch
          %346 = sbr.rel (%p344) target = $region20
        $region19: #{tpu_custom_call.1} parent=11 // pred_region
          _
        $region20: #{tpu_custom_call.1} parent=11 // pred_fallthru
          _
        // Predicated region
        $region21: #{tpu_custom_call.1} parent=11 // pred_check
          %p347 = pneg %p111
        $region22: #{tpu_custom_call.1} parent=11 // pred_check_branch
          %349 = sbr.rel (%p347) target = $region24
        $region23: #{tpu_custom_call.1} parent=11 // pred_region
          _
        $region24: #{tpu_custom_call.1} parent=11 // pred_fallthru
          _
        // Predicated region
        $region25: #{tpu_custom_call.1} parent=11 // pred_check
          %p350 = pneg %p132
        $region26: #{tpu_custom_call.1} parent=11 // pred_check_branch
          %352 = sbr.rel (%p350) target = $region28
        $region27: #{tpu_custom_call.1} parent=11 // pred_region
          _
        $region28: #{tpu_custom_call.1} parent=11 // pred_fallthru
          _
        // Predicated region
        $region29: #{tpu_custom_call.1} parent=11 // pred_check
          %p353 = pneg %p153
        $region30: #{tpu_custom_call.1} parent=11 // pred_check_branch
          %355 = sbr.rel (%p353) target = $region32
        $region31: #{tpu_custom_call.1} parent=11 // pred_region
          _
        $region32: #{tpu_custom_call.1} parent=11 // pred_fallthru
          _
        // Predicated region
        $region33: #{tpu_custom_call.1} parent=11 // pred_check
          %p356 = pneg %p174
        $region34: #{tpu_custom_call.1} parent=11 // pred_check_branch
          %358 = sbr.rel (%p356) target = $region36
        $region35: #{tpu_custom_call.1} parent=11 // pred_region
          _
        $region36: #{tpu_custom_call.1} parent=11 // pred_fallthru
          _
        // Predicated region
        $region37: #{tpu_custom_call.1} parent=11 // pred_check
          %p359 = pneg %p195
        $region38: #{tpu_custom_call.1} parent=11 // pred_check_branch
          %361 = sbr.rel (%p359) target = $region40
        $region39: #{tpu_custom_call.1} parent=11 // pred_region
          _
        $region40: #{tpu_custom_call.1} parent=11 // pred_fallthru
          _
        // Predicated region
        $region41: #{tpu_custom_call.1} parent=11 // pred_check
          %p362 = pneg %p216
        $region42: #{tpu_custom_call.1} parent=11 // pred_check_branch
          %364 = sbr.rel (%p362) target = $region44
        $region43: #{tpu_custom_call.1} parent=11 // pred_region
          _
        $region44: #{tpu_custom_call.1} parent=11 // pred_fallthru
          _
        // Predicated region
        $region45: #{tpu_custom_call.1} parent=11 // pred_check
          %p365 = pneg %p237
        $region46: #{tpu_custom_call.1} parent=11 // pred_check_branch
          %367 = sbr.rel (%p365) target = $region48
        $region47: #{tpu_custom_call.1} parent=11 // pred_region
          _
        $region48: #{tpu_custom_call.1} parent=11 // pred_fallthru
          _
        // Predicated region
        $region49: #{tpu_custom_call.1} parent=11 // pred_check
          %p368 = pneg %p258
        $region50: #{tpu_custom_call.1} parent=11 // pred_check_branch
          %370 = sbr.rel (%p368) target = $region52
        $region51: #{tpu_custom_call.1} parent=11 // pred_region
          _
        $region52: #{tpu_custom_call.1} parent=11 // pred_fallthru
          _
        // Predicated region
        $region53: #{tpu_custom_call.1} parent=11 // pred_check
          %p371 = pneg %p279
        $region54: #{tpu_custom_call.1} parent=11 // pred_check_branch
          %373 = sbr.rel (%p371) target = $region56
        $region55: #{tpu_custom_call.1} parent=11 // pred_region
          _
        $region56: #{tpu_custom_call.1} parent=11 // pred_fallthru
          _
        // Predicated region
        $region57: #{tpu_custom_call.1} parent=11 // pred_check
          %p374 = pneg %p300
        $region58: #{tpu_custom_call.1} parent=11 // pred_check_branch
          %376 = sbr.rel (%p374) target = $region60
        $region59: #{tpu_custom_call.1} parent=11 // pred_region
          _
        $region60: #{tpu_custom_call.1} parent=11 // pred_fallthru
          _
      $region12: #{tpu_custom_call.1} parent=5 // pred_fallthru
        _
      %p377 = scmp.lt.s32.totalorder %s22, 2
      // Predicated region
      $region61: #{tpu_custom_call.1} parent=5 // pred_check
        %p378 = pneg %p377
      $region62: #{tpu_custom_call.1} parent=5 // pred_check_branch
        %380 = sbr.rel (%p378) target = $region64
      $region63: #{tpu_custom_call.1} parent=5 // pred_region
        // Predicated region
        $region65: #{tpu_custom_call.1} parent=63 // pred_check
          %p381 = pneg %p42
        $region66: #{tpu_custom_call.1} parent=63 // pred_check_branch
          %383 = sbr.rel (%p381) target = $region68
        $region67: #{tpu_custom_call.1} parent=63 // pred_region
          %p384 = scmp.lt.s32.totalorder %s22, 1
          %s385 = scalar_select %p384, %s22, 1
          %s386 = smul.addr %s385, 2
          %s387 = smul.addr %s386, 8
          %s388 = scalar_lea.vmem %s0, %s387
        $region68: #{tpu_custom_call.1} parent=63 // pred_fallthru
          _
      $region64: #{tpu_custom_call.1} parent=5 // pred_fallthru
        _
      %p389 = scmp.le.s32.totalorder 1, %s22
      %p390 = scmp.lt.s32.totalorder %s22, 3
      %p391 = pnand %p389, %p390
      %p392 = pneg %p391
      // Predicated region
      $region69: #{tpu_custom_call.1} parent=5 // pred_check
        _
      $region70: #{tpu_custom_call.1} parent=5 // pred_check_branch
        %394 = sbr.rel (%p391) target = $region72
      $region71: #{tpu_custom_call.1} parent=5 // pred_region
        %s395 = ssub.s32 %s22, 1
        %p396 = scmp.lt.s32.totalorder %s27, 1
        %s397 = scalar_select %p396, %s27, 1
        %s398 = smul.addr %s397, 2
        %s399 = smul.addr %s398, 8
        %s400 = scalar_lea.vmem %s0, %s399
        %p401 = pneg %p48
        %p402 = pneg %p45
        %p403 = pneg %p69
        %p404 = pneg %p66
        %p405 = pneg %p90
        %p406 = pneg %p87
        %p407 = pneg %p111
        %p408 = pneg %p108
        %p409 = pneg %p132
        %p410 = pneg %p129
        %p411 = pneg %p153
        %p412 = pneg %p150
        %p413 = pneg %p174
        %p414 = pneg %p171
        %p415 = pneg %p195
        %p416 = pneg %p192
        %p417 = pneg %p216
        %p418 = pneg %p213
        %p419 = pneg %p237
        %p420 = pneg %p234
        %p421 = pneg %p258
        %p422 = pneg %p255
        %p423 = pneg %p279
        %p424 = pneg %p276
        %p425 = pneg %p300
        %p426 = pneg %p297
        %p427 = pneg %p326
        %p428 = pneg %p323
        %s429 = sand.u32 %s313, 1
        %s430 = scalar_lea.sflag [#allocation5], %s429
        %s431 = sand.u32 %s313, 1
        %s432 = smul.addr %s431, 64
        %s433 = scalar_lea.vmem [#allocation4], %s432
        %p434 = scmp.lt.s32.totalorder %s27, 1
        %s435 = scalar_select %p434, %s27, 1
        %s436 = smul.addr %s435, 2
        %s437 = smul.addr %s436, 8
        %s438 = scalar_lea.vmem %s0, %s437
        %v439 = vld [vmem:[%s438] sm:$0xff]
        %v440 = vld [vmem:[%s438 + $0x8] sm:$0xff]
        %vm441 = vcmask 261120
        %442 = vst.msk [vmem:[#allocation2] sm:$0xff] %vm441, %v439
        %443 = vst.msk [vmem:[#allocation2 + $0x8] sm:$0xff] %vm441, %v440
        %444 = vst.msk [vmem:[#allocation3] sm:$0xff] %vm441, 0.0
        %445 = vst.msk [vmem:[#allocation3 + $0x8] sm:$0xff] %vm441, 0.0
        %446 = vst.msk [vmem:[#allocation3 + $0x10] sm:$0xff] %vm441, 0.0
        %447 = vst.msk [vmem:[#allocation3 + $0x18] sm:$0xff] %vm441, 0.0
        %448 = vst.msk [vmem:[#allocation3 + $0x20] sm:$0xff] %vm441, 0.0
        %449 = vst.msk [vmem:[#allocation3 + $0x28] sm:$0xff] %vm441, 0.0
        %450 = vst.msk [vmem:[#allocation3 + $0x30] sm:$0xff] %vm441, 0.0
        %451 = vst.msk [vmem:[#allocation3 + $0x38] sm:$0xff] %vm441, 0.0
        %vm452 = vcmask 258048
        %453 = vst.msk [vmem:[#allocation3 + $0x40] sm:$0x1f] %vm452, 0.0
        %v454 = vld [vmem:[#allocation2] sm:$0xff]
        %v455 = vld [vmem:[#allocation2 + $0x8] sm:$0xff]
        %v456 = vld [vmem:[%s1] sm:$0xff]
        %v457 = vld [vmem:[%s1 + $0x8] sm:$0xff]
        %v458 = vld [vmem:[%s1 + $0x10] sm:$0xff]
        %v459 = vld [vmem:[%s1 + $0x18] sm:$0xff]
        %v460 = vld [vmem:[%s7] sm:$0x1]
        %v462 = vperm.slane %v460, 0
        %v465 = vsel %vm441, %v454, 0
        %v468 = vsel %vm441, %v455, 0
        %470 = vmatpush.msra.mxu0 0.0
        %471 = vmatpush.msra.mxu0 0.0
        %472 = vmatpush.msra.mxu0 0.0
        %473 = vmatpush.msra.mxu0 0.0
        %474 = vmatpush.msra.mxu0 0.0
        %475 = vmatpush.msra.mxu0 0.0
        %476 = vmatpush.msra.mxu0 0.0
        %477 = vmatpush.msra.mxu0 0.0
        %478 = vmatpush.msra.mxu0 0.0
        %479 = vmatpush.msra.mxu0 0.0
        %480 = vmatpush.msra.mxu0 0.0
        %481 = vmatpush.msra.mxu0 0.0
        %482 = vmatpush.msra.mxu0 %v459
        %483 = vmatpush.msra.mxu0 %v458
        %484 = vmatpush.msra.mxu0 %v457
        %485 = vmatpush.msra.mxu0 %v456
        %486 = vmatmul.f32.gmra.mxu0 %v465
        %v487 = vpop.f32.mrf.mxu0
        %v488 = vadd.f32 %v462, %v487
        %489 = vmatmul.f32.gmra.mxu0 %v468
        %v490 = vpop.f32.mrf.mxu0
        %v491 = vadd.f32 %v462, %v490
        %492 = vdwg.mxu0
        %493 = vst.msk [vmem:[#allocation3] sm:$0xff] %vm441, %v488
        %494 = vst.msk [vmem:[#allocation3 + $0x8] sm:$0xff] %vm441, %v491
        %495 = vst.msk [vmem:[#allocation2] sm:$0xff] %vm441, %v488
        %496 = vst.msk [vmem:[#allocation2 + $0x8] sm:$0xff] %vm441, %v491
        %v497 = vld [vmem:[#allocation2] sm:$0xff]
        %v498 = vld [vmem:[#allocation2 + $0x8] sm:$0x7f]
        %v499 = vld [vmem:[#allocation2 + $0x1] sm:$0xff]
        %v500 = vld [vmem:[#allocation2 + $0x9] sm:$0x7f]
        %503 = vrot.lane.b32.xlu0 %v499, 32
        %v504 = vpop.permute.xlu0 %503
        %505 = vrot.lane.b32.xlu0 %v500, 32
        %v506 = vpop.permute.xlu0 %505
        %v509 = vsel %vm441, %v497, %v504
        %v510 = vsel %vm441, %v498, %v506
        %v511 = vld [vmem:[%s2] sm:$0xff]
        %v512 = vld [vmem:[%s2 + $0x8] sm:$0xff]
        %v513 = vld [vmem:[%s2 + $0x10] sm:$0xff]
        %v514 = vld [vmem:[%s2 + $0x18] sm:$0xff]
        %v515 = vld [vmem:[%s2 + $0x20] sm:$0xff]
        %v516 = vld [vmem:[%s2 + $0x28] sm:$0xff]
        %v517 = vld [vmem:[%s2 + $0x30] sm:$0xff]
        %v518 = vld [vmem:[%s2 + $0x38] sm:$0xff]
        %v519 = vld [vmem:[%s8] sm:$0x1]
        %v521 = vperm.slane %v519, 0
        %vm523 = vcmask 523264
        %v525 = vsel %vm523, %v509, 0
        %v528 = vsel %vm523, %v510, 0
        %530 = vmatpush.msra.mxu0 0.0
        %531 = vmatpush.msra.mxu0 0.0
        %532 = vmatpush.msra.mxu0 0.0
        %533 = vmatpush.msra.mxu0 0.0
        %534 = vmatpush.msra.mxu0 0.0
        %535 = vmatpush.msra.mxu0 0.0
        %536 = vmatpush.msra.mxu0 0.0
        %537 = vmatpush.msra.mxu0 0.0
        %538 = vmatpush.msra.mxu0 %v518
        %539 = vmatpush.msra.mxu0 %v517
        %540 = vmatpush.msra.mxu0 %v516
        %541 = vmatpush.msra.mxu0 %v515
        %542 = vmatpush.msra.mxu0 %v514
        %543 = vmatpush.msra.mxu0 %v513
        %544 = vmatpush.msra.mxu0 %v512
        %545 = vmatpush.msra.mxu0 %v511
        %546 = vmatmul.f32.gmra.mxu0 %v525
        %v547 = vpop.f32.mrf.mxu0
        %v548 = vadd.f32 %v521, %v547
        %549 = vmatmul.f32.gmra.mxu0 %v528
        %v550 = vpop.f32.mrf.mxu0
        %v551 = vadd.f32 %v521, %v550
        %552 = vdwg.mxu0
        %553 = vst.msk [vmem:[#allocation3 + $0x10] sm:$0xff] %vm441, %v548
        %vm554 = vcmask 260096
        %555 = vst.msk [vmem:[#allocation3 + $0x18] sm:$0x7f] %vm554, %v551
        %556 = vst.msk [vmem:[#allocation2] sm:$0xff] %vm441, %v548
        %557 = vst.msk [vmem:[#allocation2 + $0x8] sm:$0x7f] %vm554, %v551
        %v558 = vld [vmem:[#allocation2] sm:$0xff]
        %v559 = vld [vmem:[#allocation2 + $0x8] sm:$0x3f]
        %v560 = vld [vmem:[#allocation2 + $0x1] sm:$0xff]
        %v561 = vld [vmem:[#allocation2 + $0x9] sm:$0x3f]
        %564 = vrot.lane.b32.xlu0 %v560, 32
        %v565 = vpop.permute.xlu0 %564
        %566 = vrot.lane.b32.xlu0 %v561, 32
        %v567 = vpop.permute.xlu0 %566
        %v570 = vsel %vm441, %v558, %v565
        %v571 = vsel %vm441, %v559, %v567
        %v572 = vld [vmem:[%s3] sm:$0xff]
        %v573 = vld [vmem:[%s3 + $0x8] sm:$0xff]
        %v574 = vld [vmem:[%s3 + $0x10] sm:$0xff]
        %v575 = vld [vmem:[%s3 + $0x18] sm:$0xff]
        %v576 = vld [vmem:[%s3 + $0x20] sm:$0xff]
        %v577 = vld [vmem:[%s3 + $0x28] sm:$0xff]
        %v578 = vld [vmem:[%s3 + $0x30] sm:$0xff]
        %v579 = vld [vmem:[%s3 + $0x38] sm:$0xff]
        %v580 = vld [vmem:[%s9] sm:$0x1]
        %v582 = vperm.slane %v580, 0
        %v585 = vsel %vm523, %v570, 0
        %v588 = vsel %vm523, %v571, 0
        %590 = vmatpush.msra.mxu0 0.0
        %591 = vmatpush.msra.mxu0 0.0
        %592 = vmatpush.msra.mxu0 0.0
        %593 = vmatpush.msra.mxu0 0.0
        %594 = vmatpush.msra.mxu0 0.0
        %595 = vmatpush.msra.mxu0 0.0
        %596 = vmatpush.msra.mxu0 0.0
        %597 = vmatpush.msra.mxu0 0.0
        %598 = vmatpush.msra.mxu0 %v579
        %599 = vmatpush.msra.mxu0 %v578
        %600 = vmatpush.msra.mxu0 %v577
        %601 = vmatpush.msra.mxu0 %v576
        %602 = vmatpush.msra.mxu0 %v575
        %603 = vmatpush.msra.mxu0 %v574
        %604 = vmatpush.msra.mxu0 %v573
        %605 = vmatpush.msra.mxu0 %v572
        %606 = vmatmul.f32.gmra.mxu0 %v585
        %v607 = vpop.f32.mrf.mxu0
        %v608 = vadd.f32 %v582, %v607
        %609 = vmatmul.f32.gmra.mxu0 %v588
        %v610 = vpop.f32.mrf.mxu0
        %v611 = vadd.f32 %v582, %v610
        %612 = vdwg.mxu0
        %613 = vst.msk [vmem:[#allocation3 + $0x1f] sm:$0xff] %vm441, %v608
        %vm614 = vcmask 259072
        %615 = vst.msk [vmem:[#allocation3 + $0x27] sm:$0x3f] %vm614, %v611
        %616 = vst.msk [vmem:[#allocation2] sm:$0xff] %vm441, %v608
        %617 = vst.msk [vmem:[#allocation2 + $0x8] sm:$0x3f] %vm614, %v611
        %v618 = vld [vmem:[#allocation2] sm:$0xff]
        %v619 = vld [vmem:[#allocation2 + $0x8] sm:$0x1f]
        %v620 = vld [vmem:[#allocation2 + $0x1] sm:$0xff]
        %v621 = vld [vmem:[#allocation2 + $0x9] sm:$0x1f]
        %624 = vrot.lane.b32.xlu0 %v620, 32
        %v625 = vpop.permute.xlu0 %624
        %626 = vrot.lane.b32.xlu0 %v621, 32
        %v627 = vpop.permute.xlu0 %626
        %v630 = vsel %vm441, %v618, %v625
        %v631 = vsel %vm441, %v619, %v627
        %v632 = vld [vmem:[%s4] sm:$0xff]
        %v633 = vld [vmem:[%s4 + $0x8] sm:$0xff]
        %v634 = vld [vmem:[%s4 + $0x10] sm:$0xff]
        %v635 = vld [vmem:[%s4 + $0x18] sm:$0xff]
        %v636 = vld [vmem:[%s4 + $0x20] sm:$0xff]
        %v637 = vld [vmem:[%s4 + $0x28] sm:$0xff]
        %v638 = vld [vmem:[%s4 + $0x30] sm:$0xff]
        %v639 = vld [vmem:[%s4 + $0x38] sm:$0xff]
        %v640 = vld [vmem:[%s10] sm:$0x1]
        %v642 = vperm.slane %v640, 0
        %v645 = vsel %vm523, %v630, 0
        %v648 = vsel %vm523, %v631, 0
        %650 = vmatpush.msra.mxu0 0.0
        %651 = vmatpush.msra.mxu0 0.0
        %652 = vmatpush.msra.mxu0 0.0
        %653 = vmatpush.msra.mxu0 0.0
        %654 = vmatpush.msra.mxu0 0.0
        %655 = vmatpush.msra.mxu0 0.0
        %656 = vmatpush.msra.mxu0 0.0
        %657 = vmatpush.msra.mxu0 0.0
        %658 = vmatpush.msra.mxu0 %v639
        %659 = vmatpush.msra.mxu0 %v638
        %660 = vmatpush.msra.mxu0 %v637
        %661 = vmatpush.msra.mxu0 %v636
        %662 = vmatpush.msra.mxu0 %v635
        %663 = vmatpush.msra.mxu0 %v634
        %664 = vmatpush.msra.mxu0 %v633
        %665 = vmatpush.msra.mxu0 %v632
        %666 = vmatmul.f32.gmra.mxu0 %v645
        %v667 = vpop.f32.mrf.mxu0
        %v668 = vadd.f32 %v642, %v667
        %669 = vmatmul.f32.gmra.mxu0 %v648
        %v670 = vpop.f32.mrf.mxu0
        %v671 = vadd.f32 %v642, %v670
        %672 = vdwg.mxu0
        %673 = vst.msk [vmem:[#allocation3 + $0x2d] sm:$0xff] %vm441, %v668
        %674 = vst.msk [vmem:[#allocation3 + $0x35] sm:$0x1f] %vm452, %v671
        %675 = vst.msk [vmem:[#allocation2] sm:$0xff] %vm441, %v668
        %676 = vst.msk [vmem:[#allocation2 + $0x8] sm:$0x1f] %vm452, %v671
        %v677 = vld [vmem:[#allocation2] ss:$2 sm:$0x3f]
        %s678 = scalar_lea.vmem [#allocation2], 1
        %v679 = vld [vmem:[%s678] ss:$2 sm:$0x3f]
        %s680 = scalar_lea.vmem [#allocation2], 2
        %v681 = vld [vmem:[%s680] ss:$2 sm:$0x3f]
        %683 = vrot.lane.b32.xlu0 %v679, 32
        %v684 = vpop.permute.xlu0 %683
        %687 = vrot.lane.b32.xlu0 %v681, 64
        %v688 = vpop.permute.xlu0 %687
        %v690 = vsel %vm441, %v677, %v684
        %v691 = vsel %vm523, %v690, %v688
        %v692 = vld [vmem:[%s5] sm:$0xff]
        %v693 = vld [vmem:[%s5 + $0x8] sm:$0xff]
        %v694 = vld [vmem:[%s5 + $0x10] sm:$0xff]
        %v695 = vld [vmem:[%s5 + $0x18] sm:$0xff]
        %v696 = vld [vmem:[%s5 + $0x20] sm:$0xff]
        %v697 = vld [vmem:[%s5 + $0x28] sm:$0xff]
        %v698 = vld [vmem:[%s5 + $0x30] sm:$0xff]
        %v699 = vld [vmem:[%s5 + $0x38] sm:$0xff]
        %v700 = vld [vmem:[%s5 + $0x40] sm:$0xff]
        %v701 = vld [vmem:[%s5 + $0x48] sm:$0xff]
        %v702 = vld [vmem:[%s5 + $0x50] sm:$0xff]
        %v703 = vld [vmem:[%s5 + $0x58] sm:$0xff]
        %v704 = vld [vmem:[%s11] sm:$0x1]
        %v706 = vperm.slane %v704, 0
        %vm708 = vcmask 785408
        %v710 = vsel %vm708, %v691, 0
        %712 = vmatpush.msra.mxu0 0.0
        %713 = vmatpush.msra.mxu0 0.0
        %714 = vmatpush.msra.mxu0 0.0
        %715 = vmatpush.msra.mxu0 0.0
        %716 = vmatpush.msra.mxu0 %v703
        %717 = vmatpush.msra.mxu0 %v702
        %718 = vmatpush.msra.mxu0 %v701
        %719 = vmatpush.msra.mxu0 %v700
        %720 = vmatpush.msra.mxu0 %v699
        %721 = vmatpush.msra.mxu0 %v698
        %722 = vmatpush.msra.mxu0 %v697
        %723 = vmatpush.msra.mxu0 %v696
        %724 = vmatpush.msra.mxu0 %v695
        %725 = vmatpush.msra.mxu0 %v694
        %726 = vmatpush.msra.mxu0 %v693
        %727 = vmatpush.msra.mxu0 %v692
        %728 = vmatmul.f32.gmra.mxu0 %v710
        %v729 = vpop.f32.mrf.mxu0
        %v730 = vadd.f32 %v706, %v729
        %731 = vdwg.mxu0
        %732 = vst.msk [vmem:[#allocation3 + $0x3a] sm:$0x3f] %vm614, %v730
        %733 = vst.msk [vmem:[#allocation2] sm:$0x3f] %vm614, %v730
        %v734 = vld [vmem:[#allocation2] sm:$0x1f]
        %v735 = vld [vmem:[#allocation2 + $0x1] sm:$0x1f]
        %737 = vrot.lane.b32.xlu0 %v735, 32
        %v738 = vpop.permute.xlu0 %737
        %v740 = vsel %vm441, %v734, %v738
        %v741 = vld [vmem:[%s6] sm:$0xff]
        %v742 = vld [vmem:[%s6 + $0x8] sm:$0xff]
        %v743 = vld [vmem:[%s6 + $0x10] sm:$0xff]
        %v744 = vld [vmem:[%s6 + $0x18] sm:$0xff]
        %v745 = vld [vmem:[%s6 + $0x20] sm:$0xff]
        %v746 = vld [vmem:[%s6 + $0x28] sm:$0xff]
        %v747 = vld [vmem:[%s6 + $0x30] sm:$0xff]
        %v748 = vld [vmem:[%s6 + $0x38] sm:$0xff]
        %v749 = vld [vmem:[%s12] sm:$0x1]
        %v751 = vperm.slane %v749, 0
        %v754 = vsel %vm523, %v740, 0
        %756 = vmatpush.msra.mxu0 0.0
        %757 = vmatpush.msra.mxu0 0.0
        %758 = vmatpush.msra.mxu0 0.0
        %759 = vmatpush.msra.mxu0 0.0
        %760 = vmatpush.msra.mxu0 0.0
        %761 = vmatpush.msra.mxu0 0.0
        %762 = vmatpush.msra.mxu0 0.0
        %763 = vmatpush.msra.mxu0 0.0
        %764 = vmatpush.msra.mxu0 %v748
        %765 = vmatpush.msra.mxu0 %v747
        %766 = vmatpush.msra.mxu0 %v746
        %767 = vmatpush.msra.mxu0 %v745
        %768 = vmatpush.msra.mxu0 %v744
        %769 = vmatpush.msra.mxu0 %v743
        %770 = vmatpush.msra.mxu0 %v742
        %771 = vmatpush.msra.mxu0 %v741
        %772 = vmatmul.f32.gmra.mxu0 %v754
        %v773 = vpop.f32.mrf.mxu0
        %v774 = vadd.f32 %v751, %v773
        %775 = vdwg.mxu0
        %776 = vst.msk [vmem:[#allocation3 + $0x40] sm:$0x1f] %vm452, %v774
        %v777 = vlaneseq
        %v778 = vshrl.u32 %v777, 7
        %v779 = vadd.s32 %v778, 8
        %v780 = vadd.s32 %v778, 16
        %v781 = vadd.s32 %v778, 24
        %v782 = vadd.s32 %v778, 32
        %v783 = vadd.s32 %v778, 40
        %v784 = vadd.s32 %v778, 48
        %v785 = vadd.s32 %v778, 56
        %v786 = vadd.s32 %v778, 64
        %v787 = vlaneseq
        %v788 = vand.u32 %v787, 127
        %v789 = vadd.s32 %v788, 128
        %v790 = vmul.u32 %v778, 17
        %v791 = vmul.u32 %v779, 17
        %v792 = vmul.u32 %v780, 17
        %v793 = vmul.u32 %v781, 17
        %v794 = vmul.u32 %v782, 17
        %v795 = vmul.u32 %v783, 17
        %v796 = vmul.u32 %v784, 17
        %v797 = vmul.u32 %v785, 17
        %v798 = vmul.u32 %v786, 17
        %vm799 = vcmp.ge.s32.totalorder %v778, 0
        %vm800 = vcmp.ge.s32.totalorder %v779, 0
        %vm801 = vcmp.ge.s32.totalorder %v780, 0
        %vm802 = vcmp.ge.s32.totalorder %v781, 0
        %vm803 = vcmp.ge.s32.totalorder %v782, 0
        %vm804 = vcmp.ge.s32.totalorder %v783, 0
        %vm805 = vcmp.ge.s32.totalorder %v784, 0
        %vm806 = vcmp.ge.s32.totalorder %v785, 0
        %vm807 = vcmp.ge.s32.totalorder %v786, 0
        %vm808 = vcmp.lt.s32.totalorder %v778, 16
        %vm809 = vcmp.lt.s32.totalorder %v779, 16
        %vm810 = vcmp.lt.s32.totalorder %v780, 16
        %vm811 = vcmp.lt.s32.totalorder %v781, 16
        %vm812 = vcmp.lt.s32.totalorder %v782, 16
        %vm813 = vcmp.lt.s32.totalorder %v783, 16
        %vm814 = vcmp.lt.s32.totalorder %v784, 16
        %vm815 = vcmp.lt.s32.totalorder %v785, 16
        %vm816 = vcmp.lt.s32.totalorder %v786, 16
        %vm817 = vmand %vm799, %vm808
        %vm818 = vmand %vm800, %vm809
        %vm819 = vmand %vm801, %vm810
        %vm820 = vmand %vm802, %vm811
        %vm821 = vmand %vm803, %vm812
        %vm822 = vmand %vm804, %vm813
        %vm823 = vmand %vm805, %vm814
        %vm824 = vmand %vm806, %vm815
        %vm825 = vmand %vm807, %vm816
        %vm826 = vcmp.eq.s32.totalorder %v788, %v790
        %vm827 = vcmp.eq.s32.totalorder %v789, %v790
        %vm828 = vcmp.eq.s32.totalorder %v788, %v791
        %vm829 = vcmp.eq.s32.totalorder %v789, %v791
        %vm830 = vcmp.eq.s32.totalorder %v788, %v792
        %vm831 = vcmp.eq.s32.totalorder %v789, %v792
        %vm832 = vcmp.eq.s32.totalorder %v788, %v793
        %vm833 = vcmp.eq.s32.totalorder %v789, %v793
        %vm834 = vcmp.eq.s32.totalorder %v788, %v794
        %vm835 = vcmp.eq.s32.totalorder %v789, %v794
        %vm836 = vcmp.eq.s32.totalorder %v788, %v795
        %vm837 = vcmp.eq.s32.totalorder %v789, %v795
        %vm838 = vcmp.eq.s32.totalorder %v788, %v796
        %vm839 = vcmp.eq.s32.totalorder %v789, %v796
        %vm840 = vcmp.eq.s32.totalorder %v788, %v797
        %vm841 = vcmp.eq.s32.totalorder %v789, %v797
        %vm842 = vcmp.eq.s32.totalorder %v788, %v798
        %vm843 = vcmp.eq.s32.totalorder %v789, %v798
        %vm844 = vmand %vm817, %vm826
        %vm845 = vmand %vm817, %vm827
        %vm846 = vmand %vm818, %vm828
        %vm847 = vmand %vm818, %vm829
        %vm848 = vmand %vm819, %vm830
        %vm849 = vmand %vm819, %vm831
        %vm850 = vmand %vm820, %vm832
        %vm851 = vmand %vm820, %vm833
        %vm852 = vmand %vm821, %vm834
        %vm853 = vmand %vm821, %vm835
        %vm854 = vmand %vm822, %vm836
        %vm855 = vmand %vm822, %vm837
        %vm856 = vmand %vm823, %vm838
        %vm857 = vmand %vm823, %vm839
        %vm858 = vmand %vm824, %vm840
        %vm859 = vmand %vm824, %vm841
        %vm860 = vmand %vm825, %vm842
        %vm861 = vmand %vm825, %vm843
        %v862 = vsel %vm844, 1.0, 0.0
        %v863 = vsel %vm845, 1.0, 0.0
        %v864 = vsel %vm846, 1.0, 0.0
        %v865 = vsel %vm847, 1.0, 0.0
        %v866 = vsel %vm848, 1.0, 0.0
        %v867 = vsel %vm849, 1.0, 0.0
        %v868 = vsel %vm850, 1.0, 0.0
        %v869 = vsel %vm851, 1.0, 0.0
        %v870 = vsel %vm852, 1.0, 0.0
        %v871 = vsel %vm853, 1.0, 0.0
        %v872 = vsel %vm854, 1.0, 0.0
        %v873 = vsel %vm855, 1.0, 0.0
        %v874 = vsel %vm856, 1.0, 0.0
        %v875 = vsel %vm857, 1.0, 0.0
        %v876 = vsel %vm858, 1.0, 0.0
        %v877 = vsel %vm859, 1.0, 0.0
        %v878 = vsel %vm860, 1.0, 0.0
        %v879 = vsel %vm861, 1.0, 0.0
        %v880 = vsub.s32 %v778, 16
        %v881 = vsub.s32 %v779, 16
        %v882 = vsub.s32 %v781, 16
        %v883 = vsub.s32 %v782, 16
        %v884 = vsub.s32 %v783, 16
        %v885 = vsub.s32 %v784, 16
        %v886 = vsub.s32 %v785, 16
        %v887 = vsub.s32 %v786, 16
        %v888 = vmul.u32 %v880, 17
        %v889 = vmul.u32 %v881, 17
        %v890 = vmul.u32 %v882, 17
        %v891 = vmul.u32 %v883, 17
        %v892 = vmul.u32 %v884, 17
        %v893 = vmul.u32 %v885, 17
        %v894 = vmul.u32 %v886, 17
        %v895 = vmul.u32 %v887, 17
        %v896 = vadd.s32 %v888, 1
        %v897 = vadd.s32 %v889, 1
        %v898 = vadd.s32 %v790, 1
        %v899 = vadd.s32 %v890, 1
        %v900 = vadd.s32 %v891, 1
        %v901 = vadd.s32 %v892, 1
        %v902 = vadd.s32 %v893, 1
        %v903 = vadd.s32 %v894, 1
        %v904 = vadd.s32 %v895, 1
        %vm905 = vcmp.ge.s32.totalorder %v778, 16
        %vm906 = vcmp.ge.s32.totalorder %v779, 16
        %vm907 = vcmp.ge.s32.totalorder %v780, 16
        %vm908 = vcmp.ge.s32.totalorder %v781, 16
        %vm909 = vcmp.ge.s32.totalorder %v782, 16
        %vm910 = vcmp.ge.s32.totalorder %v783, 16
        %vm911 = vcmp.ge.s32.totalorder %v784, 16
        %vm912 = vcmp.ge.s32.totalorder %v785, 16
        %vm913 = vcmp.ge.s32.totalorder %v786, 16
        %vm914 = vcmp.lt.s32.totalorder %v778, 31
        %vm915 = vcmp.lt.s32.totalorder %v779, 31
        %vm916 = vcmp.lt.s32.totalorder %v780, 31
        %vm917 = vcmp.lt.s32.totalorder %v781, 31
        %vm918 = vcmp.lt.s32.totalorder %v782, 31
        %vm919 = vcmp.lt.s32.totalorder %v783, 31
        %vm920 = vcmp.lt.s32.totalorder %v784, 31
        %vm921 = vcmp.lt.s32.totalorder %v785, 31
        %vm922 = vcmp.lt.s32.totalorder %v786, 31
        %vm923 = vmand %vm905, %vm914
        %vm924 = vmand %vm906, %vm915
        %vm925 = vmand %vm907, %vm916
        %vm926 = vmand %vm908, %vm917
        %vm927 = vmand %vm909, %vm918
        %vm928 = vmand %vm910, %vm919
        %vm929 = vmand %vm911, %vm920
        %vm930 = vmand %vm912, %vm921
        %vm931 = vmand %vm913, %vm922
        %vm932 = vcmp.eq.s32.totalorder %v788, %v896
        %vm933 = vcmp.eq.s32.totalorder %v789, %v896
        %vm934 = vcmp.eq.s32.totalorder %v788, %v897
        %vm935 = vcmp.eq.s32.totalorder %v789, %v897
        %vm936 = vcmp.eq.s32.totalorder %v788, %v898
        %vm937 = vcmp.eq.s32.totalorder %v789, %v898
        %vm938 = vcmp.eq.s32.totalorder %v788, %v899
        %vm939 = vcmp.eq.s32.totalorder %v789, %v899
        %vm940 = vcmp.eq.s32.totalorder %v788, %v900
        %vm941 = vcmp.eq.s32.totalorder %v789, %v900
        %vm942 = vcmp.eq.s32.totalorder %v788, %v901
        %vm943 = vcmp.eq.s32.totalorder %v789, %v901
        %vm944 = vcmp.eq.s32.totalorder %v788, %v902
        %vm945 = vcmp.eq.s32.totalorder %v789, %v902
        %vm946 = vcmp.eq.s32.totalorder %v788, %v903
        %vm947 = vcmp.eq.s32.totalorder %v789, %v903
        %vm948 = vcmp.eq.s32.totalorder %v788, %v904
        %vm949 = vcmp.eq.s32.totalorder %v789, %v904
        %vm950 = vmand %vm923, %vm932
        %vm951 = vmand %vm923, %vm933
        %vm952 = vmand %vm924, %vm934
        %vm953 = vmand %vm924, %vm935
        %vm954 = vmand %vm925, %vm936
        %vm955 = vmand %vm925, %vm937
        %vm956 = vmand %vm926, %vm938
        %vm957 = vmand %vm926, %vm939
        %vm958 = vmand %vm927, %vm940
        %vm959 = vmand %vm927, %vm941
        %vm960 = vmand %vm928, %vm942
        %vm961 = vmand %vm928, %vm943
        %vm962 = vmand %vm929, %vm944
        %vm963 = vmand %vm929, %vm945
        %vm964 = vmand %vm930, %vm946
        %vm965 = vmand %vm930, %vm947
        %vm966 = vmand %vm931, %vm948
        %vm967 = vmand %vm931, %vm949
        %v968 = vsel %vm950, 1.0, %v862
        %v969 = vsel %vm951, 1.0, %v863
        %v970 = vsel %vm952, 1.0, %v864
        %v971 = vsel %vm953, 1.0, %v865
        %v972 = vsel %vm954, 1.0, %v866
        %v973 = vsel %vm955, 1.0, %v867
        %v974 = vsel %vm956, 1.0, %v868
        %v975 = vsel %vm957, 1.0, %v869
        %v976 = vsel %vm958, 1.0, %v870
        %v977 = vsel %vm959, 1.0, %v871
        %v978 = vsel %vm960, 1.0, %v872
        %v979 = vsel %vm961, 1.0, %v873
        %v980 = vsel %vm962, 1.0, %v874
        %v981 = vsel %vm963, 1.0, %v875
        %v982 = vsel %vm964, 1.0, %v876
        %v983 = vsel %vm965, 1.0, %v877
        %v984 = vsel %vm966, 1.0, %v878
        %v985 = vsel %vm967, 1.0, %v879
        %v986 = vsub.s32 %v778, 31
        %v987 = vsub.s32 %v779, 31
        %v988 = vsub.s32 %v780, 31
        %v989 = vsub.s32 %v781, 31
        %v990 = vsub.s32 %v782, 31
        %v991 = vsub.s32 %v783, 31
        %v992 = vsub.s32 %v784, 31
        %v993 = vsub.s32 %v785, 31
        %v994 = vsub.s32 %v786, 31
        %v995 = vmul.u32 %v986, 17
        %v996 = vmul.u32 %v987, 17
        %v997 = vmul.u32 %v988, 17
        %v998 = vmul.u32 %v989, 17
        %v999 = vmul.u32 %v990, 17
        %v1000 = vmul.u32 %v991, 17
        %v1001 = vmul.u32 %v992, 17
        %v1002 = vmul.u32 %v993, 17
        %v1003 = vmul.u32 %v994, 17
        %v1004 = vadd.s32 %v995, 2
        %v1005 = vadd.s32 %v996, 2
        %v1006 = vadd.s32 %v997, 2
        %v1007 = vadd.s32 %v998, 2
        %v1008 = vadd.s32 %v999, 2
        %v1009 = vadd.s32 %v1000, 2
        %v1010 = vadd.s32 %v1001, 2
        %v1011 = vadd.s32 %v1002, 2
        %v1012 = vadd.s32 %v1003, 2
        %vm1013 = vcmp.ge.s32.totalorder %v778, 31
        %vm1014 = vcmp.ge.s32.totalorder %v779, 31
        %vm1015 = vcmp.ge.s32.totalorder %v780, 31
        %vm1016 = vcmp.ge.s32.totalorder %v781, 31
        %vm1017 = vcmp.ge.s32.totalorder %v782, 31
        %vm1018 = vcmp.ge.s32.totalorder %v783, 31
        %vm1019 = vcmp.ge.s32.totalorder %v784, 31
        %vm1020 = vcmp.ge.s32.totalorder %v785, 31
        %vm1021 = vcmp.ge.s32.totalorder %v786, 31
        %vm1022 = vcmp.lt.s32.totalorder %v778, 45
        %vm1023 = vcmp.lt.s32.totalorder %v779, 45
        %vm1024 = vcmp.lt.s32.totalorder %v780, 45
        %vm1025 = vcmp.lt.s32.totalorder %v781, 45
        %vm1026 = vcmp.lt.s32.totalorder %v782, 45
        %vm1027 = vcmp.lt.s32.totalorder %v783, 45
        %vm1028 = vcmp.lt.s32.totalorder %v784, 45
        %vm1029 = vcmp.lt.s32.totalorder %v785, 45
        %vm1030 = vcmp.lt.s32.totalorder %v786, 45
        %vm1031 = vmand %vm1013, %vm1022
        %vm1032 = vmand %vm1014, %vm1023
        %vm1033 = vmand %vm1015, %vm1024
        %vm1034 = vmand %vm1016, %vm1025
        %vm1035 = vmand %vm1017, %vm1026
        %vm1036 = vmand %vm1018, %vm1027
        %vm1037 = vmand %vm1019, %vm1028
        %vm1038 = vmand %vm1020, %vm1029
        %vm1039 = vmand %vm1021, %vm1030
        %vm1040 = vcmp.eq.s32.totalorder %v788, %v1004
        %vm1041 = vcmp.eq.s32.totalorder %v789, %v1004
        %vm1042 = vcmp.eq.s32.totalorder %v788, %v1005
        %vm1043 = vcmp.eq.s32.totalorder %v789, %v1005
        %vm1044 = vcmp.eq.s32.totalorder %v788, %v1006
        %vm1045 = vcmp.eq.s32.totalorder %v789, %v1006
        %vm1046 = vcmp.eq.s32.totalorder %v788, %v1007
        %vm1047 = vcmp.eq.s32.totalorder %v789, %v1007
        %vm1048 = vcmp.eq.s32.totalorder %v788, %v1008
        %vm1049 = vcmp.eq.s32.totalorder %v789, %v1008
        %vm1050 = vcmp.eq.s32.totalorder %v788, %v1009
        %vm1051 = vcmp.eq.s32.totalorder %v789, %v1009
        %vm1052 = vcmp.eq.s32.totalorder %v788, %v1010
        %vm1053 = vcmp.eq.s32.totalorder %v789, %v1010
        %vm1054 = vcmp.eq.s32.totalorder %v788, %v1011
        %vm1055 = vcmp.eq.s32.totalorder %v789, %v1011
        %vm1056 = vcmp.eq.s32.totalorder %v788, %v1012
        %vm1057 = vcmp.eq.s32.totalorder %v789, %v1012
        %vm1058 = vmand %vm1031, %vm1040
        %vm1059 = vmand %vm1031, %vm1041
        %vm1060 = vmand %vm1032, %vm1042
        %vm1061 = vmand %vm1032, %vm1043
        %vm1062 = vmand %vm1033, %vm1044
        %vm1063 = vmand %vm1033, %vm1045
        %vm1064 = vmand %vm1034, %vm1046
        %vm1065 = vmand %vm1034, %vm1047
        %vm1066 = vmand %vm1035, %vm1048
        %vm1067 = vmand %vm1035, %vm1049
        %vm1068 = vmand %vm1036, %vm1050
        %vm1069 = vmand %vm1036, %vm1051
        %vm1070 = vmand %vm1037, %vm1052
        %vm1071 = vmand %vm1037, %vm1053
        %vm1072 = vmand %vm1038, %vm1054
        %vm1073 = vmand %vm1038, %vm1055
        %vm1074 = vmand %vm1039, %vm1056
        %vm1075 = vmand %vm1039, %vm1057
        %v1076 = vsel %vm1058, 1.0, %v968
        %v1077 = vsel %vm1059, 1.0, %v969
        %v1078 = vsel %vm1060, 1.0, %v970
        %v1079 = vsel %vm1061, 1.0, %v971
        %v1080 = vsel %vm1062, 1.0, %v972
        %v1081 = vsel %vm1063, 1.0, %v973
        %v1082 = vsel %vm1064, 1.0, %v974
        %v1083 = vsel %vm1065, 1.0, %v975
        %v1084 = vsel %vm1066, 1.0, %v976
        %v1085 = vsel %vm1067, 1.0, %v977
        %v1086 = vsel %vm1068, 1.0, %v978
        %v1087 = vsel %vm1069, 1.0, %v979
        %v1088 = vsel %vm1070, 1.0, %v980
        %v1089 = vsel %vm1071, 1.0, %v981
        %v1090 = vsel %vm1072, 1.0, %v982
        %v1091 = vsel %vm1073, 1.0, %v983
        %v1092 = vsel %vm1074, 1.0, %v984
        %v1093 = vsel %vm1075, 1.0, %v985
        %v1094 = vsub.s32 %v778, 45
        %v1095 = vsub.s32 %v779, 45
        %v1096 = vsub.s32 %v780, 45
        %v1097 = vsub.s32 %v781, 45
        %v1098 = vsub.s32 %v782, 45
        %v1099 = vsub.s32 %v783, 45
        %v1100 = vsub.s32 %v784, 45
        %v1101 = vsub.s32 %v785, 45
        %v1102 = vsub.s32 %v786, 45
        %v1103 = vmul.u32 %v1094, 17
        %v1104 = vmul.u32 %v1095, 17
        %v1105 = vmul.u32 %v1096, 17
        %v1106 = vmul.u32 %v1097, 17
        %v1107 = vmul.u32 %v1098, 17
        %v1108 = vmul.u32 %v1099, 17
        %v1109 = vmul.u32 %v1100, 17
        %v1110 = vmul.u32 %v1101, 17
        %v1111 = vmul.u32 %v1102, 17
        %v1112 = vadd.s32 %v1103, 3
        %v1113 = vadd.s32 %v1104, 3
        %v1114 = vadd.s32 %v1105, 3
        %v1115 = vadd.s32 %v1106, 3
        %v1116 = vadd.s32 %v1107, 3
        %v1117 = vadd.s32 %v1108, 3
        %v1118 = vadd.s32 %v1109, 3
        %v1119 = vadd.s32 %v1110, 3
        %v1120 = vadd.s32 %v1111, 3
        %vm1121 = vcmp.ge.s32.totalorder %v778, 45
        %vm1122 = vcmp.ge.s32.totalorder %v779, 45
        %vm1123 = vcmp.ge.s32.totalorder %v780, 45
        %vm1124 = vcmp.ge.s32.totalorder %v781, 45
        %vm1125 = vcmp.ge.s32.totalorder %v782, 45
        %vm1126 = vcmp.ge.s32.totalorder %v783, 45
        %vm1127 = vcmp.ge.s32.totalorder %v784, 45
        %vm1128 = vcmp.ge.s32.totalorder %v785, 45
        %vm1129 = vcmp.ge.s32.totalorder %v786, 45
        %vm1130 = vcmp.lt.s32.totalorder %v778, 58
        %vm1131 = vcmp.lt.s32.totalorder %v779, 58
        %vm1132 = vcmp.lt.s32.totalorder %v780, 58
        %vm1133 = vcmp.lt.s32.totalorder %v781, 58
        %vm1134 = vcmp.lt.s32.totalorder %v782, 58
        %vm1135 = vcmp.lt.s32.totalorder %v783, 58
        %vm1136 = vcmp.lt.s32.totalorder %v784, 58
        %vm1137 = vcmp.lt.s32.totalorder %v785, 58
        %vm1138 = vcmp.lt.s32.totalorder %v786, 58
        %vm1139 = vmand %vm1121, %vm1130
        %vm1140 = vmand %vm1122, %vm1131
        %vm1141 = vmand %vm1123, %vm1132
        %vm1142 = vmand %vm1124, %vm1133
        %vm1143 = vmand %vm1125, %vm1134
        %vm1144 = vmand %vm1126, %vm1135
        %vm1145 = vmand %vm1127, %vm1136
        %vm1146 = vmand %vm1128, %vm1137
        %vm1147 = vmand %vm1129, %vm1138
        %vm1148 = vcmp.eq.s32.totalorder %v788, %v1112
        %vm1149 = vcmp.eq.s32.totalorder %v789, %v1112
        %vm1150 = vcmp.eq.s32.totalorder %v788, %v1113
        %vm1151 = vcmp.eq.s32.totalorder %v789, %v1113
        %vm1152 = vcmp.eq.s32.totalorder %v788, %v1114
        %vm1153 = vcmp.eq.s32.totalorder %v789, %v1114
        %vm1154 = vcmp.eq.s32.totalorder %v788, %v1115
        %vm1155 = vcmp.eq.s32.totalorder %v789, %v1115
        %vm1156 = vcmp.eq.s32.totalorder %v788, %v1116
        %vm1157 = vcmp.eq.s32.totalorder %v789, %v1116
        %vm1158 = vcmp.eq.s32.totalorder %v788, %v1117
        %vm1159 = vcmp.eq.s32.totalorder %v789, %v1117
        %vm1160 = vcmp.eq.s32.totalorder %v788, %v1118
        %vm1161 = vcmp.eq.s32.totalorder %v789, %v1118
        %vm1162 = vcmp.eq.s32.totalorder %v788, %v1119
        %vm1163 = vcmp.eq.s32.totalorder %v789, %v1119
        %vm1164 = vcmp.eq.s32.totalorder %v788, %v1120
        %vm1165 = vcmp.eq.s32.totalorder %v789, %v1120
        %vm1166 = vmand %vm1139, %vm1148
        %vm1167 = vmand %vm1139, %vm1149
        %vm1168 = vmand %vm1140, %vm1150
        %vm1169 = vmand %vm1140, %vm1151
        %vm1170 = vmand %vm1141, %vm1152
        %vm1171 = vmand %vm1141, %vm1153
        %vm1172 = vmand %vm1142, %vm1154
        %vm1173 = vmand %vm1142, %vm1155
        %vm1174 = vmand %vm1143, %vm1156
        %vm1175 = vmand %vm1143, %vm1157
        %vm1176 = vmand %vm1144, %vm1158
        %vm1177 = vmand %vm1144, %vm1159
        %vm1178 = vmand %vm1145, %vm1160
        %vm1179 = vmand %vm1145, %vm1161
        %vm1180 = vmand %vm1146, %vm1162
        %vm1181 = vmand %vm1146, %vm1163
        %vm1182 = vmand %vm1147, %vm1164
        %vm1183 = vmand %vm1147, %vm1165
        %v1184 = vsel %vm1166, 1.0, %v1076
        %v1185 = vsel %vm1167, 1.0, %v1077
        %v1186 = vsel %vm1168, 1.0, %v1078
        %v1187 = vsel %vm1169, 1.0, %v1079
        %v1188 = vsel %vm1170, 1.0, %v1080
        %v1189 = vsel %vm1171, 1.0, %v1081
        %v1190 = vsel %vm1172, 1.0, %v1082
        %v1191 = vsel %vm1173, 1.0, %v1083
        %v1192 = vsel %vm1174, 1.0, %v1084
        %v1193 = vsel %vm1175, 1.0, %v1085
        %v1194 = vsel %vm1176, 1.0, %v1086
        %v1195 = vsel %vm1177, 1.0, %v1087
        %v1196 = vsel %vm1178, 1.0, %v1088
        %v1197 = vsel %vm1179, 1.0, %v1089
        %v1198 = vsel %vm1180, 1.0, %v1090
        %v1199 = vsel %vm1181, 1.0, %v1091
        %v1200 = vsel %vm1182, 1.0, %v1092
        %v1201 = vsel %vm1183, 1.0, %v1093
        %v1202 = vsub.s32 %v778, 58
        %v1203 = vsub.s32 %v779, 58
        %v1204 = vsub.s32 %v780, 58
        %v1205 = vsub.s32 %v781, 58
        %v1206 = vsub.s32 %v782, 58
        %v1207 = vsub.s32 %v783, 58
        %v1208 = vsub.s32 %v784, 58
        %v1209 = vsub.s32 %v785, 58
        %v1210 = vsub.s32 %v786, 58
        %v1211 = vmul.u32 %v1202, 34
        %v1212 = vmul.u32 %v1203, 34
        %v1213 = vmul.u32 %v1204, 34
        %v1214 = vmul.u32 %v1205, 34
        %v1215 = vmul.u32 %v1206, 34
        %v1216 = vmul.u32 %v1207, 34
        %v1217 = vmul.u32 %v1208, 34
        %v1218 = vmul.u32 %v1209, 34
        %v1219 = vmul.u32 %v1210, 34
        %v1220 = vadd.s32 %v1211, 5
        %v1221 = vadd.s32 %v1212, 5
        %v1222 = vadd.s32 %v1213, 5
        %v1223 = vadd.s32 %v1214, 5
        %v1224 = vadd.s32 %v1215, 5
        %v1225 = vadd.s32 %v1216, 5
        %v1226 = vadd.s32 %v1217, 5
        %v1227 = vadd.s32 %v1218, 5
        %v1228 = vadd.s32 %v1219, 5
        %vm1229 = vcmp.ge.s32.totalorder %v778, 58
        %vm1230 = vcmp.ge.s32.totalorder %v779, 58
        %vm1231 = vcmp.ge.s32.totalorder %v780, 58
        %vm1232 = vcmp.ge.s32.totalorder %v781, 58
        %vm1233 = vcmp.ge.s32.totalorder %v782, 58
        %vm1234 = vcmp.ge.s32.totalorder %v783, 58
        %vm1235 = vcmp.ge.s32.totalorder %v784, 58
        %vm1236 = vcmp.ge.s32.totalorder %v785, 58
        %vm1237 = vcmp.ge.s32.totalorder %v786, 58
        %vm1238 = vcmp.lt.s32.totalorder %v778, 64
        %vm1239 = vcmp.lt.s32.totalorder %v779, 64
        %vm1240 = vcmp.lt.s32.totalorder %v780, 64
        %vm1241 = vcmp.lt.s32.totalorder %v781, 64
        %vm1242 = vcmp.lt.s32.totalorder %v782, 64
        %vm1243 = vcmp.lt.s32.totalorder %v783, 64
        %vm1244 = vcmp.lt.s32.totalorder %v784, 64
        %vm1245 = vcmp.lt.s32.totalorder %v785, 64
        %vm1246 = vcmp.lt.s32.totalorder %v786, 64
        %vm1247 = vmand %vm1229, %vm1238
        %vm1248 = vmand %vm1230, %vm1239
        %vm1249 = vmand %vm1231, %vm1240
        %vm1250 = vmand %vm1232, %vm1241
        %vm1251 = vmand %vm1233, %vm1242
        %vm1252 = vmand %vm1234, %vm1243
        %vm1253 = vmand %vm1235, %vm1244
        %vm1254 = vmand %vm1236, %vm1245
        %vm1255 = vmand %vm1237, %vm1246
        %vm1256 = vcmp.eq.s32.totalorder %v788, %v1220
        %vm1257 = vcmp.eq.s32.totalorder %v789, %v1220
        %vm1258 = vcmp.eq.s32.totalorder %v788, %v1221
        %vm1259 = vcmp.eq.s32.totalorder %v789, %v1221
        %vm1260 = vcmp.eq.s32.totalorder %v788, %v1222
        %vm1261 = vcmp.eq.s32.totalorder %v789, %v1222
        %vm1262 = vcmp.eq.s32.totalorder %v788, %v1223
        %vm1263 = vcmp.eq.s32.totalorder %v789, %v1223
        %vm1264 = vcmp.eq.s32.totalorder %v788, %v1224
        %vm1265 = vcmp.eq.s32.totalorder %v789, %v1224
        %vm1266 = vcmp.eq.s32.totalorder %v788, %v1225
        %vm1267 = vcmp.eq.s32.totalorder %v789, %v1225
        %vm1268 = vcmp.eq.s32.totalorder %v788, %v1226
        %vm1269 = vcmp.eq.s32.totalorder %v789, %v1226
        %vm1270 = vcmp.eq.s32.totalorder %v788, %v1227
        %vm1271 = vcmp.eq.s32.totalorder %v789, %v1227
        %vm1272 = vcmp.eq.s32.totalorder %v788, %v1228
        %vm1273 = vcmp.eq.s32.totalorder %v789, %v1228
        %vm1274 = vmand %vm1247, %vm1256
        %vm1275 = vmand %vm1247, %vm1257
        %vm1276 = vmand %vm1248, %vm1258
        %vm1277 = vmand %vm1248, %vm1259
        %vm1278 = vmand %vm1249, %vm1260
        %vm1279 = vmand %vm1249, %vm1261
        %vm1280 = vmand %vm1250, %vm1262
        %vm1281 = vmand %vm1250, %vm1263
        %vm1282 = vmand %vm1251, %vm1264
        %vm1283 = vmand %vm1251, %vm1265
        %vm1284 = vmand %vm1252, %vm1266
        %vm1285 = vmand %vm1252, %vm1267
        %vm1286 = vmand %vm1253, %vm1268
        %vm1287 = vmand %vm1253, %vm1269
        %vm1288 = vmand %vm1254, %vm1270
        %vm1289 = vmand %vm1254, %vm1271
        %vm1290 = vmand %vm1255, %vm1272
        %vm1291 = vmand %vm1255, %vm1273
        %v1292 = vsel %vm1274, 1.0, %v1184
        %v1293 = vsel %vm1275, 1.0, %v1185
        %v1294 = vsel %vm1276, 1.0, %v1186
        %v1295 = vsel %vm1277, 1.0, %v1187
        %v1296 = vsel %vm1278, 1.0, %v1188
        %v1297 = vsel %vm1279, 1.0, %v1189
        %v1298 = vsel %vm1280, 1.0, %v1190
        %v1299 = vsel %vm1281, 1.0, %v1191
        %v1300 = vsel %vm1282, 1.0, %v1192
        %v1301 = vsel %vm1283, 1.0, %v1193
        %v1302 = vsel %vm1284, 1.0, %v1194
        %v1303 = vsel %vm1285, 1.0, %v1195
        %v1304 = vsel %vm1286, 1.0, %v1196
        %v1305 = vsel %vm1287, 1.0, %v1197
        %v1306 = vsel %vm1288, 1.0, %v1198
        %v1307 = vsel %vm1289, 1.0, %v1199
        %v1308 = vsel %vm1290, 1.0, %v1200
        %v1309 = vsel %vm1291, 1.0, %v1201
        %v1310 = vsub.s32 %v778, 64
        %v1311 = vsub.s32 %v779, 64
        %v1312 = vsub.s32 %v780, 64
        %v1313 = vsub.s32 %v781, 64
        %v1314 = vsub.s32 %v782, 64
        %v1315 = vsub.s32 %v783, 64
        %v1316 = vsub.s32 %v784, 64
        %v1317 = vsub.s32 %v785, 64
        %v1318 = vmul.u32 %v1310, 34
        %v1319 = vmul.u32 %v1311, 34
        %v1320 = vmul.u32 %v1312, 34
        %v1321 = vmul.u32 %v1313, 34
        %v1322 = vmul.u32 %v1314, 34
        %v1323 = vmul.u32 %v1315, 34
        %v1324 = vmul.u32 %v1316, 34
        %v1325 = vmul.u32 %v1317, 34
        %v1326 = vmul.u32 %v778, 34
        %v1327 = vadd.s32 %v1318, 7
        %v1328 = vadd.s32 %v1319, 7
        %v1329 = vadd.s32 %v1320, 7
        %v1330 = vadd.s32 %v1321, 7
        %v1331 = vadd.s32 %v1322, 7
        %v1332 = vadd.s32 %v1323, 7
        %v1333 = vadd.s32 %v1324, 7
        %v1334 = vadd.s32 %v1325, 7
        %v1335 = vadd.s32 %v1326, 7
        %vm1336 = vcmp.ge.s32.totalorder %v778, 64
        %vm1337 = vcmp.ge.s32.totalorder %v779, 64
        %vm1338 = vcmp.ge.s32.totalorder %v780, 64
        %vm1339 = vcmp.ge.s32.totalorder %v781, 64
        %vm1340 = vcmp.ge.s32.totalorder %v782, 64
        %vm1341 = vcmp.ge.s32.totalorder %v783, 64
        %vm1342 = vcmp.ge.s32.totalorder %v784, 64
        %vm1343 = vcmp.ge.s32.totalorder %v785, 64
        %vm1344 = vcmp.ge.s32.totalorder %v786, 64
        %vm1345 = vcmp.lt.s32.totalorder %v778, 69
        %vm1346 = vcmp.lt.s32.totalorder %v779, 69
        %vm1347 = vcmp.lt.s32.totalorder %v780, 69
        %vm1348 = vcmp.lt.s32.totalorder %v781, 69
        %vm1349 = vcmp.lt.s32.totalorder %v782, 69
        %vm1350 = vcmp.lt.s32.totalorder %v783, 69
        %vm1351 = vcmp.lt.s32.totalorder %v784, 69
        %vm1352 = vcmp.lt.s32.totalorder %v785, 69
        %vm1353 = vcmp.lt.s32.totalorder %v786, 69
        %vm1354 = vmand %vm1336, %vm1345
        %vm1355 = vmand %vm1337, %vm1346
        %vm1356 = vmand %vm1338, %vm1347
        %vm1357 = vmand %vm1339, %vm1348
        %vm1358 = vmand %vm1340, %vm1349
        %vm1359 = vmand %vm1341, %vm1350
        %vm1360 = vmand %vm1342, %vm1351
        %vm1361 = vmand %vm1343, %vm1352
        %vm1362 = vmand %vm1344, %vm1353
        %vm1363 = vcmp.eq.s32.totalorder %v788, %v1327
        %vm1364 = vcmp.eq.s32.totalorder %v789, %v1327
        %vm1365 = vcmp.eq.s32.totalorder %v788, %v1328
        %vm1366 = vcmp.eq.s32.totalorder %v789, %v1328
        %vm1367 = vcmp.eq.s32.totalorder %v788, %v1329
        %vm1368 = vcmp.eq.s32.totalorder %v789, %v1329
        %vm1369 = vcmp.eq.s32.totalorder %v788, %v1330
        %vm1370 = vcmp.eq.s32.totalorder %v789, %v1330
        %vm1371 = vcmp.eq.s32.totalorder %v788, %v1331
        %vm1372 = vcmp.eq.s32.totalorder %v789, %v1331
        %vm1373 = vcmp.eq.s32.totalorder %v788, %v1332
        %vm1374 = vcmp.eq.s32.totalorder %v789, %v1332
        %vm1375 = vcmp.eq.s32.totalorder %v788, %v1333
        %vm1376 = vcmp.eq.s32.totalorder %v789, %v1333
        %vm1377 = vcmp.eq.s32.totalorder %v788, %v1334
        %vm1378 = vcmp.eq.s32.totalorder %v789, %v1334
        %vm1379 = vcmp.eq.s32.totalorder %v788, %v1335
        %vm1380 = vcmp.eq.s32.totalorder %v789, %v1335
        %vm1381 = vmand %vm1354, %vm1363
        %vm1382 = vmand %vm1354, %vm1364
        %vm1383 = vmand %vm1355, %vm1365
        %vm1384 = vmand %vm1355, %vm1366
        %vm1385 = vmand %vm1356, %vm1367
        %vm1386 = vmand %vm1356, %vm1368
        %vm1387 = vmand %vm1357, %vm1369
        %vm1388 = vmand %vm1357, %vm1370
        %vm1389 = vmand %vm1358, %vm1371
        %vm1390 = vmand %vm1358, %vm1372
        %vm1391 = vmand %vm1359, %vm1373
        %vm1392 = vmand %vm1359, %vm1374
        %vm1393 = vmand %vm1360, %vm1375
        %vm1394 = vmand %vm1360, %vm1376
        %vm1395 = vmand %vm1361, %vm1377
        %vm1396 = vmand %vm1361, %vm1378
        %vm1397 = vmand %vm1362, %vm1379
        %vm1398 = vmand %vm1362, %vm1380
        %v1399 = vsel %vm1381, 1.0, %v1292
        %v1400 = vsel %vm1382, 1.0, %v1293
        %v1401 = vsel %vm1383, 1.0, %v1294
        %v1402 = vsel %vm1384, 1.0, %v1295
        %v1403 = vsel %vm1385, 1.0, %v1296
        %v1404 = vsel %vm1386, 1.0, %v1297
        %v1405 = vsel %vm1387, 1.0, %v1298
        %v1406 = vsel %vm1388, 1.0, %v1299
        %v1407 = vsel %vm1389, 1.0, %v1300
        %v1408 = vsel %vm1390, 1.0, %v1301
        %v1409 = vsel %vm1391, 1.0, %v1302
        %v1410 = vsel %vm1392, 1.0, %v1303
        %v1411 = vsel %vm1393, 1.0, %v1304
        %v1412 = vsel %vm1394, 1.0, %v1305
        %v1413 = vsel %vm1395, 1.0, %v1306
        %v1414 = vsel %vm1396, 1.0, %v1307
        %v1415 = vsel %vm1397, 1.0, %v1308
        %v1416 = vsel %vm1398, 1.0, %v1309
        %v1417 = vld [vmem:[#allocation3] sm:$0xff]
        %v1418 = vld [vmem:[#allocation3 + $0x8] sm:$0xff]
        %v1419 = vld [vmem:[#allocation3 + $0x10] sm:$0xff]
        %v1420 = vld [vmem:[#allocation3 + $0x18] sm:$0xff]
        %v1421 = vld [vmem:[#allocation3 + $0x20] sm:$0xff]
        %v1422 = vld [vmem:[#allocation3 + $0x28] sm:$0xff]
        %v1423 = vld [vmem:[#allocation3 + $0x30] sm:$0xff]
        %v1424 = vld [vmem:[#allocation3 + $0x38] sm:$0xff]
        %v1425 = vld [vmem:[#allocation3 + $0x40] sm:$0x1f]
        %1426 = vxpose.xlu0.b32.start [1/16] %v1417, 128
        %1427 = vxpose.xlu0.b32.cont [2/16] %v1418, 128
        %1428 = vxpose.xlu0.b32.cont [3/16] %v1419, 128
        %1429 = vxpose.xlu0.b32.cont [4/16] %v1420, 128
        %1430 = vxpose.xlu0.b32.cont [5/16] %v1421, 128
        %1431 = vxpose.xlu0.b32.cont [6/16] %v1422, 128
        %1432 = vxpose.xlu0.b32.cont [7/16] %v1423, 128
        %1433 = vxpose.xlu0.b32.cont [8/16] %v1424, 128
        %1434 = vxpose.xlu0.b32.cont [9/16] %v1425, 128
        %1435 = vxpose.xlu0.b32.cont [10/16] 0.0, 128
        %1436 = vxpose.xlu0.b32.cont [11/16] 0.0, 128
        %1437 = vxpose.xlu0.b32.cont [12/16] 0.0, 128
        %1438 = vxpose.xlu0.b32.cont [13/16] 0.0, 128
        %1439 = vxpose.xlu0.b32.cont [14/16] 0.0, 128
        %1440 = vxpose.xlu0.b32.cont [15/16] 0.0, 128
        %1441 = vxpose.xlu0.b32.end [16/16] 0.0, 128
        %v1442 = vpop.trf.xlu0
        %v1443 = vpop.trf.xlu0
        %v1444 = vpop.trf.xlu0
        %v1445 = vpop.trf.xlu0
        %v1446 = vpop.trf.xlu0
        %v1447 = vpop.trf.xlu0
        %v1448 = vpop.trf.xlu0
        %v1449 = vpop.trf.xlu0
        %v1450 = vpop.trf.xlu0
        %v1451 = vpop.trf.xlu0
        %v1452 = vpop.trf.xlu0
        %v1453 = vpop.trf.xlu0
        %v1454 = vpop.trf.xlu0
        %v1455 = vpop.trf.xlu0
        %v1456 = vpop.trf.xlu0
        %v1457 = vpop.trf.xlu0
        %vm1458 = vcmask 564224
        %v1460 = vsel %vm1458, %v1442, 0
        %v1463 = vsel %vm1458, %v1443, 0
        %v1466 = vsel %vm1458, %v1444, 0
        %v1469 = vsel %vm1458, %v1445, 0
        %vm1471 = vcmask 1044480
        %v1473 = vsel %vm1471, %v1415, 0
        %v1476 = vsel %vm1471, %v1416, 0
        %1478 = vmatpush.msra.mxu0 0.0
        %1479 = vmatpush.msra.mxu0 0.0
        %1480 = vmatpush.msra.mxu0 0.0
        %1481 = vmatpush.msra.mxu0 0.0
        %1482 = vmatpush.msra.mxu0 0.0
        %1483 = vmatpush.msra.mxu0 0.0
        %1484 = vmatpush.msra.mxu0 0.0
        %1485 = vmatpush.msra.mxu0 %v1473
        %1486 = vmatpush.msra.mxu0 %v1413
        %1487 = vmatpush.msra.mxu0 %v1411
        %1488 = vmatpush.msra.mxu0 %v1409
        %1489 = vmatpush.msra.mxu0 %v1407
        %1490 = vmatpush.msra.mxu0 %v1405
        %1491 = vmatpush.msra.mxu0 %v1403
        %1492 = vmatpush.msra.mxu0 %v1401
        %1493 = vmatpush.msra.mxu0 %v1399
        %1494 = vmatmul.f32.gmra.mxu0 %v1460
        %v1495 = vpop.f32.mrf.mxu0
        %v1496 = vadd.f32 0.0, %v1495
        %1497 = vmatmul.f32.gmra.mxu0 %v1463
        %v1498 = vpop.f32.mrf.mxu0
        %v1499 = vadd.f32 0.0, %v1498
        %1500 = vmatmul.f32.gmra.mxu0 %v1466
        %v1501 = vpop.f32.mrf.mxu0
        %v1502 = vadd.f32 0.0, %v1501
        %1503 = vmatmul.f32.gmra.mxu0 %v1469
        %v1504 = vpop.f32.mrf.mxu0
        %v1505 = vadd.f32 0.0, %v1504
        %1506 = vdwg.mxu0
        %1507 = vmatpush.msra.mxu0 0.0
        %1508 = vmatpush.msra.mxu0 0.0
        %1509 = vmatpush.msra.mxu0 0.0
        %1510 = vmatpush.msra.mxu0 0.0
        %1511 = vmatpush.msra.mxu0 0.0
        %1512 = vmatpush.msra.mxu0 0.0
        %1513 = vmatpush.msra.mxu0 0.0
        %1514 = vmatpush.msra.mxu0 %v1476
        %1515 = vmatpush.msra.mxu0 %v1414
        %1516 = vmatpush.msra.mxu0 %v1412
        %1517 = vmatpush.msra.mxu0 %v1410
        %1518 = vmatpush.msra.mxu0 %v1408
        %1519 = vmatpush.msra.mxu0 %v1406
        %1520 = vmatpush.msra.mxu0 %v1404
        %1521 = vmatpush.msra.mxu0 %v1402
        %1522 = vmatpush.msra.mxu0 %v1400
        %1523 = vmatmul.f32.gmra.mxu0 %v1460
        %v1524 = vpop.f32.mrf.mxu0
        %v1525 = vadd.f32 0.0, %v1524
        %1526 = vmatmul.f32.gmra.mxu0 %v1463
        %v1527 = vpop.f32.mrf.mxu0
        %v1528 = vadd.f32 0.0, %v1527
        %1529 = vmatmul.f32.gmra.mxu0 %v1466
        %v1530 = vpop.f32.mrf.mxu0
        %v1531 = vadd.f32 0.0, %v1530
        %1532 = vmatmul.f32.gmra.mxu0 %v1469
        %v1533 = vpop.f32.mrf.mxu0
        %v1534 = vadd.f32 0.0, %v1533
        %1535 = vdwg.mxu0
        %1536 = vst [vmem:[%s433] sm:$0xff] %v1496
        %1537 = vst [vmem:[%s433 + $0x8] sm:$0xff] %v1525
        %1538 = vst [vmem:[%s433 + $0x10] sm:$0xff] %v1499
        %1539 = vst [vmem:[%s433 + $0x18] sm:$0xff] %v1528
        %1540 = vst [vmem:[%s433 + $0x20] sm:$0xff] %v1502
        %1541 = vst [vmem:[%s433 + $0x28] sm:$0xff] %v1531
        %1542 = vst [vmem:[%s433 + $0x30] sm:$0xff] %v1505
        %1543 = vst [vmem:[%s433 + $0x38] sm:$0xff] %v1534
        %s1544 = sand.u32 %s313, 1
        %s1545 = scalar_lea.sflag [#allocation5], %s1544
        %s1546 = sand.u32 %s313, 1
        %s1547 = smul.addr %s1546, 64
        %s1548 = scalar_lea.vmem [#allocation4], %s1547
        // Predicated region
        $region73: #{tpu_custom_call.1} parent=71 // pred_check
          %p1549 = pneg %p323
        $region74: #{tpu_custom_call.1} parent=71 // pred_check_branch
          %1551 = sbr.rel (%p1549) target = $region76
        $region75: #{tpu_custom_call.1} parent=71 // pred_region
          %1553 = vsyncadd %s1545, 0
          %s1554 = smul.addr %s27, 8
          %s1555 = smul.addr %s1554, 8
          %s1556 = scalar_lea.hbm %s13, %s1555
          %s1557 = sshll.u32 %s1548, 4
          %s1558 = int_to_ptr.vmem [resolvable:$true] %s1557
          %s1559 = sshll.u32 %s1556, 4
          %s1560 = int_to_ptr.hbm [resolvable:$true] %s1559
          %1565 = dma.vmem_to_hbm [thread:$0]  %s1558, 1024, %s1560, %s1545, 256, 256, 16
        $region76: #{tpu_custom_call.1} parent=71 // pred_fallthru
          _
      $region72: #{tpu_custom_call.1} parent=5 // pred_fallthru
        _
      %p1566 = scmp.le.s32.totalorder 2, %s22
      // Predicated region
      $region77: #{tpu_custom_call.1} parent=5 // pred_check
        %p1567 = pneg %p1566
      $region78: #{tpu_custom_call.1} parent=5 // pred_check_branch
        %1569 = sbr.rel (%p1567) target = $region80
      $region79: #{tpu_custom_call.1} parent=5 // pred_region
        %s1570 = ssub.s32 %s22, 2
        // Predicated region
        $region81: #{tpu_custom_call.1} parent=79 // pred_check
          %p1571 = pneg %p329
        $region82: #{tpu_custom_call.1} parent=79 // pred_check_branch
          %1573 = sbr.rel (%p1571) target = $region84
        $region83: #{tpu_custom_call.1} parent=79 // pred_region
          %s1574 = sand.u32 %s314, 1
          %s1575 = scalar_lea.sflag [#allocation5], %s1574
          %s1576 = sand.u32 %s314, 1
          %s1577 = smul.addr %s1576, 64
          %s1578 = scalar_lea.vmem [#allocation4], %s1577
          %1580 = dma.done %s1575, 1024
        $region84: #{tpu_custom_call.1} parent=79 // pred_fallthru
          _
      $region80: #{tpu_custom_call.1} parent=5 // pred_fallthru
        _
    $region6: #{tpu_custom_call.1} parent=1 // loop_footer
      %s26 = sadd.s32 1, %s22
    $region7: #{tpu_custom_call.1} parent=1 // loop_footer_branch
      %21 = sbr.rel target = $region3
    $region8: #{tpu_custom_call.1} parent=1 // loop_exit
      _
    %1581 = vsyncpa [#allocation5], 1
    %s1582 = scalar_lea.sflag [#allocation5], 1
    %1583 = vsyncpa %s1582, 1

// kernel: tpu_custom_call.1
$region0: #{tpu_custom_call.1}
  #allocation0 [shape = 'u32[]', space=smem, size = 0x4, offset = 0x4, fixed_abs, tag = 'smem constant byte address 0x4 - core index']
  #allocation1 [shape = 'u32[72,128]{1,0:T(1,128)}', space=vmem, size = 0x9000, scoped, tag = 'internal scratch']
  #allocation2 [shape = 'f32[16,32]{1,0:T(8,128)}', space=vmem, size = 0x2000, scoped, tag = 'scratch operand']
  #allocation3 [shape = 'f32[69,32]{1,0:T(8,128)}', space=vmem, size = 0x9000, scoped, tag = 'scratch operand']
  %s0 = inlined_call_operand.vmem [shape: f32[2,16,32], index: 0, kind: input, shape index: {}]
  %s1 = inlined_call_operand.vmem [shape: f32[32,32], index: 1, kind: input, shape index: {}]
  %s2 = inlined_call_operand.vmem [shape: f32[64,32], index: 2, kind: input, shape index: {}]
  %s3 = inlined_call_operand.vmem [shape: f32[64,32], index: 3, kind: input, shape index: {}]
  %s4 = inlined_call_operand.vmem [shape: f32[64,32], index: 4, kind: input, shape index: {}]
  %s5 = inlined_call_operand.vmem [shape: f32[96,32], index: 5, kind: input, shape index: {}]
  %s6 = inlined_call_operand.vmem [shape: f32[64,32], index: 6, kind: input, shape index: {}]
  %s7 = inlined_call_operand.vmem [shape: f32[1,32], index: 7, kind: input, shape index: {}]
  %s8 = inlined_call_operand.vmem [shape: f32[1,32], index: 8, kind: input, shape index: {}]
  %s9 = inlined_call_operand.vmem [shape: f32[1,32], index: 9, kind: input, shape index: {}]
  %s10 = inlined_call_operand.vmem [shape: f32[1,32], index: 10, kind: input, shape index: {}]
  %s11 = inlined_call_operand.vmem [shape: f32[1,32], index: 11, kind: input, shape index: {}]
  %s12 = inlined_call_operand.vmem [shape: f32[1,32], index: 12, kind: input, shape index: {}]
  %s13 = inlined_call_operand.hbm [shape: f32[2,32,256], index: 13, kind: output, shape index: {}]
  %s14 = sld [smem:[#allocation0]]
  $region85: #{tpu_custom_call.1} parent=0
    _
  %s16 = ssub.s32 1, %s14
  %s17 = scalar_select 0, %s16, %s14
  $region1: #{tpu_custom_call.1} parent=0
    #allocation4 [shape = 'u8[65536]{0}', space=vmem, size = 0x10000, scoped, tag = 'output window, operand 0']
    #allocation5 [shape = 's32[2]{0}', space=sflag, size = 0x8, scoped, tag = 'scoped memory for tpu_custom_call.1']
    %18 = vsyncpa [#allocation5], 0
    %s19 = scalar_lea.sflag [#allocation5], 1
    %20 = vsyncpa %s19, 0
    loop: start=0, step=1, limit=4
    $region2: #{tpu_custom_call.1} parent=1 // loop_pre_header
      _
    $region3: #{tpu_custom_call.1} parent=1 // loop_header
      %s22 = sphi 0, %s26
      %p23 = scmp.ge.s32.totalorder %s22, 4
      %s32 = sphi 0, %s34
      %s35 = sphi 0, %s32
      %s36 = sphi 0, %s35
      %s52 = sphi 0, %s36
      %s56 = sphi 0, %s56
      %s58 = sphi 0, %s56
      %s59 = sphi 0, %s58
      %s73 = sphi 0, %s59
      %s77 = sphi 0, %s77
      %s79 = sphi 0, %s77
      %s80 = sphi 0, %s79
      %s94 = sphi 0, %s80
      %s98 = sphi 0, %s98
      %s100 = sphi 0, %s98
      %s101 = sphi 0, %s100
      %s115 = sphi 0, %s101
      %s119 = sphi 0, %s119
      %s121 = sphi 0, %s119
      %s122 = sphi 0, %s121
      %s136 = sphi 0, %s122
      %s140 = sphi 0, %s140
      %s142 = sphi 0, %s140
      %s143 = sphi 0, %s142
      %s157 = sphi 0, %s143
      %s161 = sphi 0, %s161
      %s163 = sphi 0, %s161
      %s164 = sphi 0, %s163
      %s178 = sphi 0, %s164
      %s182 = sphi 0, %s182
      %s184 = sphi 0, %s182
      %s185 = sphi 0, %s184
      %s199 = sphi 0, %s185
      %s203 = sphi 0, %s203
      %s205 = sphi 0, %s203
      %s206 = sphi 0, %s205
      %s220 = sphi 0, %s206
      %s224 = sphi 0, %s224
      %s226 = sphi 0, %s224
      %s227 = sphi 0, %s226
      %s241 = sphi 0, %s227
      %s245 = sphi 0, %s245
      %s247 = sphi 0, %s245
      %s248 = sphi 0, %s247
      %s262 = sphi 0, %s248
      %s266 = sphi 0, %s266
      %s268 = sphi 0, %s266
      %s269 = sphi 0, %s268
      %s283 = sphi 0, %s269
      %s287 = sphi 0, %s287
      %s289 = sphi 0, %s287
      %s290 = sphi 0, %s289
      %s304 = sphi 0, %s290
      %s310 = sphi 0, %s312
      %s313 = sphi 0, %s310
      %s314 = sphi 0, %s313
      %s330 = sphi 0, %s314
    $region4: #{tpu_custom_call.1} parent=1 // loop_header_branch
      %25 = sbr.rel (%p23) target = $region8
    $region5: #{tpu_custom_call.1} parent=1 // loop_body
      %s27 = ssub.s32 %s22, 1
      %s28 = ssub.s32 %s22, 2
      %s29 = sadd.s32 %s22, 1
      %s30 = ssub.s32 %s22, %s29
      %p31 = scmp.eq.s32.totalorder %s30, 0
      %s33 = sadd.s32 %s32, 1
      %s34 = scalar_select %p31, %s32, %s33
      %p37 = pneg %p31
      %p38 = scmp.eq.s32.totalorder %s22, 1
      %p39 = por %p37, %p38
      %p40 = scmp.ne.s32.totalorder %s32, %s35
      %p41 = scmp.eq.s32.totalorder %s22, 0
      %p42 = por %p40, %p41
      %p43 = scmp.ne.s32.totalorder %s32, %s35
      %p44 = scmp.eq.s32.totalorder %s27, 1
      %p45 = por %p43, %p44
      %p46 = scmp.ne.s32.totalorder %s35, %s36
      %p47 = scmp.eq.s32.totalorder %s27, 0
      %p48 = por %p46, %p47
      %p49 = scmp.ne.s32.totalorder %s35, %s36
      %p50 = scmp.eq.s32.totalorder %s28, 1
      %p51 = por %p49, %p50
      %p53 = scmp.ne.s32.totalorder %s36, %s52
      %p54 = scmp.eq.s32.totalorder %s28, 0
      %p55 = por %p53, %p54
      %s57 = sadd.s32 %s56, 1
      %p60 = scmp.eq.s32.totalorder %s22, 1
      %p61 = scmp.ne.s32.totalorder %s56, %s58
      %p62 = scmp.eq.s32.totalorder %s22, 0
      %p63 = por %p61, %p62
      %p64 = scmp.ne.s32.totalorder %s56, %s58
      %p65 = scmp.eq.s32.totalorder %s27, 1
      %p66 = por %p64, %p65
      %p67 = scmp.ne.s32.totalorder %s58, %s59
      %p68 = scmp.eq.s32.totalorder %s27, 0
      %p69 = por %p67, %p68
      %p70 = scmp.ne.s32.totalorder %s58, %s59
      %p71 = scmp.eq.s32.totalorder %s28, 1
      %p72 = por %p70, %p71
      %p74 = scmp.ne.s32.totalorder %s59, %s73
      %p75 = scmp.eq.s32.totalorder %s28, 0
      %p76 = por %p74, %p75
      %s78 = sadd.s32 %s77, 1
      %p81 = scmp.eq.s32.totalorder %s22, 1
      %p82 = scmp.ne.s32.totalorder %s77, %s79
      %p83 = scmp.eq.s32.totalorder %s22, 0
      %p84 = por %p82, %p83
      %p85 = scmp.ne.s32.totalorder %s77, %s79
      %p86 = scmp.eq.s32.totalorder %s27, 1
      %p87 = por %p85, %p86
      %p88 = scmp.ne.s32.totalorder %s79, %s80
      %p89 = scmp.eq.s32.totalorder %s27, 0
      %p90 = por %p88, %p89
      %p91 = scmp.ne.s32.totalorder %s79, %s80
      %p92 = scmp.eq.s32.totalorder %s28, 1
      %p93 = por %p91, %p92
      %p95 = scmp.ne.s32.totalorder %s80, %s94
      %p96 = scmp.eq.s32.totalorder %s28, 0
      %p97 = por %p95, %p96
      %s99 = sadd.s32 %s98, 1
      %p102 = scmp.eq.s32.totalorder %s22, 1
      %p103 = scmp.ne.s32.totalorder %s98, %s100
      %p104 = scmp.eq.s32.totalorder %s22, 0
      %p105 = por %p103, %p104
      %p106 = scmp.ne.s32.totalorder %s98, %s100
      %p107 = scmp.eq.s32.totalorder %s27, 1
      %p108 = por %p106, %p107
      %p109 = scmp.ne.s32.totalorder %s100, %s101
      %p110 = scmp.eq.s32.totalorder %s27, 0
      %p111 = por %p109, %p110
      %p112 = scmp.ne.s32.totalorder %s100, %s101
      %p113 = scmp.eq.s32.totalorder %s28, 1
      %p114 = por %p112, %p113
      %p116 = scmp.ne.s32.totalorder %s101, %s115
      %p117 = scmp.eq.s32.totalorder %s28, 0
      %p118 = por %p116, %p117
      %s120 = sadd.s32 %s119, 1
      %p123 = scmp.eq.s32.totalorder %s22, 1
      %p124 = scmp.ne.s32.totalorder %s119, %s121
      %p125 = scmp.eq.s32.totalorder %s22, 0
      %p126 = por %p124, %p125
      %p127 = scmp.ne.s32.totalorder %s119, %s121
      %p128 = scmp.eq.s32.totalorder %s27, 1
      %p129 = por %p127, %p128
      %p130 = scmp.ne.s32.totalorder %s121, %s122
      %p131 = scmp.eq.s32.totalorder %s27, 0
      %p132 = por %p130, %p131
      %p133 = scmp.ne.s32.totalorder %s121, %s122
      %p134 = scmp.eq.s32.totalorder %s28, 1
      %p135 = por %p133, %p134
      %p137 = scmp.ne.s32.totalorder %s122, %s136
      %p138 = scmp.eq.s32.totalorder %s28, 0
      %p139 = por %p137, %p138
      %s141 = sadd.s32 %s140, 1
      %p144 = scmp.eq.s32.totalorder %s22, 1
      %p145 = scmp.ne.s32.totalorder %s140, %s142
      %p146 = scmp.eq.s32.totalorder %s22, 0
      %p147 = por %p145, %p146
      %p148 = scmp.ne.s32.totalorder %s140, %s142
      %p149 = scmp.eq.s32.totalorder %s27, 1
      %p150 = por %p148, %p149
      %p151 = scmp.ne.s32.totalorder %s142, %s143
      %p152 = scmp.eq.s32.totalorder %s27, 0
      %p153 = por %p151, %p152
      %p154 = scmp.ne.s32.totalorder %s142, %s143
      %p155 = scmp.eq.s32.totalorder %s28, 1
      %p156 = por %p154, %p155
      %p158 = scmp.ne.s32.totalorder %s143, %s157
      %p159 = scmp.eq.s32.totalorder %s28, 0
      %p160 = por %p158, %p159
      %s162 = sadd.s32 %s161, 1
      %p165 = scmp.eq.s32.totalorder %s22, 1
      %p166 = scmp.ne.s32.totalorder %s161, %s163
      %p167 = scmp.eq.s32.totalorder %s22, 0
      %p168 = por %p166, %p167
      %p169 = scmp.ne.s32.totalorder %s161, %s163
      %p170 = scmp.eq.s32.totalorder %s27, 1
      %p171 = por %p169, %p170
      %p172 = scmp.ne.s32.totalorder %s163, %s164
      %p173 = scmp.eq.s32.totalorder %s27, 0
      %p174 = por %p172, %p173
      %p175 = scmp.ne.s32.totalorder %s163, %s164
      %p176 = scmp.eq.s32.totalorder %s28, 1
      %p177 = por %p175, %p176
      %p179 = scmp.ne.s32.totalorder %s164, %s178
      %p180 = scmp.eq.s32.totalorder %s28, 0
      %p181 = por %p179, %p180
      %s183 = sadd.s32 %s182, 1
      %p186 = scmp.eq.s32.totalorder %s22, 1
      %p187 = scmp.ne.s32.totalorder %s182, %s184
      %p188 = scmp.eq.s32.totalorder %s22, 0
      %p189 = por %p187, %p188
      %p190 = scmp.ne.s32.totalorder %s182, %s184
      %p191 = scmp.eq.s32.totalorder %s27, 1
      %p192 = por %p190, %p191
      %p193 = scmp.ne.s32.totalorder %s184, %s185
      %p194 = scmp.eq.s32.totalorder %s27, 0
      %p195 = por %p193, %p194
      %p196 = scmp.ne.s32.totalorder %s184, %s185
      %p197 = scmp.eq.s32.totalorder %s28, 1
      %p198 = por %p196, %p197
      %p200 = scmp.ne.s32.totalorder %s185, %s199
      %p201 = scmp.eq.s32.totalorder %s28, 0
      %p202 = por %p200, %p201
      %s204 = sadd.s32 %s203, 1
      %p207 = scmp.eq.s32.totalorder %s22, 1
      %p208 = scmp.ne.s32.totalorder %s203, %s205
      %p209 = scmp.eq.s32.totalorder %s22, 0
      %p210 = por %p208, %p209
      %p211 = scmp.ne.s32.totalorder %s203, %s205
      %p212 = scmp.eq.s32.totalorder %s27, 1
      %p213 = por %p211, %p212
      %p214 = scmp.ne.s32.totalorder %s205, %s206
      %p215 = scmp.eq.s32.totalorder %s27, 0
      %p216 = por %p214, %p215
      %p217 = scmp.ne.s32.totalorder %s205, %s206
      %p218 = scmp.eq.s32.totalorder %s28, 1
      %p219 = por %p217, %p218
      %p221 = scmp.ne.s32.totalorder %s206, %s220
      %p222 = scmp.eq.s32.totalorder %s28, 0
      %p223 = por %p221, %p222
      %s225 = sadd.s32 %s224, 1
      %p228 = scmp.eq.s32.totalorder %s22, 1
      %p229 = scmp.ne.s32.totalorder %s224, %s226
      %p230 = scmp.eq.s32.totalorder %s22, 0
      %p231 = por %p229, %p230
      %p232 = scmp.ne.s32.totalorder %s224, %s226
      %p233 = scmp.eq.s32.totalorder %s27, 1
      %p234 = por %p232, %p233
      %p235 = scmp.ne.s32.totalorder %s226, %s227
      %p236 = scmp.eq.s32.totalorder %s27, 0
      %p237 = por %p235, %p236
      %p238 = scmp.ne.s32.totalorder %s226, %s227
      %p239 = scmp.eq.s32.totalorder %s28, 1
      %p240 = por %p238, %p239
      %p242 = scmp.ne.s32.totalorder %s227, %s241
      %p243 = scmp.eq.s32.totalorder %s28, 0
      %p244 = por %p242, %p243
      %s246 = sadd.s32 %s245, 1
      %p249 = scmp.eq.s32.totalorder %s22, 1
      %p250 = scmp.ne.s32.totalorder %s245, %s247
      %p251 = scmp.eq.s32.totalorder %s22, 0
      %p252 = por %p250, %p251
      %p253 = scmp.ne.s32.totalorder %s245, %s247
      %p254 = scmp.eq.s32.totalorder %s27, 1
      %p255 = por %p253, %p254
      %p256 = scmp.ne.s32.totalorder %s247, %s248
      %p257 = scmp.eq.s32.totalorder %s27, 0
      %p258 = por %p256, %p257
      %p259 = scmp.ne.s32.totalorder %s247, %s248
      %p260 = scmp.eq.s32.totalorder %s28, 1
      %p261 = por %p259, %p260
      %p263 = scmp.ne.s32.totalorder %s248, %s262
      %p264 = scmp.eq.s32.totalorder %s28, 0
      %p265 = por %p263, %p264
      %s267 = sadd.s32 %s266, 1
      %p270 = scmp.eq.s32.totalorder %s22, 1
      %p271 = scmp.ne.s32.totalorder %s266, %s268
      %p272 = scmp.eq.s32.totalorder %s22, 0
      %p273 = por %p271, %p272
      %p274 = scmp.ne.s32.totalorder %s266, %s268
      %p275 = scmp.eq.s32.totalorder %s27, 1
      %p276 = por %p274, %p275
      %p277 = scmp.ne.s32.totalorder %s268, %s269
      %p278 = scmp.eq.s32.totalorder %s27, 0
      %p279 = por %p277, %p278
      %p280 = scmp.ne.s32.totalorder %s268, %s269
      %p281 = scmp.eq.s32.totalorder %s28, 1
      %p282 = por %p280, %p281
      %p284 = scmp.ne.s32.totalorder %s269, %s283
      %p285 = scmp.eq.s32.totalorder %s28, 0
      %p286 = por %p284, %p285
      %s288 = sadd.s32 %s287, 1
      %p291 = scmp.eq.s32.totalorder %s22, 1
      %p292 = scmp.ne.s32.totalorder %s287, %s289
      %p293 = scmp.eq.s32.totalorder %s22, 0
      %p294 = por %p292, %p293
      %p295 = scmp.ne.s32.totalorder %s287, %s289
      %p296 = scmp.eq.s32.totalorder %s27, 1
      %p297 = por %p295, %p296
      %p298 = scmp.ne.s32.totalorder %s289, %s290
      %p299 = scmp.eq.s32.totalorder %s27, 0
      %p300 = por %p298, %p299
      %p301 = scmp.ne.s32.totalorder %s289, %s290
      %p302 = scmp.eq.s32.totalorder %s28, 1
      %p303 = por %p301, %p302
      %p305 = scmp.ne.s32.totalorder %s290, %s304
      %p306 = scmp.eq.s32.totalorder %s28, 0
      %p307 = por %p305, %p306
      %s308 = ssub.s32 %s22, %s29
      %p309 = scmp.eq.s32.totalorder %s308, 0
      %s311 = sadd.s32 %s310, 1
      %s312 = scalar_select %p309, %s310, %s311
      %p315 = pneg %p309
      %p316 = scmp.eq.s32.totalorder %s22, 1
      %p317 = por %p315, %p316
      %p318 = scmp.ne.s32.totalorder %s310, %s313
      %p319 = scmp.eq.s32.totalorder %s22, 0
      %p320 = por %p318, %p319
      %p321 = scmp.ne.s32.totalorder %s310, %s313
      %p322 = scmp.eq.s32.totalorder %s27, 1
      %p323 = por %p321, %p322
      %p324 = scmp.ne.s32.totalorder %s313, %s314
      %p325 = scmp.eq.s32.totalorder %s27, 0
      %p326 = por %p324, %p325
      %p327 = scmp.ne.s32.totalorder %s313, %s314
      %p328 = scmp.eq.s32.totalorder %s28, 1
      %p329 = por %p327, %p328
      %p331 = scmp.ne.s32.totalorder %s314, %s330
      %p332 = scmp.eq.s32.totalorder %s28, 0
      %p333 = por %p331, %p332
      %p334 = scmp.le.s32.totalorder 1, %s22
      %p335 = scmp.lt.s32.totalorder %s22, 3
      %p336 = pnand %p334, %p335
      %p337 = pneg %p336
      // Predicated region
      $region9: #{tpu_custom_call.1} parent=5 // pred_check
        _
      $region10: #{tpu_custom_call.1} parent=5 // pred_check_branch
        %339 = sbr.rel (%p336) target = $region12
      $region11: #{tpu_custom_call.1} parent=5 // pred_region
        %s340 = ssub.s32 %s22, 1
        // Predicated region
        $region13: #{tpu_custom_call.1} parent=11 // pred_check
          %p341 = pneg %p69
        $region14: #{tpu_custom_call.1} parent=11 // pred_check_branch
          %343 = sbr.rel (%p341) target = $region16
        $region15: #{tpu_custom_call.1} parent=11 // pred_region
          _
        $region16: #{tpu_custom_call.1} parent=11 // pred_fallthru
          _
        // Predicated region
        $region17: #{tpu_custom_call.1} parent=11 // pred_check
          %p344 = pneg %p90
        $region18: #{tpu_custom_call.1} parent=11 // pred_check_branch
          %346 = sbr.rel (%p344) target = $region20
        $region19: #{tpu_custom_call.1} parent=11 // pred_region
          _
        $region20: #{tpu_custom_call.1} parent=11 // pred_fallthru
          _
        // Predicated region
        $region21: #{tpu_custom_call.1} parent=11 // pred_check
          %p347 = pneg %p111
        $region22: #{tpu_custom_call.1} parent=11 // pred_check_branch
          %349 = sbr.rel (%p347) target = $region24
        $region23: #{tpu_custom_call.1} parent=11 // pred_region
          _
        $region24: #{tpu_custom_call.1} parent=11 // pred_fallthru
          _
        // Predicated region
        $region25: #{tpu_custom_call.1} parent=11 // pred_check
          %p350 = pneg %p132
        $region26: #{tpu_custom_call.1} parent=11 // pred_check_branch
          %352 = sbr.rel (%p350) target = $region28
        $region27: #{tpu_custom_call.1} parent=11 // pred_region
          _
        $region28: #{tpu_custom_call.1} parent=11 // pred_fallthru
          _
        // Predicated region
        $region29: #{tpu_custom_call.1} parent=11 // pred_check
          %p353 = pneg %p153
        $region30: #{tpu_custom_call.1} parent=11 // pred_check_branch
          %355 = sbr.rel (%p353) target = $region32
        $region31: #{tpu_custom_call.1} parent=11 // pred_region
          _
        $region32: #{tpu_custom_call.1} parent=11 // pred_fallthru
          _
        // Predicated region
        $region33: #{tpu_custom_call.1} parent=11 // pred_check
          %p356 = pneg %p174
        $region34: #{tpu_custom_call.1} parent=11 // pred_check_branch
          %358 = sbr.rel (%p356) target = $region36
        $region35: #{tpu_custom_call.1} parent=11 // pred_region
          _
        $region36: #{tpu_custom_call.1} parent=11 // pred_fallthru
          _
        // Predicated region
        $region37: #{tpu_custom_call.1} parent=11 // pred_check
          %p359 = pneg %p195
        $region38: #{tpu_custom_call.1} parent=11 // pred_check_branch
          %361 = sbr.rel (%p359) target = $region40
        $region39: #{tpu_custom_call.1} parent=11 // pred_region
          _
        $region40: #{tpu_custom_call.1} parent=11 // pred_fallthru
          _
        // Predicated region
        $region41: #{tpu_custom_call.1} parent=11 // pred_check
          %p362 = pneg %p216
        $region42: #{tpu_custom_call.1} parent=11 // pred_check_branch
          %364 = sbr.rel (%p362) target = $region44
        $region43: #{tpu_custom_call.1} parent=11 // pred_region
          _
        $region44: #{tpu_custom_call.1} parent=11 // pred_fallthru
          _
        // Predicated region
        $region45: #{tpu_custom_call.1} parent=11 // pred_check
          %p365 = pneg %p237
        $region46: #{tpu_custom_call.1} parent=11 // pred_check_branch
          %367 = sbr.rel (%p365) target = $region48
        $region47: #{tpu_custom_call.1} parent=11 // pred_region
          _
        $region48: #{tpu_custom_call.1} parent=11 // pred_fallthru
          _
        // Predicated region
        $region49: #{tpu_custom_call.1} parent=11 // pred_check
          %p368 = pneg %p258
        $region50: #{tpu_custom_call.1} parent=11 // pred_check_branch
          %370 = sbr.rel (%p368) target = $region52
        $region51: #{tpu_custom_call.1} parent=11 // pred_region
          _
        $region52: #{tpu_custom_call.1} parent=11 // pred_fallthru
          _
        // Predicated region
        $region53: #{tpu_custom_call.1} parent=11 // pred_check
          %p371 = pneg %p279
        $region54: #{tpu_custom_call.1} parent=11 // pred_check_branch
          %373 = sbr.rel (%p371) target = $region56
        $region55: #{tpu_custom_call.1} parent=11 // pred_region
          _
        $region56: #{tpu_custom_call.1} parent=11 // pred_fallthru
          _
        // Predicated region
        $region57: #{tpu_custom_call.1} parent=11 // pred_check
          %p374 = pneg %p300
        $region58: #{tpu_custom_call.1} parent=11 // pred_check_branch
          %376 = sbr.rel (%p374) target = $region60
        $region59: #{tpu_custom_call.1} parent=11 // pred_region
          _
        $region60: #{tpu_custom_call.1} parent=11 // pred_fallthru
          _
      $region12: #{tpu_custom_call.1} parent=5 // pred_fallthru
        _
      %p377 = scmp.lt.s32.totalorder %s22, 2
      // Predicated region
      $region61: #{tpu_custom_call.1} parent=5 // pred_check
        %p378 = pneg %p377
      $region62: #{tpu_custom_call.1} parent=5 // pred_check_branch
        %380 = sbr.rel (%p378) target = $region64
      $region63: #{tpu_custom_call.1} parent=5 // pred_region
        // Predicated region
        $region65: #{tpu_custom_call.1} parent=63 // pred_check
          %p381 = pneg %p42
        $region66: #{tpu_custom_call.1} parent=63 // pred_check_branch
          %383 = sbr.rel (%p381) target = $region68
        $region67: #{tpu_custom_call.1} parent=63 // pred_region
          %p384 = scmp.lt.s32.totalorder %s22, 1
          %s385 = scalar_select %p384, %s22, 1
          %s386 = smul.addr %s385, 2
          %s387 = smul.addr %s386, 8
          %s388 = scalar_lea.vmem %s0, %s387
        $region68: #{tpu_custom_call.1} parent=63 // pred_fallthru
          _
      $region64: #{tpu_custom_call.1} parent=5 // pred_fallthru
        _
      %p389 = scmp.le.s32.totalorder 1, %s22
      %p390 = scmp.lt.s32.totalorder %s22, 3
      %p391 = pnand %p389, %p390
      %p392 = pneg %p391
      // Predicated region
      $region69: #{tpu_custom_call.1} parent=5 // pred_check
        _
      $region70: #{tpu_custom_call.1} parent=5 // pred_check_branch
        %394 = sbr.rel (%p391) target = $region72
      $region71: #{tpu_custom_call.1} parent=5 // pred_region
        %s395 = ssub.s32 %s22, 1
        %p396 = scmp.lt.s32.totalorder %s27, 1
        %s397 = scalar_select %p396, %s27, 1
        %s398 = smul.addr %s397, 2
        %s399 = smul.addr %s398, 8
        %s400 = scalar_lea.vmem %s0, %s399
        %p401 = pneg %p48
        %p402 = pneg %p45
        %p403 = pneg %p69
        %p404 = pneg %p66
        %p405 = pneg %p90
        %p406 = pneg %p87
        %p407 = pneg %p111
        %p408 = pneg %p108
        %p409 = pneg %p132
        %p410 = pneg %p129
        %p411 = pneg %p153
        %p412 = pneg %p150
        %p413 = pneg %p174
        %p414 = pneg %p171
        %p415 = pneg %p195
        %p416 = pneg %p192
        %p417 = pneg %p216
        %p418 = pneg %p213
        %p419 = pneg %p237
        %p420 = pneg %p234
        %p421 = pneg %p258
        %p422 = pneg %p255
        %p423 = pneg %p279
        %p424 = pneg %p276
        %p425 = pneg %p300
        %p426 = pneg %p297
        %p427 = pneg %p326
        %p428 = pneg %p323
        %s429 = sand.u32 %s313, 1
        %s430 = scalar_lea.sflag [#allocation5], %s429
        %s431 = sand.u32 %s313, 1
        %s432 = smul.addr %s431, 64
        %s433 = scalar_lea.vmem [#allocation4], %s432
        %p434 = scmp.lt.s32.totalorder %s27, 1
        %s435 = scalar_select %p434, %s27, 1
        %s436 = smul.addr %s435, 2
        %s437 = smul.addr %s436, 8
        %s438 = scalar_lea.vmem %s0, %s437
        %v439 = vld [vmem:[%s438] sm:$0xff]
        %v440 = vld [vmem:[%s438 + $0x8] sm:$0xff]
        %vm441 = vcmask 261120
        %442 = vst.msk [vmem:[#allocation2] sm:$0xff] %vm441, %v439
        %443 = vst.msk [vmem:[#allocation2 + $0x8] sm:$0xff] %vm441, %v440
        %444 = vst.msk [vmem:[#allocation3] sm:$0xff] %vm441, 0.0
        %445 = vst.msk [vmem:[#allocation3 + $0x8] sm:$0xff] %vm441, 0.0
        %446 = vst.msk [vmem:[#allocation3 + $0x10] sm:$0xff] %vm441, 0.0
        %447 = vst.msk [vmem:[#allocation3 + $0x18] sm:$0xff] %vm441, 0.0
        %448 = vst.msk [vmem:[#allocation3 + $0x20] sm:$0xff] %vm441, 0.0
        %449 = vst.msk [vmem:[#allocation3 + $0x28] sm:$0xff] %vm441, 0.0
        %450 = vst.msk [vmem:[#allocation3 + $0x30] sm:$0xff] %vm441, 0.0
        %451 = vst.msk [vmem:[#allocation3 + $0x38] sm:$0xff] %vm441, 0.0
        %vm452 = vcmask 258048
        %453 = vst.msk [vmem:[#allocation3 + $0x40] sm:$0x1f] %vm452, 0.0
        %v454 = vld [vmem:[#allocation2] sm:$0xff]
        %v455 = vld [vmem:[#allocation2 + $0x8] sm:$0xff]
        %v456 = vld [vmem:[%s1] sm:$0xff]
        %v457 = vld [vmem:[%s1 + $0x8] sm:$0xff]
        %v458 = vld [vmem:[%s1 + $0x10] sm:$0xff]
        %v459 = vld [vmem:[%s1 + $0x18] sm:$0xff]
        %v460 = vld [vmem:[%s7] sm:$0x1]
        %v462 = vperm.slane %v460, 0
        %v465 = vsel %vm441, %v454, 0
        %v468 = vsel %vm441, %v455, 0
        %470 = vmatpush.msra.mxu0 0.0
        %471 = vmatpush.msra.mxu0 0.0
        %472 = vmatpush.msra.mxu0 0.0
        %473 = vmatpush.msra.mxu0 0.0
        %474 = vmatpush.msra.mxu0 0.0
        %475 = vmatpush.msra.mxu0 0.0
        %476 = vmatpush.msra.mxu0 0.0
        %477 = vmatpush.msra.mxu0 0.0
        %478 = vmatpush.msra.mxu0 0.0
        %479 = vmatpush.msra.mxu0 0.0
        %480 = vmatpush.msra.mxu0 0.0
        %481 = vmatpush.msra.mxu0 0.0
        %482 = vmatpush.msra.mxu0 %v459
        %483 = vmatpush.msra.mxu0 %v458
        %484 = vmatpush.msra.mxu0 %v457
        %485 = vmatpush.msra.mxu0 %v456
        %486 = vmatmul.f32.gmra.mxu0 %v465
        %v487 = vpop.f32.mrf.mxu0
        %v488 = vadd.f32 %v462, %v487
        %489 = vmatmul.f32.gmra.mxu0 %v468
        %v490 = vpop.f32.mrf.mxu0
        %v491 = vadd.f32 %v462, %v490
        %492 = vdwg.mxu0
        %493 = vst.msk [vmem:[#allocation3] sm:$0xff] %vm441, %v488
        %494 = vst.msk [vmem:[#allocation3 + $0x8] sm:$0xff] %vm441, %v491
        %495 = vst.msk [vmem:[#allocation2] sm:$0xff] %vm441, %v488
        %496 = vst.msk [vmem:[#allocation2 + $0x8] sm:$0xff] %vm441, %v491
        %v497 = vld [vmem:[#allocation2] sm:$0xff]
        %v498 = vld [vmem:[#allocation2 + $0x8] sm:$0x7f]
        %v499 = vld [vmem:[#allocation2 + $0x1] sm:$0xff]
        %v500 = vld [vmem:[#allocation2 + $0x9] sm:$0x7f]
        %503 = vrot.lane.b32.xlu0 %v499, 32
        %v504 = vpop.permute.xlu0 %503
        %505 = vrot.lane.b32.xlu0 %v500, 32
        %v506 = vpop.permute.xlu0 %505
        %v509 = vsel %vm441, %v497, %v504
        %v510 = vsel %vm441, %v498, %v506
        %v511 = vld [vmem:[%s2] sm:$0xff]
        %v512 = vld [vmem:[%s2 + $0x8] sm:$0xff]
        %v513 = vld [vmem:[%s2 + $0x10] sm:$0xff]
        %v514 = vld [vmem:[%s2 + $0x18] sm:$0xff]
        %v515 = vld [vmem:[%s2 + $0x20] sm:$0xff]
        %v516 = vld [vmem:[%s2 + $0x28] sm:$0xff]
        %v517 = vld [vmem:[%s2 + $0x30] sm:$0xff]
        %v518 = vld [vmem:[%s2 + $0x38] sm:$0xff]
        %v519 = vld [vmem:[%s8] sm:$0x1]
        %v521 = vperm.slane %v519, 0
        %vm523 = vcmask 523264
        %v525 = vsel %vm523, %v509, 0
        %v528 = vsel %vm523, %v510, 0
        %530 = vmatpush.msra.mxu0 0.0
        %531 = vmatpush.msra.mxu0 0.0
        %532 = vmatpush.msra.mxu0 0.0
        %533 = vmatpush.msra.mxu0 0.0
        %534 = vmatpush.msra.mxu0 0.0
        %535 = vmatpush.msra.mxu0 0.0
        %536 = vmatpush.msra.mxu0 0.0
        %537 = vmatpush.msra.mxu0 0.0
        %538 = vmatpush.msra.mxu0 %v518
        %539 = vmatpush.msra.mxu0 %v517
        %540 = vmatpush.msra.mxu0 %v516
        %541 = vmatpush.msra.mxu0 %v515
        %542 = vmatpush.msra.mxu0 %v514
        %543 = vmatpush.msra.mxu0 %v513
        %544 = vmatpush.msra.mxu0 %v512
        %545 = vmatpush.msra.mxu0 %v511
        %546 = vmatmul.f32.gmra.mxu0 %v525
        %v547 = vpop.f32.mrf.mxu0
        %v548 = vadd.f32 %v521, %v547
        %549 = vmatmul.f32.gmra.mxu0 %v528
        %v550 = vpop.f32.mrf.mxu0
        %v551 = vadd.f32 %v521, %v550
        %552 = vdwg.mxu0
        %553 = vst.msk [vmem:[#allocation3 + $0x10] sm:$0xff] %vm441, %v548
        %vm554 = vcmask 260096
        %555 = vst.msk [vmem:[#allocation3 + $0x18] sm:$0x7f] %vm554, %v551
        %556 = vst.msk [vmem:[#allocation2] sm:$0xff] %vm441, %v548
        %557 = vst.msk [vmem:[#allocation2 + $0x8] sm:$0x7f] %vm554, %v551
        %v558 = vld [vmem:[#allocation2] sm:$0xff]
        %v559 = vld [vmem:[#allocation2 + $0x8] sm:$0x3f]
        %v560 = vld [vmem:[#allocation2 + $0x1] sm:$0xff]
        %v561 = vld [vmem:[#allocation2 + $0x9] sm:$0x3f]
        %564 = vrot.lane.b32.xlu0 %v560, 32
        %v565 = vpop.permute.xlu0 %564
        %566 = vrot.lane.b32.xlu0 %v561, 32
        %v567 = vpop.permute.xlu0 %566
        %v570 = vsel %vm441, %v558, %v565
        %v571 = vsel %vm441, %v559, %v567
        %v572 = vld [vmem:[%s3] sm:$0xff]
        %v573 = vld [vmem:[%s3 + $0x8] sm:$0xff]
        %v574 = vld [vmem:[%s3 + $0x10] sm:$0xff]
        %v575 = vld [vmem:[%s3 + $0x18] sm:$0xff]
        %v576 = vld [vmem:[%s3 + $0x20] sm:$0xff]
        %v577 = vld [vmem:[%s3 + $0x28] sm:$0xff]
        %v578 = vld [vmem:[%s3 + $0x30] sm:$0xff]
        %v579 = vld [vmem:[%s3 + $0x38] sm:$0xff]
        %v580 = vld [vmem:[%s9] sm:$0x1]
        %v582 = vperm.slane %v580, 0
        %v585 = vsel %vm523, %v570, 0
        %v588 = vsel %vm523, %v571, 0
        %590 = vmatpush.msra.mxu0 0.0
        %591 = vmatpush.msra.mxu0 0.0
        %592 = vmatpush.msra.mxu0 0.0
        %593 = vmatpush.msra.mxu0 0.0
        %594 = vmatpush.msra.mxu0 0.0
        %595 = vmatpush.msra.mxu0 0.0
        %596 = vmatpush.msra.mxu0 0.0
        %597 = vmatpush.msra.mxu0 0.0
        %598 = vmatpush.msra.mxu0 %v579
        %599 = vmatpush.msra.mxu0 %v578
        %600 = vmatpush.msra.mxu0 %v577
        %601 = vmatpush.msra.mxu0 %v576
        %602 = vmatpush.msra.mxu0 %v575
        %603 = vmatpush.msra.mxu0 %v574
        %604 = vmatpush.msra.mxu0 %v573
        %605 = vmatpush.msra.mxu0 %v572
        %606 = vmatmul.f32.gmra.mxu0 %v585
        %v607 = vpop.f32.mrf.mxu0
        %v608 = vadd.f32 %v582, %v607
        %609 = vmatmul.f32.gmra.mxu0 %v588
        %v610 = vpop.f32.mrf.mxu0
        %v611 = vadd.f32 %v582, %v610
        %612 = vdwg.mxu0
        %613 = vst.msk [vmem:[#allocation3 + $0x1f] sm:$0xff] %vm441, %v608
        %vm614 = vcmask 259072
        %615 = vst.msk [vmem:[#allocation3 + $0x27] sm:$0x3f] %vm614, %v611
        %616 = vst.msk [vmem:[#allocation2] sm:$0xff] %vm441, %v608
        %617 = vst.msk [vmem:[#allocation2 + $0x8] sm:$0x3f] %vm614, %v611
        %v618 = vld [vmem:[#allocation2] sm:$0xff]
        %v619 = vld [vmem:[#allocation2 + $0x8] sm:$0x1f]
        %v620 = vld [vmem:[#allocation2 + $0x1] sm:$0xff]
        %v621 = vld [vmem:[#allocation2 + $0x9] sm:$0x1f]
        %624 = vrot.lane.b32.xlu0 %v620, 32
        %v625 = vpop.permute.xlu0 %624
        %626 = vrot.lane.b32.xlu0 %v621, 32
        %v627 = vpop.permute.xlu0 %626
        %v630 = vsel %vm441, %v618, %v625
        %v631 = vsel %vm441, %v619, %v627
        %v632 = vld [vmem:[%s4] sm:$0xff]
        %v633 = vld [vmem:[%s4 + $0x8] sm:$0xff]
        %v634 = vld [vmem:[%s4 + $0x10] sm:$0xff]
        %v635 = vld [vmem:[%s4 + $0x18] sm:$0xff]
        %v636 = vld [vmem:[%s4 + $0x20] sm:$0xff]
        %v637 = vld [vmem:[%s4 + $0x28] sm:$0xff]
        %v638 = vld [vmem:[%s4 + $0x30] sm:$0xff]
        %v639 = vld [vmem:[%s4 + $0x38] sm:$0xff]
        %v640 = vld [vmem:[%s10] sm:$0x1]
        %v642 = vperm.slane %v640, 0
        %v645 = vsel %vm523, %v630, 0
        %v648 = vsel %vm523, %v631, 0
        %650 = vmatpush.msra.mxu0 0.0
        %651 = vmatpush.msra.mxu0 0.0
        %652 = vmatpush.msra.mxu0 0.0
        %653 = vmatpush.msra.mxu0 0.0
        %654 = vmatpush.msra.mxu0 0.0
        %655 = vmatpush.msra.mxu0 0.0
        %656 = vmatpush.msra.mxu0 0.0
        %657 = vmatpush.msra.mxu0 0.0
        %658 = vmatpush.msra.mxu0 %v639
        %659 = vmatpush.msra.mxu0 %v638
        %660 = vmatpush.msra.mxu0 %v637
        %661 = vmatpush.msra.mxu0 %v636
        %662 = vmatpush.msra.mxu0 %v635
        %663 = vmatpush.msra.mxu0 %v634
        %664 = vmatpush.msra.mxu0 %v633
        %665 = vmatpush.msra.mxu0 %v632
        %666 = vmatmul.f32.gmra.mxu0 %v645
        %v667 = vpop.f32.mrf.mxu0
        %v668 = vadd.f32 %v642, %v667
        %669 = vmatmul.f32.gmra.mxu0 %v648
        %v670 = vpop.f32.mrf.mxu0
        %v671 = vadd.f32 %v642, %v670
        %672 = vdwg.mxu0
        %673 = vst.msk [vmem:[#allocation3 + $0x2d] sm:$0xff] %vm441, %v668
        %674 = vst.msk [vmem:[#allocation3 + $0x35] sm:$0x1f] %vm452, %v671
        %675 = vst.msk [vmem:[#allocation2] sm:$0xff] %vm441, %v668
        %676 = vst.msk [vmem:[#allocation2 + $0x8] sm:$0x1f] %vm452, %v671
        %v677 = vld [vmem:[#allocation2] ss:$2 sm:$0x3f]
        %s678 = scalar_lea.vmem [#allocation2], 1
        %v679 = vld [vmem:[%s678] ss:$2 sm:$0x3f]
        %s680 = scalar_lea.vmem [#allocation2], 2
        %v681 = vld [vmem:[%s680] ss:$2 sm:$0x3f]
        %683 = vrot.lane.b32.xlu0 %v679, 32
        %v684 = vpop.permute.xlu0 %683
        %687 = vrot.lane.b32.xlu0 %v681, 64
        %v688 = vpop.permute.xlu0 %687
        %v690 = vsel %vm441, %v677, %v684
        %v691 = vsel %vm523, %v690, %v688
        %v692 = vld [vmem:[%s5] sm:$0xff]
        %v693 = vld [vmem:[%s5 + $0x8] sm:$0xff]
        %v694 = vld [vmem:[%s5 + $0x10] sm:$0xff]
        %v695 = vld [vmem:[%s5 + $0x18] sm:$0xff]
        %v696 = vld [vmem:[%s5 + $0x20] sm:$0xff]
        %v697 = vld [vmem:[%s5 + $0x28] sm:$0xff]
        %v698 = vld [vmem:[%s5 + $0x30] sm:$0xff]
        %v699 = vld [vmem:[%s5 + $0x38] sm:$0xff]
        %v700 = vld [vmem:[%s5 + $0x40] sm:$0xff]
        %v701 = vld [vmem:[%s5 + $0x48] sm:$0xff]
        %v702 = vld [vmem:[%s5 + $0x50] sm:$0xff]
        %v703 = vld [vmem:[%s5 + $0x58] sm:$0xff]
        %v704 = vld [vmem:[%s11] sm:$0x1]
        %v706 = vperm.slane %v704, 0
        %vm708 = vcmask 785408
        %v710 = vsel %vm708, %v691, 0
        %712 = vmatpush.msra.mxu0 0.0
        %713 = vmatpush.msra.mxu0 0.0
        %714 = vmatpush.msra.mxu0 0.0
        %715 = vmatpush.msra.mxu0 0.0
        %716 = vmatpush.msra.mxu0 %v703
        %717 = vmatpush.msra.mxu0 %v702
        %718 = vmatpush.msra.mxu0 %v701
        %719 = vmatpush.msra.mxu0 %v700
        %720 = vmatpush.msra.mxu0 %v699
        %721 = vmatpush.msra.mxu0 %v698
        %722 = vmatpush.msra.mxu0 %v697
        %723 = vmatpush.msra.mxu0 %v696
        %724 = vmatpush.msra.mxu0 %v695
        %725 = vmatpush.msra.mxu0 %v694
        %726 = vmatpush.msra.mxu0 %v693
        %727 = vmatpush.msra.mxu0 %v692
        %728 = vmatmul.f32.gmra.mxu0 %v710
        %v729 = vpop.f32.mrf.mxu0
        %v730 = vadd.f32 %v706, %v729
        %731 = vdwg.mxu0
        %732 = vst.msk [vmem:[#allocation3 + $0x3a] sm:$0x3f] %vm614, %v730
        %733 = vst.msk [vmem:[#allocation2] sm:$0x3f] %vm614, %v730
        %v734 = vld [vmem:[#allocation2] sm:$0x1f]
        %v735 = vld [vmem:[#allocation2 + $0x1] sm:$0x1f]
        %737 = vrot.lane.b32.xlu0 %v735, 32
        %v738 = vpop.permute.xlu0 %737
        %v740 = vsel %vm441, %v734, %v738
        %v741 = vld [vmem:[%s6] sm:$0xff]
        %v742 = vld [vmem:[%s6 + $0x8] sm:$0xff]
        %v743 = vld [vmem:[%s6 + $0x10] sm:$0xff]
        %v744 = vld [vmem:[%s6 + $0x18] sm:$0xff]
        %v745 = vld [vmem:[%s6 + $0x20] sm:$0xff]
        %v746 = vld [vmem:[%s6 + $0x28] sm:$0xff]
        %v747 = vld [vmem:[%s6 + $0x30] sm:$0xff]
        %v748 = vld [vmem:[%s6 + $0x38] sm:$0xff]
        %v749 = vld [vmem:[%s12] sm:$0x1]
        %v751 = vperm.slane %v749, 0
        %v754 = vsel %vm523, %v740, 0
        %756 = vmatpush.msra.mxu0 0.0
        %757 = vmatpush.msra.mxu0 0.0
        %758 = vmatpush.msra.mxu0 0.0
        %759 = vmatpush.msra.mxu0 0.0
        %760 = vmatpush.msra.mxu0 0.0
        %761 = vmatpush.msra.mxu0 0.0
        %762 = vmatpush.msra.mxu0 0.0
        %763 = vmatpush.msra.mxu0 0.0
        %764 = vmatpush.msra.mxu0 %v748
        %765 = vmatpush.msra.mxu0 %v747
        %766 = vmatpush.msra.mxu0 %v746
        %767 = vmatpush.msra.mxu0 %v745
        %768 = vmatpush.msra.mxu0 %v744
        %769 = vmatpush.msra.mxu0 %v743
        %770 = vmatpush.msra.mxu0 %v742
        %771 = vmatpush.msra.mxu0 %v741
        %772 = vmatmul.f32.gmra.mxu0 %v754
        %v773 = vpop.f32.mrf.mxu0
        %v774 = vadd.f32 %v751, %v773
        %775 = vdwg.mxu0
        %776 = vst.msk [vmem:[#allocation3 + $0x40] sm:$0x1f] %vm452, %v774
        %v777 = vlaneseq
        %v778 = vshrl.u32 %v777, 7
        %v779 = vadd.s32 %v778, 8
        %v780 = vadd.s32 %v778, 16
        %v781 = vadd.s32 %v778, 24
        %v782 = vadd.s32 %v778, 32
        %v783 = vadd.s32 %v778, 40
        %v784 = vadd.s32 %v778, 48
        %v785 = vadd.s32 %v778, 56
        %v786 = vadd.s32 %v778, 64
        %v787 = vlaneseq
        %v788 = vand.u32 %v787, 127
        %v789 = vadd.s32 %v788, 128
        %v790 = vmul.u32 %v778, 17
        %v791 = vmul.u32 %v779, 17
        %v792 = vmul.u32 %v780, 17
        %v793 = vmul.u32 %v781, 17
        %v794 = vmul.u32 %v782, 17
        %v795 = vmul.u32 %v783, 17
        %v796 = vmul.u32 %v784, 17
        %v797 = vmul.u32 %v785, 17
        %v798 = vmul.u32 %v786, 17
        %vm799 = vcmp.ge.s32.totalorder %v778, 0
        %vm800 = vcmp.ge.s32.totalorder %v779, 0
        %vm801 = vcmp.ge.s32.totalorder %v780, 0
        %vm802 = vcmp.ge.s32.totalorder %v781, 0
        %vm803 = vcmp.ge.s32.totalorder %v782, 0
        %vm804 = vcmp.ge.s32.totalorder %v783, 0
        %vm805 = vcmp.ge.s32.totalorder %v784, 0
        %vm806 = vcmp.ge.s32.totalorder %v785, 0
        %vm807 = vcmp.ge.s32.totalorder %v786, 0
        %vm808 = vcmp.lt.s32.totalorder %v778, 16
        %vm809 = vcmp.lt.s32.totalorder %v779, 16
        %vm810 = vcmp.lt.s32.totalorder %v780, 16
        %vm811 = vcmp.lt.s32.totalorder %v781, 16
        %vm812 = vcmp.lt.s32.totalorder %v782, 16
        %vm813 = vcmp.lt.s32.totalorder %v783, 16
        %vm814 = vcmp.lt.s32.totalorder %v784, 16
        %vm815 = vcmp.lt.s32.totalorder %v785, 16
        %vm816 = vcmp.lt.s32.totalorder %v786, 16
        %vm817 = vmand %vm799, %vm808
        %vm818 = vmand %vm800, %vm809
        %vm819 = vmand %vm801, %vm810
        %vm820 = vmand %vm802, %vm811
        %vm821 = vmand %vm803, %vm812
        %vm822 = vmand %vm804, %vm813
        %vm823 = vmand %vm805, %vm814
        %vm824 = vmand %vm806, %vm815
        %vm825 = vmand %vm807, %vm816
        %vm826 = vcmp.eq.s32.totalorder %v788, %v790
        %vm827 = vcmp.eq.s32.totalorder %v789, %v790
        %vm828 = vcmp.eq.s32.totalorder %v788, %v791
        %vm829 = vcmp.eq.s32.totalorder %v789, %v791
        %vm830 = vcmp.eq.s32.totalorder %v788, %v792
        %vm831 = vcmp.eq.s32.totalorder %v789, %v792
        %vm832 = vcmp.eq.s32.totalorder %v788, %v793
        %vm833 = vcmp.eq.s32.totalorder %v789, %v793
        %vm834 = vcmp.eq.s32.totalorder %v788, %v794
        %vm835 = vcmp.eq.s32.totalorder %v789, %v794
        %vm836 = vcmp.eq.s32.totalorder %v788, %v795
        %vm837 = vcmp.eq.s32.totalorder %v789, %v795
        %vm838 = vcmp.eq.s32.totalorder %v788, %v796
        %vm839 = vcmp.eq.s32.totalorder %v789, %v796
        %vm840 = vcmp.eq.s32.totalorder %v788, %v797
        %vm841 = vcmp.eq.s32.totalorder %v789, %v797
        %vm842 = vcmp.eq.s32.totalorder %v788, %v798
        %vm843 = vcmp.eq.s32.totalorder %v789, %v798
        %vm844 = vmand %vm817, %vm826
        %vm845 = vmand %vm817, %vm827
        %vm846 = vmand %vm818, %vm828
        %vm847 = vmand %vm818, %vm829
        %vm848 = vmand %vm819, %vm830
        %vm849 = vmand %vm819, %vm831
        %vm850 = vmand %vm820, %vm832
        %vm851 = vmand %vm820, %vm833
        %vm852 = vmand %vm821, %vm834
        %vm853 = vmand %vm821, %vm835
        %vm854 = vmand %vm822, %vm836
        %vm855 = vmand %vm822, %vm837
        %vm856 = vmand %vm823, %vm838
        %vm857 = vmand %vm823, %vm839
        %vm858 = vmand %vm824, %vm840
        %vm859 = vmand %vm824, %vm841
        %vm860 = vmand %vm825, %vm842
        %vm861 = vmand %vm825, %vm843
        %v862 = vsel %vm844, 1.0, 0.0
        %v863 = vsel %vm845, 1.0, 0.0
        %v864 = vsel %vm846, 1.0, 0.0
        %v865 = vsel %vm847, 1.0, 0.0
        %v866 = vsel %vm848, 1.0, 0.0
        %v867 = vsel %vm849, 1.0, 0.0
        %v868 = vsel %vm850, 1.0, 0.0
        %v869 = vsel %vm851, 1.0, 0.0
        %v870 = vsel %vm852, 1.0, 0.0
        %v871 = vsel %vm853, 1.0, 0.0
        %v872 = vsel %vm854, 1.0, 0.0
        %v873 = vsel %vm855, 1.0, 0.0
        %v874 = vsel %vm856, 1.0, 0.0
        %v875 = vsel %vm857, 1.0, 0.0
        %v876 = vsel %vm858, 1.0, 0.0
        %v877 = vsel %vm859, 1.0, 0.0
        %v878 = vsel %vm860, 1.0, 0.0
        %v879 = vsel %vm861, 1.0, 0.0
        %v880 = vsub.s32 %v778, 16
        %v881 = vsub.s32 %v779, 16
        %v882 = vsub.s32 %v781, 16
        %v883 = vsub.s32 %v782, 16
        %v884 = vsub.s32 %v783, 16
        %v885 = vsub.s32 %v784, 16
        %v886 = vsub.s32 %v785, 16
        %v887 = vsub.s32 %v786, 16
        %v888 = vmul.u32 %v880, 17
        %v889 = vmul.u32 %v881, 17
        %v890 = vmul.u32 %v882, 17
        %v891 = vmul.u32 %v883, 17
        %v892 = vmul.u32 %v884, 17
        %v893 = vmul.u32 %v885, 17
        %v894 = vmul.u32 %v886, 17
        %v895 = vmul.u32 %v887, 17
        %v896 = vadd.s32 %v888, 1
        %v897 = vadd.s32 %v889, 1
        %v898 = vadd.s32 %v790, 1
        %v899 = vadd.s32 %v890, 1
        %v900 = vadd.s32 %v891, 1
        %v901 = vadd.s32 %v892, 1
        %v902 = vadd.s32 %v893, 1
        %v903 = vadd.s32 %v894, 1
        %v904 = vadd.s32 %v895, 1
        %vm905 = vcmp.ge.s32.totalorder %v778, 16
        %vm906 = vcmp.ge.s32.totalorder %v779, 16
        %vm907 = vcmp.ge.s32.totalorder %v780, 16
        %vm908 = vcmp.ge.s32.totalorder %v781, 16
        %vm909 = vcmp.ge.s32.totalorder %v782, 16
        %vm910 = vcmp.ge.s32.totalorder %v783, 16
        %vm911 = vcmp.ge.s32.totalorder %v784, 16
        %vm912 = vcmp.ge.s32.totalorder %v785, 16
        %vm913 = vcmp.ge.s32.totalorder %v786, 16
        %vm914 = vcmp.lt.s32.totalorder %v778, 31
        %vm915 = vcmp.lt.s32.totalorder %v779, 31
        %vm916 = vcmp.lt.s32.totalorder %v780, 31
        %vm917 = vcmp.lt.s32.totalorder %v781, 31
        %vm918 = vcmp.lt.s32.totalorder %v782, 31
        %vm919 = vcmp.lt.s32.totalorder %v783, 31
        %vm920 = vcmp.lt.s32.totalorder %v784, 31
        %vm921 = vcmp.lt.s32.totalorder %v785, 31
        %vm922 = vcmp.lt.s32.totalorder %v786, 31
        %vm923 = vmand %vm905, %vm914
        %vm924 = vmand %vm906, %vm915
        %vm925 = vmand %vm907, %vm916
        %vm926 = vmand %vm908, %vm917
        %vm927 = vmand %vm909, %vm918
        %vm928 = vmand %vm910, %vm919
        %vm929 = vmand %vm911, %vm920
        %vm930 = vmand %vm912, %vm921
        %vm931 = vmand %vm913, %vm922
        %vm932 = vcmp.eq.s32.totalorder %v788, %v896
        %vm933 = vcmp.eq.s32.totalorder %v789, %v896
        %vm934 = vcmp.eq.s32.totalorder %v788, %v897
        %vm935 = vcmp.eq.s32.totalorder %v789, %v897
        %vm936 = vcmp.eq.s32.totalorder %v788, %v898
        %vm937 = vcmp.eq.s32.totalorder %v789, %v898
        %vm938 = vcmp.eq.s32.totalorder %v788, %v899
        %vm939 = vcmp.eq.s32.totalorder %v789, %v899
        %vm940 = vcmp.eq.s32.totalorder %v788, %v900
        %vm941 = vcmp.eq.s32.totalorder %v789, %v900
        %vm942 = vcmp.eq.s32.totalorder %v788, %v901
        %vm943 = vcmp.eq.s32.totalorder %v789, %v901
        %vm944 = vcmp.eq.s32.totalorder %v788, %v902
        %vm945 = vcmp.eq.s32.totalorder %v789, %v902
        %vm946 = vcmp.eq.s32.totalorder %v788, %v903
        %vm947 = vcmp.eq.s32.totalorder %v789, %v903
        %vm948 = vcmp.eq.s32.totalorder %v788, %v904
        %vm949 = vcmp.eq.s32.totalorder %v789, %v904
        %vm950 = vmand %vm923, %vm932
        %vm951 = vmand %vm923, %vm933
        %vm952 = vmand %vm924, %vm934
        %vm953 = vmand %vm924, %vm935
        %vm954 = vmand %vm925, %vm936
        %vm955 = vmand %vm925, %vm937
        %vm956 = vmand %vm926, %vm938
        %vm957 = vmand %vm926, %vm939
        %vm958 = vmand %vm927, %vm940
        %vm959 = vmand %vm927, %vm941
        %vm960 = vmand %vm928, %vm942
        %vm961 = vmand %vm928, %vm943
        %vm962 = vmand %vm929, %vm944
        %vm963 = vmand %vm929, %vm945
        %vm964 = vmand %vm930, %vm946
        %vm965 = vmand %vm930, %vm947
        %vm966 = vmand %vm931, %vm948
        %vm967 = vmand %vm931, %vm949
        %v968 = vsel %vm950, 1.0, %v862
        %v969 = vsel %vm951, 1.0, %v863
        %v970 = vsel %vm952, 1.0, %v864
        %v971 = vsel %vm953, 1.0, %v865
        %v972 = vsel %vm954, 1.0, %v866
        %v973 = vsel %vm955, 1.0, %v867
        %v974 = vsel %vm956, 1.0, %v868
        %v975 = vsel %vm957, 1.0, %v869
        %v976 = vsel %vm958, 1.0, %v870
        %v977 = vsel %vm959, 1.0, %v871
        %v978 = vsel %vm960, 1.0, %v872
        %v979 = vsel %vm961, 1.0, %v873
        %v980 = vsel %vm962, 1.0, %v874
        %v981 = vsel %vm963, 1.0, %v875
        %v982 = vsel %vm964, 1.0, %v876
        %v983 = vsel %vm965, 1.0, %v877
        %v984 = vsel %vm966, 1.0, %v878
        %v985 = vsel %vm967, 1.0, %v879
        %v986 = vsub.s32 %v778, 31
        %v987 = vsub.s32 %v779, 31
        %v988 = vsub.s32 %v780, 31
        %v989 = vsub.s32 %v781, 31
        %v990 = vsub.s32 %v782, 31
        %v991 = vsub.s32 %v783, 31
        %v992 = vsub.s32 %v784, 31
        %v993 = vsub.s32 %v785, 31
        %v994 = vsub.s32 %v786, 31
        %v995 = vmul.u32 %v986, 17
        %v996 = vmul.u32 %v987, 17
        %v997 = vmul.u32 %v988, 17
        %v998 = vmul.u32 %v989, 17
        %v999 = vmul.u32 %v990, 17
        %v1000 = vmul.u32 %v991, 17
        %v1001 = vmul.u32 %v992, 17
        %v1002 = vmul.u32 %v993, 17
        %v1003 = vmul.u32 %v994, 17
        %v1004 = vadd.s32 %v995, 2
        %v1005 = vadd.s32 %v996, 2
        %v1006 = vadd.s32 %v997, 2
        %v1007 = vadd.s32 %v998, 2
        %v1008 = vadd.s32 %v999, 2
        %v1009 = vadd.s32 %v1000, 2
        %v1010 = vadd.s32 %v1001, 2
        %v1011 = vadd.s32 %v1002, 2
        %v1012 = vadd.s32 %v1003, 2
        %vm1013 = vcmp.ge.s32.totalorder %v778, 31
        %vm1014 = vcmp.ge.s32.totalorder %v779, 31
        %vm1015 = vcmp.ge.s32.totalorder %v780, 31
        %vm1016 = vcmp.ge.s32.totalorder %v781, 31
        %vm1017 = vcmp.ge.s32.totalorder %v782, 31
        %vm1018 = vcmp.ge.s32.totalorder %v783, 31
        %vm1019 = vcmp.ge.s32.totalorder %v784, 31
        %vm1020 = vcmp.ge.s32.totalorder %v785, 31
        %vm1021 = vcmp.ge.s32.totalorder %v786, 31
        %vm1022 = vcmp.lt.s32.totalorder %v778, 45
        %vm1023 = vcmp.lt.s32.totalorder %v779, 45
        %vm1024 = vcmp.lt.s32.totalorder %v780, 45
        %vm1025 = vcmp.lt.s32.totalorder %v781, 45
        %vm1026 = vcmp.lt.s32.totalorder %v782, 45
        %vm1027 = vcmp.lt.s32.totalorder %v783, 45
        %vm1028 = vcmp.lt.s32.totalorder %v784, 45
        %vm1029 = vcmp.lt.s32.totalorder %v785, 45
        %vm1030 = vcmp.lt.s32.totalorder %v786, 45
        %vm1031 = vmand %vm1013, %vm1022
        %vm1032 = vmand %vm1014, %vm1023
        %vm1033 = vmand %vm1015, %vm1024
        %vm1034 = vmand %vm1016, %vm1025
        %vm1035 = vmand %vm1017, %vm1026
        %vm1036 = vmand %vm1018, %vm1027
        %vm1037 = vmand %vm1019, %vm1028
        %vm1038 = vmand %vm1020, %vm1029
        %vm1039 = vmand %vm1021, %vm1030
        %vm1040 = vcmp.eq.s32.totalorder %v788, %v1004
        %vm1041 = vcmp.eq.s32.totalorder %v789, %v1004
        %vm1042 = vcmp.eq.s32.totalorder %v788, %v1005
        %vm1043 = vcmp.eq.s32.totalorder %v789, %v1005
        %vm1044 = vcmp.eq.s32.totalorder %v788, %v1006
        %vm1045 = vcmp.eq.s32.totalorder %v789, %v1006
        %vm1046 = vcmp.eq.s32.totalorder %v788, %v1007
        %vm1047 = vcmp.eq.s32.totalorder %v789, %v1007
        %vm1048 = vcmp.eq.s32.totalorder %v788, %v1008
        %vm1049 = vcmp.eq.s32.totalorder %v789, %v1008
        %vm1050 = vcmp.eq.s32.totalorder %v788, %v1009
        %vm1051 = vcmp.eq.s32.totalorder %v789, %v1009
        %vm1052 = vcmp.eq.s32.totalorder %v788, %v1010
        %vm1053 = vcmp.eq.s32.totalorder %v789, %v1010
        %vm1054 = vcmp.eq.s32.totalorder %v788, %v1011
        %vm1055 = vcmp.eq.s32.totalorder %v789, %v1011
        %vm1056 = vcmp.eq.s32.totalorder %v788, %v1012
        %vm1057 = vcmp.eq.s32.totalorder %v789, %v1012
        %vm1058 = vmand %vm1031, %vm1040
        %vm1059 = vmand %vm1031, %vm1041
        %vm1060 = vmand %vm1032, %vm1042
        %vm1061 = vmand %vm1032, %vm1043
        %vm1062 = vmand %vm1033, %vm1044
        %vm1063 = vmand %vm1033, %vm1045
        %vm1064 = vmand %vm1034, %vm1046
        %vm1065 = vmand %vm1034, %vm1047
        %vm1066 = vmand %vm1035, %vm1048
        %vm1067 = vmand %vm1035, %vm1049
        %vm1068 = vmand %vm1036, %vm1050
        %vm1069 = vmand %vm1036, %vm1051
        %vm1070 = vmand %vm1037, %vm1052
        %vm1071 = vmand %vm1037, %vm1053
        %vm1072 = vmand %vm1038, %vm1054
        %vm1073 = vmand %vm1038, %vm1055
        %vm1074 = vmand %vm1039, %vm1056
        %vm1075 = vmand %vm1039, %vm1057
        %v1076 = vsel %vm1058, 1.0, %v968
        %v1077 = vsel %vm1059, 1.0, %v969
        %v1078 = vsel %vm1060, 1.0, %v970
        %v1079 = vsel %vm1061, 1.0, %v971
        %v1080 = vsel %vm1062, 1.0, %v972
        %v1081 = vsel %vm1063, 1.0, %v973
        %v1082 = vsel %vm1064, 1.0, %v974
        %v1083 = vsel %vm1065, 1.0, %v975
        %v1084 = vsel %vm1066, 1.0, %v976
        %v1085 = vsel %vm1067, 1.0, %v977
        %v1086 = vsel %vm1068, 1.0, %v978
        %v1087 = vsel %vm1069, 1.0, %v979
        %v1088 = vsel %vm1070, 1.0, %v980
        %v1089 = vsel %vm1071, 1.0, %v981
        %v1090 = vsel %vm1072, 1.0, %v982
        %v1091 = vsel %vm1073, 1.0, %v983
        %v1092 = vsel %vm1074, 1.0, %v984
        %v1093 = vsel %vm1075, 1.0, %v985
        %v1094 = vsub.s32 %v778, 45
        %v1095 = vsub.s32 %v779, 45
        %v1096 = vsub.s32 %v780, 45
        %v1097 = vsub.s32 %v781, 45
        %v1098 = vsub.s32 %v782, 45
        %v1099 = vsub.s32 %v783, 45
        %v1100 = vsub.s32 %v784, 45
        %v1101 = vsub.s32 %v785, 45
        %v1102 = vsub.s32 %v786, 45
        %v1103 = vmul.u32 %v1094, 17
        %v1104 = vmul.u32 %v1095, 17
        %v1105 = vmul.u32 %v1096, 17
        %v1106 = vmul.u32 %v1097, 17
        %v1107 = vmul.u32 %v1098, 17
        %v1108 = vmul.u32 %v1099, 17
        %v1109 = vmul.u32 %v1100, 17
        %v1110 = vmul.u32 %v1101, 17
        %v1111 = vmul.u32 %v1102, 17
        %v1112 = vadd.s32 %v1103, 3
        %v1113 = vadd.s32 %v1104, 3
        %v1114 = vadd.s32 %v1105, 3
        %v1115 = vadd.s32 %v1106, 3
        %v1116 = vadd.s32 %v1107, 3
        %v1117 = vadd.s32 %v1108, 3
        %v1118 = vadd.s32 %v1109, 3
        %v1119 = vadd.s32 %v1110, 3
        %v1120 = vadd.s32 %v1111, 3
        %vm1121 = vcmp.ge.s32.totalorder %v778, 45
        %vm1122 = vcmp.ge.s32.totalorder %v779, 45
        %vm1123 = vcmp.ge.s32.totalorder %v780, 45
        %vm1124 = vcmp.ge.s32.totalorder %v781, 45
        %vm1125 = vcmp.ge.s32.totalorder %v782, 45
        %vm1126 = vcmp.ge.s32.totalorder %v783, 45
        %vm1127 = vcmp.ge.s32.totalorder %v784, 45
        %vm1128 = vcmp.ge.s32.totalorder %v785, 45
        %vm1129 = vcmp.ge.s32.totalorder %v786, 45
        %vm1130 = vcmp.lt.s32.totalorder %v778, 58
        %vm1131 = vcmp.lt.s32.totalorder %v779, 58
        %vm1132 = vcmp.lt.s32.totalorder %v780, 58
        %vm1133 = vcmp.lt.s32.totalorder %v781, 58
        %vm1134 = vcmp.lt.s32.totalorder %v782, 58
        %vm1135 = vcmp.lt.s32.totalorder %v783, 58
        %vm1136 = vcmp.lt.s32.totalorder %v784, 58
        %vm1137 = vcmp.lt.s32.totalorder %v785, 58
        %vm1138 = vcmp.lt.s32.totalorder %v786, 58
        %vm1139 = vmand %vm1121, %vm1130
        %vm1140 = vmand %vm1122, %vm1131
        %vm1141 = vmand %vm1123, %vm1132
        %vm1142 = vmand %vm1124, %vm1133
        %vm1143 = vmand %vm1125, %vm1134
        %vm1144 = vmand %vm1126, %vm1135
        %vm1145 = vmand %vm1127, %vm1136
        %vm1146 = vmand %vm1128, %vm1137
        %vm1147 = vmand %vm1129, %vm1138
        %vm1148 = vcmp.eq.s32.totalorder %v788, %v1112
        %vm1149 = vcmp.eq.s32.totalorder %v789, %v1112
        %vm1150 = vcmp.eq.s32.totalorder %v788, %v1113
        %vm1151 = vcmp.eq.s32.totalorder %v789, %v1113
        %vm1152 = vcmp.eq.s32.totalorder %v788, %v1114
        %vm1153 = vcmp.eq.s32.totalorder %v789, %v1114
        %vm1154 = vcmp.eq.s32.totalorder %v788, %v1115
        %vm1155 = vcmp.eq.s32.totalorder %v789, %v1115
        %vm1156 = vcmp.eq.s32.totalorder %v788, %v1116
        %vm1157 = vcmp.eq.s32.totalorder %v789, %v1116
        %vm1158 = vcmp.eq.s32.totalorder %v788, %v1117
        %vm1159 = vcmp.eq.s32.totalorder %v789, %v1117
        %vm1160 = vcmp.eq.s32.totalorder %v788, %v1118
        %vm1161 = vcmp.eq.s32.totalorder %v789, %v1118
        %vm1162 = vcmp.eq.s32.totalorder %v788, %v1119
        %vm1163 = vcmp.eq.s32.totalorder %v789, %v1119
        %vm1164 = vcmp.eq.s32.totalorder %v788, %v1120
        %vm1165 = vcmp.eq.s32.totalorder %v789, %v1120
        %vm1166 = vmand %vm1139, %vm1148
        %vm1167 = vmand %vm1139, %vm1149
        %vm1168 = vmand %vm1140, %vm1150
        %vm1169 = vmand %vm1140, %vm1151
        %vm1170 = vmand %vm1141, %vm1152
        %vm1171 = vmand %vm1141, %vm1153
        %vm1172 = vmand %vm1142, %vm1154
        %vm1173 = vmand %vm1142, %vm1155
        %vm1174 = vmand %vm1143, %vm1156
        %vm1175 = vmand %vm1143, %vm1157
        %vm1176 = vmand %vm1144, %vm1158
        %vm1177 = vmand %vm1144, %vm1159
        %vm1178 = vmand %vm1145, %vm1160
        %vm1179 = vmand %vm1145, %vm1161
        %vm1180 = vmand %vm1146, %vm1162
        %vm1181 = vmand %vm1146, %vm1163
        %vm1182 = vmand %vm1147, %vm1164
        %vm1183 = vmand %vm1147, %vm1165
        %v1184 = vsel %vm1166, 1.0, %v1076
        %v1185 = vsel %vm1167, 1.0, %v1077
        %v1186 = vsel %vm1168, 1.0, %v1078
        %v1187 = vsel %vm1169, 1.0, %v1079
        %v1188 = vsel %vm1170, 1.0, %v1080
        %v1189 = vsel %vm1171, 1.0, %v1081
        %v1190 = vsel %vm1172, 1.0, %v1082
        %v1191 = vsel %vm1173, 1.0, %v1083
        %v1192 = vsel %vm1174, 1.0, %v1084
        %v1193 = vsel %vm1175, 1.0, %v1085
        %v1194 = vsel %vm1176, 1.0, %v1086
        %v1195 = vsel %vm1177, 1.0, %v1087
        %v1196 = vsel %vm1178, 1.0, %v1088
        %v1197 = vsel %vm1179, 1.0, %v1089
        %v1198 = vsel %vm1180, 1.0, %v1090
        %v1199 = vsel %vm1181, 1.0, %v1091
        %v1200 = vsel %vm1182, 1.0, %v1092
        %v1201 = vsel %vm1183, 1.0, %v1093
        %v1202 = vsub.s32 %v778, 58
        %v1203 = vsub.s32 %v779, 58
        %v1204 = vsub.s32 %v780, 58
        %v1205 = vsub.s32 %v781, 58
        %v1206 = vsub.s32 %v782, 58
        %v1207 = vsub.s32 %v783, 58
        %v1208 = vsub.s32 %v784, 58
        %v1209 = vsub.s32 %v785, 58
        %v1210 = vsub.s32 %v786, 58
        %v1211 = vmul.u32 %v1202, 34
        %v1212 = vmul.u32 %v1203, 34
        %v1213 = vmul.u32 %v1204, 34
        %v1214 = vmul.u32 %v1205, 34
        %v1215 = vmul.u32 %v1206, 34
        %v1216 = vmul.u32 %v1207, 34
        %v1217 = vmul.u32 %v1208, 34
        %v1218 = vmul.u32 %v1209, 34
        %v1219 = vmul.u32 %v1210, 34
        %v1220 = vadd.s32 %v1211, 5
        %v1221 = vadd.s32 %v1212, 5
        %v1222 = vadd.s32 %v1213, 5
        %v1223 = vadd.s32 %v1214, 5
        %v1224 = vadd.s32 %v1215, 5
        %v1225 = vadd.s32 %v1216, 5
        %v1226 = vadd.s32 %v1217, 5
        %v1227 = vadd.s32 %v1218, 5
        %v1228 = vadd.s32 %v1219, 5
        %vm1229 = vcmp.ge.s32.totalorder %v778, 58
        %vm1230 = vcmp.ge.s32.totalorder %v779, 58
        %vm1231 = vcmp.ge.s32.totalorder %v780, 58
        %vm1232 = vcmp.ge.s32.totalorder %v781, 58
        %vm1233 = vcmp.ge.s32.totalorder %v782, 58
        %vm1234 = vcmp.ge.s32.totalorder %v783, 58
        %vm1235 = vcmp.ge.s32.totalorder %v784, 58
        %vm1236 = vcmp.ge.s32.totalorder %v785, 58
        %vm1237 = vcmp.ge.s32.totalorder %v786, 58
        %vm1238 = vcmp.lt.s32.totalorder %v778, 64
        %vm1239 = vcmp.lt.s32.totalorder %v779, 64
        %vm1240 = vcmp.lt.s32.totalorder %v780, 64
        %vm1241 = vcmp.lt.s32.totalorder %v781, 64
        %vm1242 = vcmp.lt.s32.totalorder %v782, 64
        %vm1243 = vcmp.lt.s32.totalorder %v783, 64
        %vm1244 = vcmp.lt.s32.totalorder %v784, 64
        %vm1245 = vcmp.lt.s32.totalorder %v785, 64
        %vm1246 = vcmp.lt.s32.totalorder %v786, 64
        %vm1247 = vmand %vm1229, %vm1238
        %vm1248 = vmand %vm1230, %vm1239
        %vm1249 = vmand %vm1231, %vm1240
        %vm1250 = vmand %vm1232, %vm1241
        %vm1251 = vmand %vm1233, %vm1242
        %vm1252 = vmand %vm1234, %vm1243
        %vm1253 = vmand %vm1235, %vm1244
        %vm1254 = vmand %vm1236, %vm1245
        %vm1255 = vmand %vm1237, %vm1246
        %vm1256 = vcmp.eq.s32.totalorder %v788, %v1220
        %vm1257 = vcmp.eq.s32.totalorder %v789, %v1220
        %vm1258 = vcmp.eq.s32.totalorder %v788, %v1221
        %vm1259 = vcmp.eq.s32.totalorder %v789, %v1221
        %vm1260 = vcmp.eq.s32.totalorder %v788, %v1222
        %vm1261 = vcmp.eq.s32.totalorder %v789, %v1222
        %vm1262 = vcmp.eq.s32.totalorder %v788, %v1223
        %vm1263 = vcmp.eq.s32.totalorder %v789, %v1223
        %vm1264 = vcmp.eq.s32.totalorder %v788, %v1224
        %vm1265 = vcmp.eq.s32.totalorder %v789, %v1224
        %vm1266 = vcmp.eq.s32.totalorder %v788, %v1225
        %vm1267 = vcmp.eq.s32.totalorder %v789, %v1225
        %vm1268 = vcmp.eq.s32.totalorder %v788, %v1226
        %vm1269 = vcmp.eq.s32.totalorder %v789, %v1226
        %vm1270 = vcmp.eq.s32.totalorder %v788, %v1227
        %vm1271 = vcmp.eq.s32.totalorder %v789, %v1227
        %vm1272 = vcmp.eq.s32.totalorder %v788, %v1228
        %vm1273 = vcmp.eq.s32.totalorder %v789, %v1228
        %vm1274 = vmand %vm1247, %vm1256
        %vm1275 = vmand %vm1247, %vm1257
        %vm1276 = vmand %vm1248, %vm1258
        %vm1277 = vmand %vm1248, %vm1259
        %vm1278 = vmand %vm1249, %vm1260
        %vm1279 = vmand %vm1249, %vm1261
        %vm1280 = vmand %vm1250, %vm1262
        %vm1281 = vmand %vm1250, %vm1263
        %vm1282 = vmand %vm1251, %vm1264
        %vm1283 = vmand %vm1251, %vm1265
        %vm1284 = vmand %vm1252, %vm1266
        %vm1285 = vmand %vm1252, %vm1267
        %vm1286 = vmand %vm1253, %vm1268
        %vm1287 = vmand %vm1253, %vm1269
        %vm1288 = vmand %vm1254, %vm1270
        %vm1289 = vmand %vm1254, %vm1271
        %vm1290 = vmand %vm1255, %vm1272
        %vm1291 = vmand %vm1255, %vm1273
        %v1292 = vsel %vm1274, 1.0, %v1184
        %v1293 = vsel %vm1275, 1.0, %v1185
        %v1294 = vsel %vm1276, 1.0, %v1186
        %v1295 = vsel %vm1277, 1.0, %v1187
        %v1296 = vsel %vm1278, 1.0, %v1188
        %v1297 = vsel %vm1279, 1.0, %v1189
        %v1298 = vsel %vm1280, 1.0, %v1190
        %v1299 = vsel %vm1281, 1.0, %v1191
        %v1300 = vsel %vm1282, 1.0, %v1192
        %v1301 = vsel %vm1283, 1.0, %v1193
        %v1302 = vsel %vm1284, 1.0, %v1194
        %v1303 = vsel %vm1285, 1.0, %v1195
        %v1304 = vsel %vm1286, 1.0, %v1196
        %v1305 = vsel %vm1287, 1.0, %v1197
        %v1306 = vsel %vm1288, 1.0, %v1198
        %v1307 = vsel %vm1289, 1.0, %v1199
        %v1308 = vsel %vm1290, 1.0, %v1200
        %v1309 = vsel %vm1291, 1.0, %v1201
        %v1310 = vsub.s32 %v778, 64
        %v1311 = vsub.s32 %v779, 64
        %v1312 = vsub.s32 %v780, 64
        %v1313 = vsub.s32 %v781, 64
        %v1314 = vsub.s32 %v782, 64
        %v1315 = vsub.s32 %v783, 64
        %v1316 = vsub.s32 %v784, 64
        %v1317 = vsub.s32 %v785, 64
        %v1318 = vmul.u32 %v1310, 34
        %v1319 = vmul.u32 %v1311, 34
        %v1320 = vmul.u32 %v1312, 34
        %v1321 = vmul.u32 %v1313, 34
        %v1322 = vmul.u32 %v1314, 34
        %v1323 = vmul.u32 %v1315, 34
        %v1324 = vmul.u32 %v1316, 34
        %v1325 = vmul.u32 %v1317, 34
        %v1326 = vmul.u32 %v778, 34
        %v1327 = vadd.s32 %v1318, 7
        %v1328 = vadd.s32 %v1319, 7
        %v1329 = vadd.s32 %v1320, 7
        %v1330 = vadd.s32 %v1321, 7
        %v1331 = vadd.s32 %v1322, 7
        %v1332 = vadd.s32 %v1323, 7
        %v1333 = vadd.s32 %v1324, 7
        %v1334 = vadd.s32 %v1325, 7
        %v1335 = vadd.s32 %v1326, 7
        %vm1336 = vcmp.ge.s32.totalorder %v778, 64
        %vm1337 = vcmp.ge.s32.totalorder %v779, 64
        %vm1338 = vcmp.ge.s32.totalorder %v780, 64
        %vm1339 = vcmp.ge.s32.totalorder %v781, 64
        %vm1340 = vcmp.ge.s32.totalorder %v782, 64
        %vm1341 = vcmp.ge.s32.totalorder %v783, 64
        %vm1342 = vcmp.ge.s32.totalorder %v784, 64
        %vm1343 = vcmp.ge.s32.totalorder %v785, 64
        %vm1344 = vcmp.ge.s32.totalorder %v786, 64
        %vm1345 = vcmp.lt.s32.totalorder %v778, 69
        %vm1346 = vcmp.lt.s32.totalorder %v779, 69
        %vm1347 = vcmp.lt.s32.totalorder %v780, 69
        %vm1348 = vcmp.lt.s32.totalorder %v781, 69
        %vm1349 = vcmp.lt.s32.totalorder %v782, 69
        %vm1350 = vcmp.lt.s32.totalorder %v783, 69
        %vm1351 = vcmp.lt.s32.totalorder %v784, 69
        %vm1352 = vcmp.lt.s32.totalorder %v785, 69
        %vm1353 = vcmp.lt.s32.totalorder %v786, 69
        %vm1354 = vmand %vm1336, %vm1345
        %vm1355 = vmand %vm1337, %vm1346
        %vm1356 = vmand %vm1338, %vm1347
        %vm1357 = vmand %vm1339, %vm1348
        %vm1358 = vmand %vm1340, %vm1349
        %vm1359 = vmand %vm1341, %vm1350
        %vm1360 = vmand %vm1342, %vm1351
        %vm1361 = vmand %vm1343, %vm1352
        %vm1362 = vmand %vm1344, %vm1353
        %vm1363 = vcmp.eq.s32.totalorder %v788, %v1327
        %vm1364 = vcmp.eq.s32.totalorder %v789, %v1327
        %vm1365 = vcmp.eq.s32.totalorder %v788, %v1328
        %vm1366 = vcmp.eq.s32.totalorder %v789, %v1328
        %vm1367 = vcmp.eq.s32.totalorder %v788, %v1329
        %vm1368 = vcmp.eq.s32.totalorder %v789, %v1329
        %vm1369 = vcmp.eq.s32.totalorder %v788, %v1330
        %vm1370 = vcmp.eq.s32.totalorder %v789, %v1330
        %vm1371 = vcmp.eq.s32.totalorder %v788, %v1331
        %vm1372 = vcmp.eq.s32.totalorder %v789, %v1331
        %vm1373 = vcmp.eq.s32.totalorder %v788, %v1332
        %vm1374 = vcmp.eq.s32.totalorder %v789, %v1332
        %vm1375 = vcmp.eq.s32.totalorder %v788, %v1333
        %vm1376 = vcmp.eq.s32.totalorder %v789, %v1333
        %vm1377 = vcmp.eq.s32.totalorder %v788, %v1334
        %vm1378 = vcmp.eq.s32.totalorder %v789, %v1334
        %vm1379 = vcmp.eq.s32.totalorder %v788, %v1335
        %vm1380 = vcmp.eq.s32.totalorder %v789, %v1335
        %vm1381 = vmand %vm1354, %vm1363
        %vm1382 = vmand %vm1354, %vm1364
        %vm1383 = vmand %vm1355, %vm1365
        %vm1384 = vmand %vm1355, %vm1366
        %vm1385 = vmand %vm1356, %vm1367
        %vm1386 = vmand %vm1356, %vm1368
        %vm1387 = vmand %vm1357, %vm1369
        %vm1388 = vmand %vm1357, %vm1370
        %vm1389 = vmand %vm1358, %vm1371
        %vm1390 = vmand %vm1358, %vm1372
        %vm1391 = vmand %vm1359, %vm1373
        %vm1392 = vmand %vm1359, %vm1374
        %vm1393 = vmand %vm1360, %vm1375
        %vm1394 = vmand %vm1360, %vm1376
        %vm1395 = vmand %vm1361, %vm1377
        %vm1396 = vmand %vm1361, %vm1378
        %vm1397 = vmand %vm1362, %vm1379
        %vm1398 = vmand %vm1362, %vm1380
        %v1399 = vsel %vm1381, 1.0, %v1292
        %v1400 = vsel %vm1382, 1.0, %v1293
        %v1401 = vsel %vm1383, 1.0, %v1294
        %v1402 = vsel %vm1384, 1.0, %v1295
        %v1403 = vsel %vm1385, 1.0, %v1296
        %v1404 = vsel %vm1386, 1.0, %v1297
        %v1405 = vsel %vm1387, 1.0, %v1298
        %v1406 = vsel %vm1388, 1.0, %v1299
        %v1407 = vsel %vm1389, 1.0, %v1300
        %v1408 = vsel %vm1390, 1.0, %v1301
        %v1409 = vsel %vm1391, 1.0, %v1302
        %v1410 = vsel %vm1392, 1.0, %v1303
        %v1411 = vsel %vm1393, 1.0, %v1304
        %v1412 = vsel %vm1394, 1.0, %v1305
        %v1413 = vsel %vm1395, 1.0, %v1306
        %v1414 = vsel %vm1396, 1.0, %v1307
        %v1415 = vsel %vm1397, 1.0, %v1308
        %v1416 = vsel %vm1398, 1.0, %v1309
        %v1417 = vld [vmem:[#allocation3] sm:$0xff]
        %v1418 = vld [vmem:[#allocation3 + $0x8] sm:$0xff]
        %v1419 = vld [vmem:[#allocation3 + $0x10] sm:$0xff]
        %v1420 = vld [vmem:[#allocation3 + $0x18] sm:$0xff]
        %v1421 = vld [vmem:[#allocation3 + $0x20] sm:$0xff]
        %v1422 = vld [vmem:[#allocation3 + $0x28] sm:$0xff]
        %v1423 = vld [vmem:[#allocation3 + $0x30] sm:$0xff]
        %v1424 = vld [vmem:[#allocation3 + $0x38] sm:$0xff]
        %v1425 = vld [vmem:[#allocation3 + $0x40] sm:$0x1f]
        %1426 = vxpose.xlu0.b32.start [1/16] %v1417, 128
        %1427 = vxpose.xlu0.b32.cont [2/16] %v1418, 128
        %1428 = vxpose.xlu0.b32.cont [3/16] %v1419, 128
        %1429 = vxpose.xlu0.b32.cont [4/16] %v1420, 128
        %1430 = vxpose.xlu0.b32.cont [5/16] %v1421, 128
        %1431 = vxpose.xlu0.b32.cont [6/16] %v1422, 128
        %1432 = vxpose.xlu0.b32.cont [7/16] %v1423, 128
        %1433 = vxpose.xlu0.b32.cont [8/16] %v1424, 128
        %1434 = vxpose.xlu0.b32.cont [9/16] %v1425, 128
        %1435 = vxpose.xlu0.b32.cont [10/16] 0.0, 128
        %1436 = vxpose.xlu0.b32.cont [11/16] 0.0, 128
        %1437 = vxpose.xlu0.b32.cont [12/16] 0.0, 128
        %1438 = vxpose.xlu0.b32.cont [13/16] 0.0, 128
        %1439 = vxpose.xlu0.b32.cont [14/16] 0.0, 128
        %1440 = vxpose.xlu0.b32.cont [15/16] 0.0, 128
        %1441 = vxpose.xlu0.b32.end [16/16] 0.0, 128
        %v1442 = vpop.trf.xlu0
        %v1443 = vpop.trf.xlu0
        %v1444 = vpop.trf.xlu0
        %v1445 = vpop.trf.xlu0
        %v1446 = vpop.trf.xlu0
        %v1447 = vpop.trf.xlu0
        %v1448 = vpop.trf.xlu0
        %v1449 = vpop.trf.xlu0
        %v1450 = vpop.trf.xlu0
        %v1451 = vpop.trf.xlu0
        %v1452 = vpop.trf.xlu0
        %v1453 = vpop.trf.xlu0
        %v1454 = vpop.trf.xlu0
        %v1455 = vpop.trf.xlu0
        %v1456 = vpop.trf.xlu0
        %v1457 = vpop.trf.xlu0
        %vm1458 = vcmask 564224
        %v1460 = vsel %vm1458, %v1442, 0
        %v1463 = vsel %vm1458, %v1443, 0
        %v1466 = vsel %vm1458, %v1444, 0
        %v1469 = vsel %vm1458, %v1445, 0
        %vm1471 = vcmask 1044480
        %v1473 = vsel %vm1471, %v1415, 0
        %v1476 = vsel %vm1471, %v1416, 0
        %1478 = vmatpush.msra.mxu0 0.0
        %1479 = vmatpush.msra.mxu0 0.0
        %1480 = vmatpush.msra.mxu0 0.0
        %1481 = vmatpush.msra.mxu0 0.0
        %1482 = vmatpush.msra.mxu0 0.0
        %1483 = vmatpush.msra.mxu0 0.0
        %1484 = vmatpush.msra.mxu0 0.0
        %1485 = vmatpush.msra.mxu0 %v1473
        %1486 = vmatpush.msra.mxu0 %v1413
        %1487 = vmatpush.msra.mxu0 %v1411
        %1488 = vmatpush.msra.mxu0 %v1409
        %1489 = vmatpush.msra.mxu0 %v1407
        %1490 = vmatpush.msra.mxu0 %v1405
        %1491 = vmatpush.msra.mxu0 %v1403
        %1492 = vmatpush.msra.mxu0 %v1401
        %1493 = vmatpush.msra.mxu0 %v1399
        %1494 = vmatmul.f32.gmra.mxu0 %v1460
        %v1495 = vpop.f32.mrf.mxu0
        %v1496 = vadd.f32 0.0, %v1495
        %1497 = vmatmul.f32.gmra.mxu0 %v1463
        %v1498 = vpop.f32.mrf.mxu0
        %v1499 = vadd.f32 0.0, %v1498
        %1500 = vmatmul.f32.gmra.mxu0 %v1466
        %v1501 = vpop.f32.mrf.mxu0
        %v1502 = vadd.f32 0.0, %v1501
        %1503 = vmatmul.f32.gmra.mxu0 %v1469
        %v1504 = vpop.f32.mrf.mxu0
        %v1505 = vadd.f32 0.0, %v1504
        %1506 = vdwg.mxu0
        %1507 = vmatpush.msra.mxu0 0.0
        %1508 = vmatpush.msra.mxu0 0.0
        %1509 = vmatpush.msra.mxu0 0.0
        %1510 = vmatpush.msra.mxu0 0.0
        %1511 = vmatpush.msra.mxu0 0.0
        %1512 = vmatpush.msra.mxu0 0.0
        %1513 = vmatpush.msra.mxu0 0.0
        %1514 = vmatpush.msra.mxu0 %v1476
        %1515 = vmatpush.msra.mxu0 %v1414
        %1516 = vmatpush.msra.mxu0 %v1412
        %1517 = vmatpush.msra.mxu0 %v1410
        %1518 = vmatpush.msra.mxu0 %v1408
        %1519 = vmatpush.msra.mxu0 %v1406
        %1520 = vmatpush.msra.mxu0 %v1404
        %1521 = vmatpush.msra.mxu0 %v1402
        %1522 = vmatpush.msra.mxu0 %v1400
        %1523 = vmatmul.f32.gmra.mxu0 %v1460
        %v1524 = vpop.f32.mrf.mxu0
        %v1525 = vadd.f32 0.0, %v1524
        %1526 = vmatmul.f32.gmra.mxu0 %v1463
        %v1527 = vpop.f32.mrf.mxu0
        %v1528 = vadd.f32 0.0, %v1527
        %1529 = vmatmul.f32.gmra.mxu0 %v1466
        %v1530 = vpop.f32.mrf.mxu0
        %v1531 = vadd.f32 0.0, %v1530
        %1532 = vmatmul.f32.gmra.mxu0 %v1469
        %v1533 = vpop.f32.mrf.mxu0
        %v1534 = vadd.f32 0.0, %v1533
        %1535 = vdwg.mxu0
        %1536 = vst [vmem:[%s433] sm:$0xff] %v1496
        %1537 = vst [vmem:[%s433 + $0x8] sm:$0xff] %v1525
        %1538 = vst [vmem:[%s433 + $0x10] sm:$0xff] %v1499
        %1539 = vst [vmem:[%s433 + $0x18] sm:$0xff] %v1528
        %1540 = vst [vmem:[%s433 + $0x20] sm:$0xff] %v1502
        %1541 = vst [vmem:[%s433 + $0x28] sm:$0xff] %v1531
        %1542 = vst [vmem:[%s433 + $0x30] sm:$0xff] %v1505
        %1543 = vst [vmem:[%s433 + $0x38] sm:$0xff] %v1534
        %s1544 = sand.u32 %s313, 1
        %s1545 = scalar_lea.sflag [#allocation5], %s1544
        %s1546 = sand.u32 %s313, 1
        %s1547 = smul.addr %s1546, 64
        %s1548 = scalar_lea.vmem [#allocation4], %s1547
        // Predicated region
        $region73: #{tpu_custom_call.1} parent=71 // pred_check
          %p1549 = pneg %p323
        $region74: #{tpu_custom_call.1} parent=71 // pred_check_branch
          %1551 = sbr.rel (%p1549) target = $region76
        $region75: #{tpu_custom_call.1} parent=71 // pred_region
          %1553 = vsyncadd %s1545, 0
          %s1554 = smul.addr %s27, 8
          %s1555 = smul.addr %s1554, 8
          %s1556 = scalar_lea.hbm %s13, %s1555
          %s1557 = sshll.u32 %s1548, 4
          %s1558 = int_to_ptr.vmem [resolvable:$true] %s1557
          %s1559 = sshll.u32 %s1556, 4
          %s1560 = int_to_ptr.hbm [resolvable:$true] %s1559
          %1565 = dma.vmem_to_hbm [thread:$0]  %s1558, 1024, %s1560, %s1545, 256, 256, 16
        $region76: #{tpu_custom_call.1} parent=71 // pred_fallthru
          _
      $region72: #{tpu_custom_call.1} parent=5 // pred_fallthru
        _
      %p1566 = scmp.le.s32.totalorder 2, %s22
      // Predicated region
      $region77: #{tpu_custom_call.1} parent=5 // pred_check
        %p1567 = pneg %p1566
      $region78: #{tpu_custom_call.1} parent=5 // pred_check_branch
        %1569 = sbr.rel (%p1567) target = $region80
      $region79: #{tpu_custom_call.1} parent=5 // pred_region
        %s1570 = ssub.s32 %s22, 2
        // Predicated region
        $region81: #{tpu_custom_call.1} parent=79 // pred_check
          %p1571 = pneg %p329
        $region82: #{tpu_custom_call.1} parent=79 // pred_check_branch
          %1573 = sbr.rel (%p1571) target = $region84
        $region83: #{tpu_custom_call.1} parent=79 // pred_region
          %s1574 = sand.u32 %s314, 1
          %s1575 = scalar_lea.sflag [#allocation5], %s1574
          %s1576 = sand.u32 %s314, 1
          %s1577 = smul.addr %s1576, 64
          %s1578 = scalar_lea.vmem [#allocation4], %s1577
          %1580 = dma.done %s1575, 1024
        $region84: #{tpu_custom_call.1} parent=79 // pred_fallthru
          _
      $region80: #{tpu_custom_call.1} parent=5 // pred_fallthru
        _
    $region6: #{tpu_custom_call.1} parent=1 // loop_footer
      %s26 = sadd.s32 1, %s22
    $region7: #{tpu_custom_call.1} parent=1 // loop_footer_branch
      %21 = sbr.rel target = $region3
    $region8: #{tpu_custom_call.1} parent=1 // loop_exit
      _
    %1581 = vsyncpa [#allocation5], 1
    %s1582 = scalar_lea.sflag [#allocation5], 1
    %1583 = vsyncpa %s1582, 1

</llo_original>
